<compile_context>
chip_gen: v7x
topology: tpu7x:2x2x1
jax: 0.10.0
libtpu: 0.0.40
codegen_flags: <defaults>
</compile_context>

<pallas_src>
import math
from functools import partial

import jax
import jax.numpy as jnp
from jax.experimental import pallas as pl
from jax.experimental.pallas import tpu as pltpu  # noqa: F401  (kept for TPU backend)

D_MODEL = 32
NHEAD = 4
DIM_FF = 64
EPS = 1e-5
_HEAD_DIM = D_MODEL // NHEAD

# ---------------- packed parameter slab (built once at init) ----------------

_SLAB_COLS = 128  # lane-dense slab width


def _param_layout():
    e, f = D_MODEL, DIM_FF
    entries = [
        ("sa_wqkv", e, 3 * e), ("sa_bqkv", 1, 3 * e),
        ("sa_wo", e, e), ("sa_bo", 1, e),
        ("ca_wq", e, e), ("ca_bq", 1, e),
        ("ca_wkv", e, 2 * e), ("ca_bkv", 1, 2 * e),
        ("ca_wo", e, e), ("ca_bo", 1, e),
        ("na_wq", e, e), ("na_bq", 1, e),
        ("na_wkv", e, 2 * e), ("na_bkv", 1, 2 * e),
        ("na_wo", e, e), ("na_bo", 1, e),
        ("ff_w1", e, f), ("ff_b1", 1, f),
        ("ff_w2", f, e), ("ff_b2", 1, e),
        ("ln_g", 4, e), ("ln_b", 4, e),
    ]
    layout, off = {}, 0
    for name, r, c in entries:
        layout[name] = (off, r, c)
        off += ((r + 7) // 8) * 8          # keep every entry sublane(8)-aligned
    return layout, off


_LAYOUT, _SLAB_ROWS = _param_layout()


def pack_params(params):
    """One-time packing: transpose weights, fold the 1/sqrt(Dh) softmax scale
    into the Q projections, stack LN params, and place everything into a
    single (8,128)-aligned f32 slab (one HBM->VMEM DMA per call)."""
    e = D_MODEL
    scale = 1.0 / math.sqrt(_HEAD_DIM)

    def attn_entries(prefix, p, fused):
        w = jnp.asarray(p["in_w"], jnp.float32).T           # (E, 3E)
        b = jnp.asarray(p["in_b"], jnp.float32)[None, :]    # (1, 3E)
        w = w.at[:, :e].multiply(scale)                      # fold softmax scale
        b = b.at[:, :e].multiply(scale)
        wo = jnp.asarray(p["out_w"], jnp.float32).T
        bo = jnp.asarray(p["out_b"], jnp.float32)[None, :]
        if fused:
            return {f"{prefix}_wqkv": w, f"{prefix}_bqkv": b,
                    f"{prefix}_wo": wo, f"{prefix}_bo": bo}
        return {f"{prefix}_wq": w[:, :e], f"{prefix}_bq": b[:, :e],
                f"{prefix}_wkv": w[:, e:], f"{prefix}_bkv": b[:, e:],
                f"{prefix}_wo": wo, f"{prefix}_bo": bo}

    vals = {}
    vals.update(attn_entries("sa", params["self_attn"], fused=True))
    vals.update(attn_entries("ca", params["code_attn"], fused=False))
    vals.update(attn_entries("na", params["nl_attn"], fused=False))
    vals["ff_w1"] = jnp.asarray(params["ff_w1"], jnp.float32).T
    vals["ff_b1"] = jnp.asarray(params["ff_b1"], jnp.float32)[None, :]
    vals["ff_w2"] = jnp.asarray(params["ff_w2"], jnp.float32).T
    vals["ff_b2"] = jnp.asarray(params["ff_b2"], jnp.float32)[None, :]
    vals["ln_g"] = jnp.stack([params["ln1_g"], params["ln2_g"],
                              params["ln3_g"], params["ln4_g"]])
    vals["ln_b"] = jnp.stack([params["ln1_b"], params["ln2_b"],
                              params["ln3_b"], params["ln4_b"]])

    slab = jnp.zeros((_SLAB_ROWS, _SLAB_COLS), jnp.float32)
    for name, (off, r, c) in _LAYOUT.items():
        slab = slab.at[off:off + r, :c].set(vals[name])
    return slab


# ---------------- fused decoder-layer kernel ----------------

def _fused_decoder_layer_kernel(
    # static dims (bound via functools.partial)
    N, R_code, R_nl, B, H, Dh,
    # inputs
    x_ref, code_ref, nl_ref, p_ref,
    # output
    out_ref,
):
    E = H * Dh
    f32 = jnp.float32

    def get(name):
        off, r, c = _LAYOUT[name]
        return p_ref[off:off + r, :c]

    def layer_norm(y, g, b):
        mu = jnp.mean(y, axis=-1, keepdims=True)
        yc = y - mu
        var = jnp.mean(yc * yc, axis=-1, keepdims=True)
        return yc * jax.lax.rsqrt(var + EPS) * g + b

    def head_mask(R):
        # (H*R, E) f32: 1.0 where the row-block's head == the column's head.
        row = jax.lax.broadcasted_iota(jnp.int32, (H * R, E), 0)
        col = jax.lax.broadcasted_iota(jnp.int32, (H * R, E), 1)
        m = jnp.zeros((H * R, E), f32)
        for h in range(H):                      # static unroll; no int division
            m = m + ((row >= h * R) & (row < (h + 1) * R) &
                     (col >= h * Dh) & (col < (h + 1) * Dh)).astype(f32)
        return m

    def batch_mask(R):
        # (N, H*R) f32: 1.0 where the query row and key lane are the same batch
        # (rows / key-rows are seq-major, so batch == index % B).
        r = jax.lax.broadcasted_iota(jnp.int32, (N, H * R), 0)
        j = jax.lax.broadcasted_iota(jnp.int32, (N, H * R), 1)
        return ((r % B) == (j % B)).astype(f32)

    def make_kv(k, v, mask):
        # Tile K/V H times along rows and zero out non-head columns so that the
        # scores / weighted-V for ALL heads and batches come from ONE matmul.
        k_bd = jnp.concatenate([k] * H, axis=0) * mask       # (H*R, E)
        v_bd = jnp.concatenate([v] * H, axis=0) * mask
        return k_bd, v_bd

    def attention(q, k_bd, v_bd, mask, bmask, wo, bo):
        # q: (N, E) with the softmax scale already folded into the weights.
        s = jax.lax.dot_general(q, k_bd, (((1,), (1,)), ((), ())),
                                preferred_element_type=f32)   # (N, H*R)
        # One batched softmax for all heads/batches.  A row-global max is a
        # valid per-row constant for every head's softmax (softmax is shift
        # invariant); magnitudes here keep exp well inside f32 range.
        m = jnp.max(s, axis=-1, keepdims=True)
        p = jnp.exp(s - m) * bmask                            # zero cross-batch
        o = jnp.dot(p, v_bd, preferred_element_type=f32)      # (N, E) unnormed
        den = jnp.dot(p, mask, preferred_element_type=f32)    # per-head sums
        o = o * pl.reciprocal(den, approx=True)               # EUP slot
        return jnp.dot(o, wo, preferred_element_type=f32) + bo

    x = x_ref[...]        # (N, E)       seq-major rows: r = t*B + b
    code = code_ref[...]  # (R_code, E)
    nl = nl_ref[...]      # (R_nl, E)

    ln_g = get("ln_g")
    ln_b = get("ln_b")

    mask_self, mask_code, mask_nl = head_mask(N), head_mask(R_code), head_mask(R_nl)
    bm_self, bm_code, bm_nl = batch_mask(N), batch_mask(R_code), batch_mask(R_nl)

    # ---- hoisted memory-side K/V projections (independent of x; overlap with
    #      the self-attention block) ----
    code_kv = jnp.dot(code, get("ca_wkv"), preferred_element_type=f32) + get("ca_bkv")
    code_k_bd, code_v_bd = make_kv(code_kv[:, :E], code_kv[:, E:], mask_code)
    nl_kv = jnp.dot(nl, get("na_wkv"), preferred_element_type=f32) + get("na_bkv")
    nl_k_bd, nl_v_bd = make_kv(nl_kv[:, :E], nl_kv[:, E:], mask_nl)

    # ---- self-attention (single fused QKV matmul) + add & norm ----
    qkv = jnp.dot(x, get("sa_wqkv"), preferred_element_type=f32) + get("sa_bqkv")
    k_bd, v_bd = make_kv(qkv[:, E:2 * E], qkv[:, 2 * E:], mask_self)
    sa = attention(qkv[:, :E], k_bd, v_bd, mask_self, bm_self,
                   get("sa_wo"), get("sa_bo"))
    x = layer_norm(x + sa, ln_g[0:1], ln_b[0:1])

    # ---- code cross-attention + add & norm ----
    q = jnp.dot(x, get("ca_wq"), preferred_element_type=f32) + get("ca_bq")
    ca = attention(q, code_k_bd, code_v_bd, mask_code, bm_code,
                   get("ca_wo"), get("ca_bo"))
    x = layer_norm(x + ca, ln_g[1:2], ln_b[1:2])

    # ---- nl cross-attention + add & norm ----
    q = jnp.dot(x, get("na_wq"), preferred_element_type=f32) + get("na_bq")
    na = attention(q, nl_k_bd, nl_v_bd, mask_nl, bm_nl,
                   get("na_wo"), get("na_bo"))
    x = layer_norm(x + na, ln_g[2:3], ln_b[2:3])

    # ---- FFN + add & norm (hidden never leaves VMEM/vregs) ----
    hid = jnp.maximum(
        jnp.dot(x, get("ff_w1"), preferred_element_type=f32) + get("ff_b1"), 0.0)
    ff = jnp.dot(hid, get("ff_w2"), preferred_element_type=f32) + get("ff_b2")
    x = layer_norm(x + ff, ln_g[3:4], ln_b[3:4])

    out_ref[...] = x


# ---------------- TransformerDecoderLayer.forward (norm_first=False) ----------------

@jax.jit
def transformer_decoder_layer(tgt, code_memory, nl_memory, packed_params):
    # tgt: (T, B, E); code_memory: (Sc, B, E); nl_memory: (Sn, B, E)
    # TODO(synk): attn_mask / key_padding_mask support not implemented (None here).
    # Dropout layers act as identity (eval-mode forward).
    T, B, E = tgt.shape
    Sc = code_memory.shape[0]
    Sn = nl_memory.shape[0]
    H = NHEAD
    Dh = E // H

    # Seq-major (t, b) row flattening is a free reshape (no transpose); the
    # kernel handles batch separation with lane masks, so no layout ops remain
    # around the pallas_call.
    x2d = tgt.reshape(T * B, E)
    code2d = code_memory.reshape(Sc * B, E)
    nl2d = nl_memory.reshape(Sn * B, E)

    kernel = partial(_fused_decoder_layer_kernel, T * B, Sc * B, Sn * B, B, H, Dh)

    out2d = pl.pallas_call(
        kernel,
        out_shape=jax.ShapeDtypeStruct((T * B, E), jnp.float32),
    )(x2d, code2d, nl2d, packed_params)

    return out2d.reshape(T, B, E)


# ---------------- deterministic parameter init ----------------

def init_params(key):
    keys = jax.random.split(key, 8)

    def mat(k, shape, scale=0.1):
        return scale * jax.random.normal(k, shape, dtype=jnp.float32)

    def attn_params(k):
        k1, k2, k3, k4 = jax.random.split(k, 4)
        return {"in_w": mat(k1, (3 * D_MODEL, D_MODEL)),
                "in_b": mat(k2, (3 * D_MODEL,)),
                "out_w": mat(k3, (D_MODEL, D_MODEL)),
                "out_b": mat(k4, (D_MODEL,))}

    ones = jnp.ones((D_MODEL,), jnp.float32)
    zeros = jnp.zeros((D_MODEL,), jnp.float32)
    return {
        "self_attn": attn_params(keys[0]),
        "code_attn": attn_params(keys[1]),
        "nl_attn": attn_params(keys[2]),
        "ff_w1": mat(keys[3], (DIM_FF, D_MODEL)),
        "ff_b1": mat(keys[4], (DIM_FF,)),
        "ff_w2": mat(keys[5], (D_MODEL, DIM_FF)),
        "ff_b2": mat(keys[6], (DIM_FF,)[:0] + (D_MODEL,)),
        "ln1_g": ones, "ln1_b": zeros,
        "ln2_g": ones, "ln2_b": zeros,
        "ln3_g": ones, "ln3_b": zeros,
        "ln4_g": ones, "ln4_b": zeros,
    }


# ---------------- pure-JAX reference (for numerical check) ----------------

def _ref_mha(q_in, kv_in, p):
    T, B, E = q_in.shape
    S = kv_in.shape[0]
    H, Dh = NHEAD, E // NHEAD
    w, b, wo, bo = p["in_w"], p["in_b"], p["out_w"], p["out_b"]
    q = q_in @ w[:E].T + b[:E]
    k = kv_in @ w[E:2 * E].T + b[E:2 * E]
    v = kv_in @ w[2 * E:].T + b[2 * E:]
    q = q.reshape(T, B, H, Dh).transpose(1, 2, 0, 3) / math.sqrt(Dh)
    k = k.reshape(S, B, H, Dh).transpose(1, 2, 0, 3)
    v = v.reshape(S, B, H, Dh).transpose(1, 2, 0, 3)
    s = jnp.einsum("bhtd,bhsd->bhts", q, k)
    a = jax.nn.softmax(s, axis=-1)
    o = jnp.einsum("bhts,bhsd->bhtd", a, v)
    o = o.transpose(2, 0, 1, 3).reshape(T, B, E)
    return o @ wo.T + bo


def _ref_ln(x, g, b):
    mu = x.mean(-1, keepdims=True)
    var = ((x - mu) ** 2).mean(-1, keepdims=True)
    return (x - mu) / jnp.sqrt(var + EPS) * g + b


def _ref_decoder_layer(tgt, cm, nm, p):
    x = _ref_ln(tgt + _ref_mha(tgt, tgt, p["self_attn"]), p["ln1_g"], p["ln1_b"])
    x = _ref_ln(x + _ref_mha(x, cm, p["code_attn"]), p["ln2_g"], p["ln2_b"])
    x = _ref_ln(x + _ref_mha(x, nm, p["nl_attn"]), p["ln3_g"], p["ln3_b"])
    h = jnp.maximum(x @ p["ff_w1"].T + p["ff_b1"], 0.0)
    ff = h @ p["ff_w2"].T + p["ff_b2"]
    return _ref_ln(x + ff, p["ln4_g"], p["ln4_b"])


# ---------------- main ----------------

if __name__ == "__main__":
    key = jax.random.PRNGKey(0)
    kp, kt, kc, kn = jax.random.split(key, 4)
    params = init_params(kp)
    packed = pack_params(params)          # one-time packing, outside jit

    T, S_CODE, S_NL, B = 8, 10, 12, 2
    tgt = jax.random.normal(kt, (T, B, D_MODEL), jnp.float32)
    code_mem = jax.random.normal(kc, (S_CODE, B, D_MODEL), jnp.float32)
    nl_mem = jax.random.normal(kn, (S_NL, B, D_MODEL), jnp.float32)

    out = transformer_decoder_layer(tgt, code_mem, nl_mem, packed)
    out = jax.block_until_ready(out)

    ref = _ref_decoder_layer(tgt, code_mem, nl_mem, params)
    assert out.shape == (T, B, D_MODEL)
    assert bool(jnp.all(jnp.isfinite(out)))
    err = float(jnp.max(jnp.abs(out - ref)))
    assert bool(jnp.allclose(out, ref, atol=2e-3, rtol=2e-3)), \
        f"max abs err {err}"

    print("KERNEL_OK")
</pallas_src>

<mosaic_0001>
module attributes {stable_mosaic.version = 11 : i64} {
  func.func @_fused_decoder_layer_kernel(%arg0: memref<16x32xf32, #tpu.memory_space<vmem>>, %arg1: memref<20x32xf32, #tpu.memory_space<vmem>>, %arg2: memref<24x32xf32, #tpu.memory_space<vmem>>, %arg3: memref<448x128xf32, #tpu.memory_space<vmem>>, %arg4: memref<16x32xf32, #tpu.memory_space<vmem>>) attributes {dimension_semantics = [], scalar_prefetch = 0 : i64, scratch_operands = 0 : i64, tpu.core_type = #tpu.core_type<tc>} {
    %c0 = arith.constant 0 : index
    %c0_0 = arith.constant 0 : index
    %0 = vector.load %arg0[%c0, %c0_0] : memref<16x32xf32, #tpu.memory_space<vmem>>, vector<16x32xf32>
    %c0_1 = arith.constant 0 : index
    %c0_2 = arith.constant 0 : index
    %1 = vector.load %arg1[%c0_1, %c0_2] : memref<20x32xf32, #tpu.memory_space<vmem>>, vector<20x32xf32>
    %c0_3 = arith.constant 0 : index
    %c0_4 = arith.constant 0 : index
    %2 = vector.load %arg2[%c0_3, %c0_4] : memref<24x32xf32, #tpu.memory_space<vmem>>, vector<24x32xf32>
    %c432 = arith.constant 432 : index
    %c0_5 = arith.constant 0 : index
    %3 = vector.load %arg3[%c432, %c0_5] : memref<448x128xf32, #tpu.memory_space<vmem>>, vector<4x32xf32>
    %c440 = arith.constant 440 : index
    %c0_6 = arith.constant 0 : index
    %4 = vector.load %arg3[%c440, %c0_6] : memref<448x128xf32, #tpu.memory_space<vmem>>, vector<4x32xf32>
    %5 = tpu.iota {dimensions = array<i32: 0>} : vector<64x32xi32>
    %6 = tpu.iota {dimensions = array<i32: 1>} : vector<64x32xi32>
    %cst = arith.constant 0.000000e+00 : f32
    %7 = vector.broadcast %cst : f32 to vector<64x32xf32>
    %c0_i32 = arith.constant 0 : i32
    %8 = vector.broadcast %c0_i32 : i32 to vector<64x32xi32>
    %9 = arith.cmpi sge, %5, %8 : vector<64x32xi32>
    %c16_i32 = arith.constant 16 : i32
    %10 = vector.broadcast %c16_i32 : i32 to vector<64x32xi32>
    %11 = arith.cmpi slt, %5, %10 : vector<64x32xi32>
    %12 = arith.andi %9, %11 : vector<64x32xi1>
    %c0_i32_7 = arith.constant 0 : i32
    %13 = vector.broadcast %c0_i32_7 : i32 to vector<64x32xi32>
    %14 = arith.cmpi sge, %6, %13 : vector<64x32xi32>
    %15 = arith.andi %12, %14 : vector<64x32xi1>
    %c8_i32 = arith.constant 8 : i32
    %16 = vector.broadcast %c8_i32 : i32 to vector<64x32xi32>
    %17 = arith.cmpi slt, %6, %16 : vector<64x32xi32>
    %18 = arith.andi %15, %17 : vector<64x32xi1>
    %19 = arith.extui %18 : vector<64x32xi1> to vector<64x32xi32>
    %20 = arith.sitofp %19 : vector<64x32xi32> to vector<64x32xf32>
    %21 = arith.addf %7, %20 : vector<64x32xf32>
    %c16_i32_8 = arith.constant 16 : i32
    %22 = vector.broadcast %c16_i32_8 : i32 to vector<64x32xi32>
    %23 = arith.cmpi sge, %5, %22 : vector<64x32xi32>
    %c32_i32 = arith.constant 32 : i32
    %24 = vector.broadcast %c32_i32 : i32 to vector<64x32xi32>
    %25 = arith.cmpi slt, %5, %24 : vector<64x32xi32>
    %26 = arith.andi %23, %25 : vector<64x32xi1>
    %c8_i32_9 = arith.constant 8 : i32
    %27 = vector.broadcast %c8_i32_9 : i32 to vector<64x32xi32>
    %28 = arith.cmpi sge, %6, %27 : vector<64x32xi32>
    %29 = arith.andi %26, %28 : vector<64x32xi1>
    %c16_i32_10 = arith.constant 16 : i32
    %30 = vector.broadcast %c16_i32_10 : i32 to vector<64x32xi32>
    %31 = arith.cmpi slt, %6, %30 : vector<64x32xi32>
    %32 = arith.andi %29, %31 : vector<64x32xi1>
    %33 = arith.extui %32 : vector<64x32xi1> to vector<64x32xi32>
    %34 = arith.sitofp %33 : vector<64x32xi32> to vector<64x32xf32>
    %35 = arith.addf %21, %34 : vector<64x32xf32>
    %c32_i32_11 = arith.constant 32 : i32
    %36 = vector.broadcast %c32_i32_11 : i32 to vector<64x32xi32>
    %37 = arith.cmpi sge, %5, %36 : vector<64x32xi32>
    %c48_i32 = arith.constant 48 : i32
    %38 = vector.broadcast %c48_i32 : i32 to vector<64x32xi32>
    %39 = arith.cmpi slt, %5, %38 : vector<64x32xi32>
    %40 = arith.andi %37, %39 : vector<64x32xi1>
    %c16_i32_12 = arith.constant 16 : i32
    %41 = vector.broadcast %c16_i32_12 : i32 to vector<64x32xi32>
    %42 = arith.cmpi sge, %6, %41 : vector<64x32xi32>
    %43 = arith.andi %40, %42 : vector<64x32xi1>
    %c24_i32 = arith.constant 24 : i32
    %44 = vector.broadcast %c24_i32 : i32 to vector<64x32xi32>
    %45 = arith.cmpi slt, %6, %44 : vector<64x32xi32>
    %46 = arith.andi %43, %45 : vector<64x32xi1>
    %47 = arith.extui %46 : vector<64x32xi1> to vector<64x32xi32>
    %48 = arith.sitofp %47 : vector<64x32xi32> to vector<64x32xf32>
    %49 = arith.addf %35, %48 : vector<64x32xf32>
    %c48_i32_13 = arith.constant 48 : i32
    %50 = vector.broadcast %c48_i32_13 : i32 to vector<64x32xi32>
    %51 = arith.cmpi sge, %5, %50 : vector<64x32xi32>
    %c64_i32 = arith.constant 64 : i32
    %52 = vector.broadcast %c64_i32 : i32 to vector<64x32xi32>
    %53 = arith.cmpi slt, %5, %52 : vector<64x32xi32>
    %54 = arith.andi %51, %53 : vector<64x32xi1>
    %c24_i32_14 = arith.constant 24 : i32
    %55 = vector.broadcast %c24_i32_14 : i32 to vector<64x32xi32>
    %56 = arith.cmpi sge, %6, %55 : vector<64x32xi32>
    %57 = arith.andi %54, %56 : vector<64x32xi1>
    %c32_i32_15 = arith.constant 32 : i32
    %58 = vector.broadcast %c32_i32_15 : i32 to vector<64x32xi32>
    %59 = arith.cmpi slt, %6, %58 : vector<64x32xi32>
    %60 = arith.andi %57, %59 : vector<64x32xi1>
    %61 = arith.extui %60 : vector<64x32xi1> to vector<64x32xi32>
    %62 = arith.sitofp %61 : vector<64x32xi32> to vector<64x32xf32>
    %63 = arith.addf %49, %62 : vector<64x32xf32>
    %64 = tpu.iota {dimensions = array<i32: 0>} : vector<80x32xi32>
    %65 = tpu.iota {dimensions = array<i32: 1>} : vector<80x32xi32>
    %cst_16 = arith.constant 0.000000e+00 : f32
    %66 = vector.broadcast %cst_16 : f32 to vector<80x32xf32>
    %c0_i32_17 = arith.constant 0 : i32
    %67 = vector.broadcast %c0_i32_17 : i32 to vector<80x32xi32>
    %68 = arith.cmpi sge, %64, %67 : vector<80x32xi32>
    %c20_i32 = arith.constant 20 : i32
    %69 = vector.broadcast %c20_i32 : i32 to vector<80x32xi32>
    %70 = arith.cmpi slt, %64, %69 : vector<80x32xi32>
    %71 = arith.andi %68, %70 : vector<80x32xi1>
    %c0_i32_18 = arith.constant 0 : i32
    %72 = vector.broadcast %c0_i32_18 : i32 to vector<80x32xi32>
    %73 = arith.cmpi sge, %65, %72 : vector<80x32xi32>
    %74 = arith.andi %71, %73 : vector<80x32xi1>
    %c8_i32_19 = arith.constant 8 : i32
    %75 = vector.broadcast %c8_i32_19 : i32 to vector<80x32xi32>
    %76 = arith.cmpi slt, %65, %75 : vector<80x32xi32>
    %77 = arith.andi %74, %76 : vector<80x32xi1>
    %78 = arith.extui %77 : vector<80x32xi1> to vector<80x32xi32>
    %79 = arith.sitofp %78 : vector<80x32xi32> to vector<80x32xf32>
    %80 = arith.addf %66, %79 : vector<80x32xf32>
    %c20_i32_20 = arith.constant 20 : i32
    %81 = vector.broadcast %c20_i32_20 : i32 to vector<80x32xi32>
    %82 = arith.cmpi sge, %64, %81 : vector<80x32xi32>
    %c40_i32 = arith.constant 40 : i32
    %83 = vector.broadcast %c40_i32 : i32 to vector<80x32xi32>
    %84 = arith.cmpi slt, %64, %83 : vector<80x32xi32>
    %85 = arith.andi %82, %84 : vector<80x32xi1>
    %c8_i32_21 = arith.constant 8 : i32
    %86 = vector.broadcast %c8_i32_21 : i32 to vector<80x32xi32>
    %87 = arith.cmpi sge, %65, %86 : vector<80x32xi32>
    %88 = arith.andi %85, %87 : vector<80x32xi1>
    %c16_i32_22 = arith.constant 16 : i32
    %89 = vector.broadcast %c16_i32_22 : i32 to vector<80x32xi32>
    %90 = arith.cmpi slt, %65, %89 : vector<80x32xi32>
    %91 = arith.andi %88, %90 : vector<80x32xi1>
    %92 = arith.extui %91 : vector<80x32xi1> to vector<80x32xi32>
    %93 = arith.sitofp %92 : vector<80x32xi32> to vector<80x32xf32>
    %94 = arith.addf %80, %93 : vector<80x32xf32>
    %c40_i32_23 = arith.constant 40 : i32
    %95 = vector.broadcast %c40_i32_23 : i32 to vector<80x32xi32>
    %96 = arith.cmpi sge, %64, %95 : vector<80x32xi32>
    %c60_i32 = arith.constant 60 : i32
    %97 = vector.broadcast %c60_i32 : i32 to vector<80x32xi32>
    %98 = arith.cmpi slt, %64, %97 : vector<80x32xi32>
    %99 = arith.andi %96, %98 : vector<80x32xi1>
    %c16_i32_24 = arith.constant 16 : i32
    %100 = vector.broadcast %c16_i32_24 : i32 to vector<80x32xi32>
    %101 = arith.cmpi sge, %65, %100 : vector<80x32xi32>
    %102 = arith.andi %99, %101 : vector<80x32xi1>
    %c24_i32_25 = arith.constant 24 : i32
    %103 = vector.broadcast %c24_i32_25 : i32 to vector<80x32xi32>
    %104 = arith.cmpi slt, %65, %103 : vector<80x32xi32>
    %105 = arith.andi %102, %104 : vector<80x32xi1>
    %106 = arith.extui %105 : vector<80x32xi1> to vector<80x32xi32>
    %107 = arith.sitofp %106 : vector<80x32xi32> to vector<80x32xf32>
    %108 = arith.addf %94, %107 : vector<80x32xf32>
    %c60_i32_26 = arith.constant 60 : i32
    %109 = vector.broadcast %c60_i32_26 : i32 to vector<80x32xi32>
    %110 = arith.cmpi sge, %64, %109 : vector<80x32xi32>
    %c80_i32 = arith.constant 80 : i32
    %111 = vector.broadcast %c80_i32 : i32 to vector<80x32xi32>
    %112 = arith.cmpi slt, %64, %111 : vector<80x32xi32>
    %113 = arith.andi %110, %112 : vector<80x32xi1>
    %c24_i32_27 = arith.constant 24 : i32
    %114 = vector.broadcast %c24_i32_27 : i32 to vector<80x32xi32>
    %115 = arith.cmpi sge, %65, %114 : vector<80x32xi32>
    %116 = arith.andi %113, %115 : vector<80x32xi1>
    %c32_i32_28 = arith.constant 32 : i32
    %117 = vector.broadcast %c32_i32_28 : i32 to vector<80x32xi32>
    %118 = arith.cmpi slt, %65, %117 : vector<80x32xi32>
    %119 = arith.andi %116, %118 : vector<80x32xi1>
    %120 = arith.extui %119 : vector<80x32xi1> to vector<80x32xi32>
    %121 = arith.sitofp %120 : vector<80x32xi32> to vector<80x32xf32>
    %122 = arith.addf %108, %121 : vector<80x32xf32>
    %123 = tpu.iota {dimensions = array<i32: 0>} : vector<96x32xi32>
    %124 = tpu.iota {dimensions = array<i32: 1>} : vector<96x32xi32>
    %cst_29 = arith.constant 0.000000e+00 : f32
    %125 = vector.broadcast %cst_29 : f32 to vector<96x32xf32>
    %c0_i32_30 = arith.constant 0 : i32
    %126 = vector.broadcast %c0_i32_30 : i32 to vector<96x32xi32>
    %127 = arith.cmpi sge, %123, %126 : vector<96x32xi32>
    %c24_i32_31 = arith.constant 24 : i32
    %128 = vector.broadcast %c24_i32_31 : i32 to vector<96x32xi32>
    %129 = arith.cmpi slt, %123, %128 : vector<96x32xi32>
    %130 = arith.andi %127, %129 : vector<96x32xi1>
    %c0_i32_32 = arith.constant 0 : i32
    %131 = vector.broadcast %c0_i32_32 : i32 to vector<96x32xi32>
    %132 = arith.cmpi sge, %124, %131 : vector<96x32xi32>
    %133 = arith.andi %130, %132 : vector<96x32xi1>
    %c8_i32_33 = arith.constant 8 : i32
    %134 = vector.broadcast %c8_i32_33 : i32 to vector<96x32xi32>
    %135 = arith.cmpi slt, %124, %134 : vector<96x32xi32>
    %136 = arith.andi %133, %135 : vector<96x32xi1>
    %137 = arith.extui %136 : vector<96x32xi1> to vector<96x32xi32>
    %138 = arith.sitofp %137 : vector<96x32xi32> to vector<96x32xf32>
    %139 = arith.addf %125, %138 : vector<96x32xf32>
    %c24_i32_34 = arith.constant 24 : i32
    %140 = vector.broadcast %c24_i32_34 : i32 to vector<96x32xi32>
    %141 = arith.cmpi sge, %123, %140 : vector<96x32xi32>
    %c48_i32_35 = arith.constant 48 : i32
    %142 = vector.broadcast %c48_i32_35 : i32 to vector<96x32xi32>
    %143 = arith.cmpi slt, %123, %142 : vector<96x32xi32>
    %144 = arith.andi %141, %143 : vector<96x32xi1>
    %c8_i32_36 = arith.constant 8 : i32
    %145 = vector.broadcast %c8_i32_36 : i32 to vector<96x32xi32>
    %146 = arith.cmpi sge, %124, %145 : vector<96x32xi32>
    %147 = arith.andi %144, %146 : vector<96x32xi1>
    %c16_i32_37 = arith.constant 16 : i32
    %148 = vector.broadcast %c16_i32_37 : i32 to vector<96x32xi32>
    %149 = arith.cmpi slt, %124, %148 : vector<96x32xi32>
    %150 = arith.andi %147, %149 : vector<96x32xi1>
    %151 = arith.extui %150 : vector<96x32xi1> to vector<96x32xi32>
    %152 = arith.sitofp %151 : vector<96x32xi32> to vector<96x32xf32>
    %153 = arith.addf %139, %152 : vector<96x32xf32>
    %c48_i32_38 = arith.constant 48 : i32
    %154 = vector.broadcast %c48_i32_38 : i32 to vector<96x32xi32>
    %155 = arith.cmpi sge, %123, %154 : vector<96x32xi32>
    %c72_i32 = arith.constant 72 : i32
    %156 = vector.broadcast %c72_i32 : i32 to vector<96x32xi32>
    %157 = arith.cmpi slt, %123, %156 : vector<96x32xi32>
    %158 = arith.andi %155, %157 : vector<96x32xi1>
    %c16_i32_39 = arith.constant 16 : i32
    %159 = vector.broadcast %c16_i32_39 : i32 to vector<96x32xi32>
    %160 = arith.cmpi sge, %124, %159 : vector<96x32xi32>
    %161 = arith.andi %158, %160 : vector<96x32xi1>
    %c24_i32_40 = arith.constant 24 : i32
    %162 = vector.broadcast %c24_i32_40 : i32 to vector<96x32xi32>
    %163 = arith.cmpi slt, %124, %162 : vector<96x32xi32>
    %164 = arith.andi %161, %163 : vector<96x32xi1>
    %165 = arith.extui %164 : vector<96x32xi1> to vector<96x32xi32>
    %166 = arith.sitofp %165 : vector<96x32xi32> to vector<96x32xf32>
    %167 = arith.addf %153, %166 : vector<96x32xf32>
    %c72_i32_41 = arith.constant 72 : i32
    %168 = vector.broadcast %c72_i32_41 : i32 to vector<96x32xi32>
    %169 = arith.cmpi sge, %123, %168 : vector<96x32xi32>
    %c96_i32 = arith.constant 96 : i32
    %170 = vector.broadcast %c96_i32 : i32 to vector<96x32xi32>
    %171 = arith.cmpi slt, %123, %170 : vector<96x32xi32>
    %172 = arith.andi %169, %171 : vector<96x32xi1>
    %c24_i32_42 = arith.constant 24 : i32
    %173 = vector.broadcast %c24_i32_42 : i32 to vector<96x32xi32>
    %174 = arith.cmpi sge, %124, %173 : vector<96x32xi32>
    %175 = arith.andi %172, %174 : vector<96x32xi1>
    %c32_i32_43 = arith.constant 32 : i32
    %176 = vector.broadcast %c32_i32_43 : i32 to vector<96x32xi32>
    %177 = arith.cmpi slt, %124, %176 : vector<96x32xi32>
    %178 = arith.andi %175, %177 : vector<96x32xi1>
    %179 = arith.extui %178 : vector<96x32xi1> to vector<96x32xi32>
    %180 = arith.sitofp %179 : vector<96x32xi32> to vector<96x32xf32>
    %181 = arith.addf %167, %180 : vector<96x32xf32>
    %182 = tpu.iota {dimensions = array<i32: 0>} : vector<16x64xi32>
    %183 = tpu.iota {dimensions = array<i32: 1>} : vector<16x64xi32>
    %c2_i32 = arith.constant 2 : i32
    %c0_i32_44 = arith.constant 0 : i32
    %184 = arith.cmpi eq, %c2_i32, %c0_i32_44 : i32
    %c1_i32 = arith.constant 1 : i32
    %185 = arith.select %184, %c1_i32, %c2_i32 : i32
    %186 = vector.broadcast %185 : i32 to vector<16x64xi32>
    %187 = arith.remsi %182, %186 : vector<16x64xi32>
    %c0_i32_45 = arith.constant 0 : i32
    %188 = vector.broadcast %c0_i32_45 : i32 to vector<16x64xi32>
    %189 = arith.cmpi ne, %187, %188 : vector<16x64xi32>
    %c0_i32_46 = arith.constant 0 : i32
    %190 = vector.broadcast %c0_i32_46 : i32 to vector<16x64xi32>
    %191 = arith.cmpi slt, %187, %190 : vector<16x64xi32>
    %c0_i32_47 = arith.constant 0 : i32
    %192 = arith.cmpi slt, %185, %c0_i32_47 : i32
    %193 = vector.broadcast %192 : i1 to vector<16x64xi1>
    %194 = vector.broadcast %193 : vector<16x64xi1> to vector<16x64xi1>
    %195 = arith.xori %191, %194 : vector<16x64xi1>
    %196 = arith.andi %195, %189 : vector<16x64xi1>
    %197 = vector.broadcast %185 : i32 to vector<16x64xi32>
    %198 = arith.addi %187, %197 : vector<16x64xi32>
    %199 = arith.select %196, %198, %187 : vector<16x64xi1>, vector<16x64xi32>
    %c2_i32_48 = arith.constant 2 : i32
    %c0_i32_49 = arith.constant 0 : i32
    %200 = arith.cmpi eq, %c2_i32_48, %c0_i32_49 : i32
    %c1_i32_50 = arith.constant 1 : i32
    %201 = arith.select %200, %c1_i32_50, %c2_i32_48 : i32
    %202 = vector.broadcast %201 : i32 to vector<16x64xi32>
    %203 = arith.remsi %183, %202 : vector<16x64xi32>
    %c0_i32_51 = arith.constant 0 : i32
    %204 = vector.broadcast %c0_i32_51 : i32 to vector<16x64xi32>
    %205 = arith.cmpi ne, %203, %204 : vector<16x64xi32>
    %c0_i32_52 = arith.constant 0 : i32
    %206 = vector.broadcast %c0_i32_52 : i32 to vector<16x64xi32>
    %207 = arith.cmpi slt, %203, %206 : vector<16x64xi32>
    %c0_i32_53 = arith.constant 0 : i32
    %208 = arith.cmpi slt, %201, %c0_i32_53 : i32
    %209 = vector.broadcast %208 : i1 to vector<16x64xi1>
    %210 = vector.broadcast %209 : vector<16x64xi1> to vector<16x64xi1>
    %211 = arith.xori %207, %210 : vector<16x64xi1>
    %212 = arith.andi %211, %205 : vector<16x64xi1>
    %213 = vector.broadcast %201 : i32 to vector<16x64xi32>
    %214 = arith.addi %203, %213 : vector<16x64xi32>
    %215 = arith.select %212, %214, %203 : vector<16x64xi1>, vector<16x64xi32>
    %216 = arith.cmpi eq, %199, %215 : vector<16x64xi32>
    %217 = arith.extui %216 : vector<16x64xi1> to vector<16x64xi32>
    %218 = arith.sitofp %217 : vector<16x64xi32> to vector<16x64xf32>
    %219 = tpu.iota {dimensions = array<i32: 0>} : vector<16x80xi32>
    %220 = tpu.iota {dimensions = array<i32: 1>} : vector<16x80xi32>
    %c2_i32_54 = arith.constant 2 : i32
    %c0_i32_55 = arith.constant 0 : i32
    %221 = arith.cmpi eq, %c2_i32_54, %c0_i32_55 : i32
    %c1_i32_56 = arith.constant 1 : i32
    %222 = arith.select %221, %c1_i32_56, %c2_i32_54 : i32
    %223 = vector.broadcast %222 : i32 to vector<16x80xi32>
    %224 = arith.remsi %219, %223 : vector<16x80xi32>
    %c0_i32_57 = arith.constant 0 : i32
    %225 = vector.broadcast %c0_i32_57 : i32 to vector<16x80xi32>
    %226 = arith.cmpi ne, %224, %225 : vector<16x80xi32>
    %c0_i32_58 = arith.constant 0 : i32
    %227 = vector.broadcast %c0_i32_58 : i32 to vector<16x80xi32>
    %228 = arith.cmpi slt, %224, %227 : vector<16x80xi32>
    %c0_i32_59 = arith.constant 0 : i32
    %229 = arith.cmpi slt, %222, %c0_i32_59 : i32
    %230 = vector.broadcast %229 : i1 to vector<16x80xi1>
    %231 = vector.broadcast %230 : vector<16x80xi1> to vector<16x80xi1>
    %232 = arith.xori %228, %231 : vector<16x80xi1>
    %233 = arith.andi %232, %226 : vector<16x80xi1>
    %234 = vector.broadcast %222 : i32 to vector<16x80xi32>
    %235 = arith.addi %224, %234 : vector<16x80xi32>
    %236 = arith.select %233, %235, %224 : vector<16x80xi1>, vector<16x80xi32>
    %c2_i32_60 = arith.constant 2 : i32
    %c0_i32_61 = arith.constant 0 : i32
    %237 = arith.cmpi eq, %c2_i32_60, %c0_i32_61 : i32
    %c1_i32_62 = arith.constant 1 : i32
    %238 = arith.select %237, %c1_i32_62, %c2_i32_60 : i32
    %239 = vector.broadcast %238 : i32 to vector<16x80xi32>
    %240 = arith.remsi %220, %239 : vector<16x80xi32>
    %c0_i32_63 = arith.constant 0 : i32
    %241 = vector.broadcast %c0_i32_63 : i32 to vector<16x80xi32>
    %242 = arith.cmpi ne, %240, %241 : vector<16x80xi32>
    %c0_i32_64 = arith.constant 0 : i32
    %243 = vector.broadcast %c0_i32_64 : i32 to vector<16x80xi32>
    %244 = arith.cmpi slt, %240, %243 : vector<16x80xi32>
    %c0_i32_65 = arith.constant 0 : i32
    %245 = arith.cmpi slt, %238, %c0_i32_65 : i32
    %246 = vector.broadcast %245 : i1 to vector<16x80xi1>
    %247 = vector.broadcast %246 : vector<16x80xi1> to vector<16x80xi1>
    %248 = arith.xori %244, %247 : vector<16x80xi1>
    %249 = arith.andi %248, %242 : vector<16x80xi1>
    %250 = vector.broadcast %238 : i32 to vector<16x80xi32>
    %251 = arith.addi %240, %250 : vector<16x80xi32>
    %252 = arith.select %249, %251, %240 : vector<16x80xi1>, vector<16x80xi32>
    %253 = arith.cmpi eq, %236, %252 : vector<16x80xi32>
    %254 = arith.extui %253 : vector<16x80xi1> to vector<16x80xi32>
    %255 = arith.sitofp %254 : vector<16x80xi32> to vector<16x80xf32>
    %256 = tpu.iota {dimensions = array<i32: 0>} : vector<16x96xi32>
    %257 = tpu.iota {dimensions = array<i32: 1>} : vector<16x96xi32>
    %c2_i32_66 = arith.constant 2 : i32
    %c0_i32_67 = arith.constant 0 : i32
    %258 = arith.cmpi eq, %c2_i32_66, %c0_i32_67 : i32
    %c1_i32_68 = arith.constant 1 : i32
    %259 = arith.select %258, %c1_i32_68, %c2_i32_66 : i32
    %260 = vector.broadcast %259 : i32 to vector<16x96xi32>
    %261 = arith.remsi %256, %260 : vector<16x96xi32>
    %c0_i32_69 = arith.constant 0 : i32
    %262 = vector.broadcast %c0_i32_69 : i32 to vector<16x96xi32>
    %263 = arith.cmpi ne, %261, %262 : vector<16x96xi32>
    %c0_i32_70 = arith.constant 0 : i32
    %264 = vector.broadcast %c0_i32_70 : i32 to vector<16x96xi32>
    %265 = arith.cmpi slt, %261, %264 : vector<16x96xi32>
    %c0_i32_71 = arith.constant 0 : i32
    %266 = arith.cmpi slt, %259, %c0_i32_71 : i32
    %267 = vector.broadcast %266 : i1 to vector<16x96xi1>
    %268 = vector.broadcast %267 : vector<16x96xi1> to vector<16x96xi1>
    %269 = arith.xori %265, %268 : vector<16x96xi1>
    %270 = arith.andi %269, %263 : vector<16x96xi1>
    %271 = vector.broadcast %259 : i32 to vector<16x96xi32>
    %272 = arith.addi %261, %271 : vector<16x96xi32>
    %273 = arith.select %270, %272, %261 : vector<16x96xi1>, vector<16x96xi32>
    %c2_i32_72 = arith.constant 2 : i32
    %c0_i32_73 = arith.constant 0 : i32
    %274 = arith.cmpi eq, %c2_i32_72, %c0_i32_73 : i32
    %c1_i32_74 = arith.constant 1 : i32
    %275 = arith.select %274, %c1_i32_74, %c2_i32_72 : i32
    %276 = vector.broadcast %275 : i32 to vector<16x96xi32>
    %277 = arith.remsi %257, %276 : vector<16x96xi32>
    %c0_i32_75 = arith.constant 0 : i32
    %278 = vector.broadcast %c0_i32_75 : i32 to vector<16x96xi32>
    %279 = arith.cmpi ne, %277, %278 : vector<16x96xi32>
    %c0_i32_76 = arith.constant 0 : i32
    %280 = vector.broadcast %c0_i32_76 : i32 to vector<16x96xi32>
    %281 = arith.cmpi slt, %277, %280 : vector<16x96xi32>
    %c0_i32_77 = arith.constant 0 : i32
    %282 = arith.cmpi slt, %275, %c0_i32_77 : i32
    %283 = vector.broadcast %282 : i1 to vector<16x96xi1>
    %284 = vector.broadcast %283 : vector<16x96xi1> to vector<16x96xi1>
    %285 = arith.xori %281, %284 : vector<16x96xi1>
    %286 = arith.andi %285, %279 : vector<16x96xi1>
    %287 = vector.broadcast %275 : i32 to vector<16x96xi32>
    %288 = arith.addi %277, %287 : vector<16x96xi32>
    %289 = arith.select %286, %288, %277 : vector<16x96xi1>, vector<16x96xi32>
    %290 = arith.cmpi eq, %273, %289 : vector<16x96xi32>
    %291 = arith.extui %290 : vector<16x96xi1> to vector<16x96xi32>
    %292 = arith.sitofp %291 : vector<16x96xi32> to vector<16x96xf32>
    %c120 = arith.constant 120 : index
    %c0_78 = arith.constant 0 : index
    %293 = vector.load %arg3[%c120, %c0_78] : memref<448x128xf32, #tpu.memory_space<vmem>>, vector<32x64xf32>
    %cst_79 = arith.constant dense<0.000000e+00> : vector<20x64xf32>
    %294 = tpu.matmul %1, %293, %cst_79 {dimension_numbers = #tpu.dot_dimension_numbers<[1], [0], [0], [1], [0, 0, 1, 1], [], []>} : vector<20x32xf32>, vector<32x64xf32>, vector<20x64xf32> -> vector<20x64xf32>
    %c152 = arith.constant 152 : index
    %c0_80 = arith.constant 0 : index
    %295 = vector.load %arg3[%c152, %c0_80] : memref<448x128xf32, #tpu.memory_space<vmem>>, vector<1x64xf32>
    %296 = vector.broadcast %295 : vector<1x64xf32> to vector<20x64xf32>
    %297 = arith.addf %294, %296 : vector<20x64xf32>
    %298 = vector.extract_strided_slice %297 {offsets = [0, 0], sizes = [20, 32], strides = [1, 1]} : vector<20x64xf32> to vector<20x32xf32>
    %299 = vector.extract_strided_slice %297 {offsets = [0, 32], sizes = [20, 32], strides = [1, 1]} : vector<20x64xf32> to vector<20x32xf32>
    %300 = tpu.concatenate %298, %298, %298, %298 in 0 : vector<20x32xf32>, vector<20x32xf32>, vector<20x32xf32>, vector<20x32xf32> -> vector<80x32xf32>
    %301 = arith.mulf %300, %122 : vector<80x32xf32>
    %302 = tpu.concatenate %299, %299, %299, %299 in 0 : vector<20x32xf32>, vector<20x32xf32>, vector<20x32xf32>, vector<20x32xf32> -> vector<80x32xf32>
    %303 = arith.mulf %302, %122 : vector<80x32xf32>
    %c240 = arith.constant 240 : index
    %c0_81 = arith.constant 0 : index
    %304 = vector.load %arg3[%c240, %c0_81] : memref<448x128xf32, #tpu.memory_space<vmem>>, vector<32x64xf32>
    %cst_82 = arith.constant dense<0.000000e+00> : vector<24x64xf32>
    %305 = tpu.matmul %2, %304, %cst_82 {dimension_numbers = #tpu.dot_dimension_numbers<[1], [0], [0], [1], [0, 0, 1, 1], [], []>} : vector<24x32xf32>, vector<32x64xf32>, vector<24x64xf32> -> vector<24x64xf32>
    %c272 = arith.constant 272 : index
    %c0_83 = arith.constant 0 : index
    %306 = vector.load %arg3[%c272, %c0_83] : memref<448x128xf32, #tpu.memory_space<vmem>>, vector<1x64xf32>
    %307 = vector.broadcast %306 : vector<1x64xf32> to vector<24x64xf32>
    %308 = arith.addf %305, %307 : vector<24x64xf32>
    %309 = vector.extract_strided_slice %308 {offsets = [0, 0], sizes = [24, 32], strides = [1, 1]} : vector<24x64xf32> to vector<24x32xf32>
    %310 = vector.extract_strided_slice %308 {offsets = [0, 32], sizes = [24, 32], strides = [1, 1]} : vector<24x64xf32> to vector<24x32xf32>
    %311 = tpu.concatenate %309, %309, %309, %309 in 0 : vector<24x32xf32>, vector<24x32xf32>, vector<24x32xf32>, vector<24x32xf32> -> vector<96x32xf32>
    %312 = arith.mulf %311, %181 : vector<96x32xf32>
    %313 = tpu.concatenate %310, %310, %310, %310 in 0 : vector<24x32xf32>, vector<24x32xf32>, vector<24x32xf32>, vector<24x32xf32> -> vector<96x32xf32>
    %314 = arith.mulf %313, %181 : vector<96x32xf32>
    %c0_84 = arith.constant 0 : index
    %c0_85 = arith.constant 0 : index
    %315 = vector.load %arg3[%c0_84, %c0_85] : memref<448x128xf32, #tpu.memory_space<vmem>>, vector<32x96xf32>
    %cst_86 = arith.constant dense<0.000000e+00> : vector<16x96xf32>
    %316 = tpu.matmul %0, %315, %cst_86 {dimension_numbers = #tpu.dot_dimension_numbers<[1], [0], [0], [1], [0, 0, 1, 1], [], []>} : vector<16x32xf32>, vector<32x96xf32>, vector<16x96xf32> -> vector<16x96xf32>
    %c32 = arith.constant 32 : index
    %c0_87 = arith.constant 0 : index
    %317 = vector.load %arg3[%c32, %c0_87] : memref<448x128xf32, #tpu.memory_space<vmem>>, vector<1x96xf32>
    %318 = vector.broadcast %317 : vector<1x96xf32> to vector<16x96xf32>
    %319 = arith.addf %316, %318 : vector<16x96xf32>
    %320 = vector.extract_strided_slice %319 {offsets = [0, 32], sizes = [16, 32], strides = [1, 1]} : vector<16x96xf32> to vector<16x32xf32>
    %321 = vector.extract_strided_slice %319 {offsets = [0, 64], sizes = [16, 32], strides = [1, 1]} : vector<16x96xf32> to vector<16x32xf32>
    %322 = tpu.concatenate %320, %320, %320, %320 in 0 : vector<16x32xf32>, vector<16x32xf32>, vector<16x32xf32>, vector<16x32xf32> -> vector<64x32xf32>
    %323 = arith.mulf %322, %63 : vector<64x32xf32>
    %324 = tpu.concatenate %321, %321, %321, %321 in 0 : vector<16x32xf32>, vector<16x32xf32>, vector<16x32xf32>, vector<16x32xf32> -> vector<64x32xf32>
    %325 = arith.mulf %324, %63 : vector<64x32xf32>
    %326 = vector.extract_strided_slice %319 {offsets = [0, 0], sizes = [16, 32], strides = [1, 1]} : vector<16x96xf32> to vector<16x32xf32>
    %c40 = arith.constant 40 : index
    %c0_88 = arith.constant 0 : index
    %327 = vector.load %arg3[%c40, %c0_88] : memref<448x128xf32, #tpu.memory_space<vmem>>, vector<32x32xf32>
    %c72 = arith.constant 72 : index
    %c0_89 = arith.constant 0 : index
    %328 = vector.load %arg3[%c72, %c0_89] : memref<448x128xf32, #tpu.memory_space<vmem>>, vector<1x32xf32>
    %cst_90 = arith.constant dense<0.000000e+00> : vector<16x64xf32>
    %329 = tpu.matmul %326, %323, %cst_90 {dimension_numbers = #tpu.dot_dimension_numbers<[1], [1], [0], [0], [0, 0, 1, 0], [], []>} : vector<16x32xf32>, vector<64x32xf32>, vector<16x64xf32> -> vector<16x64xf32>
    %cst_91 = arith.constant dense<0xFF800000> : vector<16xf32>
    %330 = vector.multi_reduction <maximumf>, %329, %cst_91 [1] : vector<16x64xf32> to vector<16xf32>
    %331 = vector.shape_cast %330 : vector<16xf32> to vector<16x1xf32>
    %332 = vector.broadcast %331 : vector<16x1xf32> to vector<16x64xf32>
    %333 = arith.subf %329, %332 : vector<16x64xf32>
    %334 = math.exp %333 : vector<16x64xf32>
    %335 = arith.mulf %334, %218 : vector<16x64xf32>
    %cst_92 = arith.constant dense<0.000000e+00> : vector<16x32xf32>
    %336 = tpu.matmul %335, %325, %cst_92 {dimension_numbers = #tpu.dot_dimension_numbers<[1], [0], [0], [1], [0, 0, 1, 1], [], []>} : vector<16x64xf32>, vector<64x32xf32>, vector<16x32xf32> -> vector<16x32xf32>
    %cst_93 = arith.constant dense<0.000000e+00> : vector<16x32xf32>
    %337 = tpu.matmul %335, %63, %cst_93 {dimension_numbers = #tpu.dot_dimension_numbers<[1], [0], [0], [1], [0, 0, 1, 1], [], []>} : vector<16x64xf32>, vector<64x32xf32>, vector<16x32xf32> -> vector<16x32xf32>
    %338 = tpu.reciprocal %337 {approx = true} : vector<16x32xf32> -> vector<16x32xf32>
    %339 = arith.mulf %336, %338 : vector<16x32xf32>
    %cst_94 = arith.constant dense<0.000000e+00> : vector<16x32xf32>
    %340 = tpu.matmul %339, %327, %cst_94 {dimension_numbers = #tpu.dot_dimension_numbers<[1], [0], [0], [1], [0, 0, 1, 1], [], []>} : vector<16x32xf32>, vector<32x32xf32>, vector<16x32xf32> -> vector<16x32xf32>
    %341 = vector.broadcast %328 : vector<1x32xf32> to vector<16x32xf32>
    %342 = arith.addf %340, %341 : vector<16x32xf32>
    %343 = arith.addf %0, %342 : vector<16x32xf32>
    %344 = vector.extract_strided_slice %3 {offsets = [0, 0], sizes = [1, 32], strides = [1, 1]} : vector<4x32xf32> to vector<1x32xf32>
    %345 = vector.extract_strided_slice %4 {offsets = [0, 0], sizes = [1, 32], strides = [1, 1]} : vector<4x32xf32> to vector<1x32xf32>
    %cst_95 = arith.constant dense<0.000000e+00> : vector<16xf32>
    %346 = vector.multi_reduction <add>, %343, %cst_95 [1] : vector<16x32xf32> to vector<16xf32>
    %347 = vector.shape_cast %346 : vector<16xf32> to vector<16x1xf32>
    %cst_96 = arith.constant 3.200000e+01 : f32
    %348 = vector.broadcast %cst_96 : f32 to vector<16x1xf32>
    %349 = arith.divf %347, %348 : vector<16x1xf32>
    %350 = vector.broadcast %349 : vector<16x1xf32> to vector<16x32xf32>
    %351 = arith.subf %343, %350 : vector<16x32xf32>
    %352 = arith.mulf %351, %351 : vector<16x32xf32>
    %cst_97 = arith.constant dense<0.000000e+00> : vector<16xf32>
    %353 = vector.multi_reduction <add>, %352, %cst_97 [1] : vector<16x32xf32> to vector<16xf32>
    %354 = vector.shape_cast %353 : vector<16xf32> to vector<16x1xf32>
    %cst_98 = arith.constant 3.200000e+01 : f32
    %355 = vector.broadcast %cst_98 : f32 to vector<16x1xf32>
    %356 = arith.divf %354, %355 : vector<16x1xf32>
    %cst_99 = arith.constant 9.99999974E-6 : f32
    %357 = vector.broadcast %cst_99 : f32 to vector<16x1xf32>
    %358 = arith.addf %356, %357 : vector<16x1xf32>
    %359 = math.rsqrt %358 : vector<16x1xf32>
    %360 = vector.broadcast %359 : vector<16x1xf32> to vector<16x32xf32>
    %361 = arith.mulf %351, %360 : vector<16x32xf32>
    %362 = vector.broadcast %344 : vector<1x32xf32> to vector<16x32xf32>
    %363 = arith.mulf %361, %362 : vector<16x32xf32>
    %364 = vector.broadcast %345 : vector<1x32xf32> to vector<16x32xf32>
    %365 = arith.addf %363, %364 : vector<16x32xf32>
    %c80 = arith.constant 80 : index
    %c0_100 = arith.constant 0 : index
    %366 = vector.load %arg3[%c80, %c0_100] : memref<448x128xf32, #tpu.memory_space<vmem>>, vector<32x32xf32>
    %cst_101 = arith.constant dense<0.000000e+00> : vector<16x32xf32>
    %367 = tpu.matmul %365, %366, %cst_101 {dimension_numbers = #tpu.dot_dimension_numbers<[1], [0], [0], [1], [0, 0, 1, 1], [], []>} : vector<16x32xf32>, vector<32x32xf32>, vector<16x32xf32> -> vector<16x32xf32>
    %c112 = arith.constant 112 : index
    %c0_102 = arith.constant 0 : index
    %368 = vector.load %arg3[%c112, %c0_102] : memref<448x128xf32, #tpu.memory_space<vmem>>, vector<1x32xf32>
    %369 = vector.broadcast %368 : vector<1x32xf32> to vector<16x32xf32>
    %370 = arith.addf %367, %369 : vector<16x32xf32>
    %c160 = arith.constant 160 : index
    %c0_103 = arith.constant 0 : index
    %371 = vector.load %arg3[%c160, %c0_103] : memref<448x128xf32, #tpu.memory_space<vmem>>, vector<32x32xf32>
    %c192 = arith.constant 192 : index
    %c0_104 = arith.constant 0 : index
    %372 = vector.load %arg3[%c192, %c0_104] : memref<448x128xf32, #tpu.memory_space<vmem>>, vector<1x32xf32>
    %cst_105 = arith.constant dense<0.000000e+00> : vector<16x80xf32>
    %373 = tpu.matmul %370, %301, %cst_105 {dimension_numbers = #tpu.dot_dimension_numbers<[1], [1], [0], [0], [0, 0, 1, 0], [], []>} : vector<16x32xf32>, vector<80x32xf32>, vector<16x80xf32> -> vector<16x80xf32>
    %cst_106 = arith.constant dense<0xFF800000> : vector<16xf32>
    %374 = vector.multi_reduction <maximumf>, %373, %cst_106 [1] : vector<16x80xf32> to vector<16xf32>
    %375 = vector.shape_cast %374 : vector<16xf32> to vector<16x1xf32>
    %376 = vector.broadcast %375 : vector<16x1xf32> to vector<16x80xf32>
    %377 = arith.subf %373, %376 : vector<16x80xf32>
    %378 = math.exp %377 : vector<16x80xf32>
    %379 = arith.mulf %378, %255 : vector<16x80xf32>
    %cst_107 = arith.constant dense<0.000000e+00> : vector<16x32xf32>
    %380 = tpu.matmul %379, %303, %cst_107 {dimension_numbers = #tpu.dot_dimension_numbers<[1], [0], [0], [1], [0, 0, 1, 1], [], []>} : vector<16x80xf32>, vector<80x32xf32>, vector<16x32xf32> -> vector<16x32xf32>
    %cst_108 = arith.constant dense<0.000000e+00> : vector<16x32xf32>
    %381 = tpu.matmul %379, %122, %cst_108 {dimension_numbers = #tpu.dot_dimension_numbers<[1], [0], [0], [1], [0, 0, 1, 1], [], []>} : vector<16x80xf32>, vector<80x32xf32>, vector<16x32xf32> -> vector<16x32xf32>
    %382 = tpu.reciprocal %381 {approx = true} : vector<16x32xf32> -> vector<16x32xf32>
    %383 = arith.mulf %380, %382 : vector<16x32xf32>
    %cst_109 = arith.constant dense<0.000000e+00> : vector<16x32xf32>
    %384 = tpu.matmul %383, %371, %cst_109 {dimension_numbers = #tpu.dot_dimension_numbers<[1], [0], [0], [1], [0, 0, 1, 1], [], []>} : vector<16x32xf32>, vector<32x32xf32>, vector<16x32xf32> -> vector<16x32xf32>
    %385 = vector.broadcast %372 : vector<1x32xf32> to vector<16x32xf32>
    %386 = arith.addf %384, %385 : vector<16x32xf32>
    %387 = arith.addf %365, %386 : vector<16x32xf32>
    %388 = vector.extract_strided_slice %3 {offsets = [1, 0], sizes = [1, 32], strides = [1, 1]} : vector<4x32xf32> to vector<1x32xf32>
    %389 = vector.extract_strided_slice %4 {offsets = [1, 0], sizes = [1, 32], strides = [1, 1]} : vector<4x32xf32> to vector<1x32xf32>
    %cst_110 = arith.constant dense<0.000000e+00> : vector<16xf32>
    %390 = vector.multi_reduction <add>, %387, %cst_110 [1] : vector<16x32xf32> to vector<16xf32>
    %391 = vector.shape_cast %390 : vector<16xf32> to vector<16x1xf32>
    %cst_111 = arith.constant 3.200000e+01 : f32
    %392 = vector.broadcast %cst_111 : f32 to vector<16x1xf32>
    %393 = arith.divf %391, %392 : vector<16x1xf32>
    %394 = vector.broadcast %393 : vector<16x1xf32> to vector<16x32xf32>
    %395 = arith.subf %387, %394 : vector<16x32xf32>
    %396 = arith.mulf %395, %395 : vector<16x32xf32>
    %cst_112 = arith.constant dense<0.000000e+00> : vector<16xf32>
    %397 = vector.multi_reduction <add>, %396, %cst_112 [1] : vector<16x32xf32> to vector<16xf32>
    %398 = vector.shape_cast %397 : vector<16xf32> to vector<16x1xf32>
    %cst_113 = arith.constant 3.200000e+01 : f32
    %399 = vector.broadcast %cst_113 : f32 to vector<16x1xf32>
    %400 = arith.divf %398, %399 : vector<16x1xf32>
    %cst_114 = arith.constant 9.99999974E-6 : f32
    %401 = vector.broadcast %cst_114 : f32 to vector<16x1xf32>
    %402 = arith.addf %400, %401 : vector<16x1xf32>
    %403 = math.rsqrt %402 : vector<16x1xf32>
    %404 = vector.broadcast %403 : vector<16x1xf32> to vector<16x32xf32>
    %405 = arith.mulf %395, %404 : vector<16x32xf32>
    %406 = vector.broadcast %388 : vector<1x32xf32> to vector<16x32xf32>
    %407 = arith.mulf %405, %406 : vector<16x32xf32>
    %408 = vector.broadcast %389 : vector<1x32xf32> to vector<16x32xf32>
    %409 = arith.addf %407, %408 : vector<16x32xf32>
    %c200 = arith.constant 200 : index
    %c0_115 = arith.constant 0 : index
    %410 = vector.load %arg3[%c200, %c0_115] : memref<448x128xf32, #tpu.memory_space<vmem>>, vector<32x32xf32>
    %cst_116 = arith.constant dense<0.000000e+00> : vector<16x32xf32>
    %411 = tpu.matmul %409, %410, %cst_116 {dimension_numbers = #tpu.dot_dimension_numbers<[1], [0], [0], [1], [0, 0, 1, 1], [], []>} : vector<16x32xf32>, vector<32x32xf32>, vector<16x32xf32> -> vector<16x32xf32>
    %c232 = arith.constant 232 : index
    %c0_117 = arith.constant 0 : index
    %412 = vector.load %arg3[%c232, %c0_117] : memref<448x128xf32, #tpu.memory_space<vmem>>, vector<1x32xf32>
    %413 = vector.broadcast %412 : vector<1x32xf32> to vector<16x32xf32>
    %414 = arith.addf %411, %413 : vector<16x32xf32>
    %c280 = arith.constant 280 : index
    %c0_118 = arith.constant 0 : index
    %415 = vector.load %arg3[%c280, %c0_118] : memref<448x128xf32, #tpu.memory_space<vmem>>, vector<32x32xf32>
    %c312 = arith.constant 312 : index
    %c0_119 = arith.constant 0 : index
    %416 = vector.load %arg3[%c312, %c0_119] : memref<448x128xf32, #tpu.memory_space<vmem>>, vector<1x32xf32>
    %cst_120 = arith.constant dense<0.000000e+00> : vector<16x96xf32>
    %417 = tpu.matmul %414, %312, %cst_120 {dimension_numbers = #tpu.dot_dimension_numbers<[1], [1], [0], [0], [0, 0, 1, 0], [], []>} : vector<16x32xf32>, vector<96x32xf32>, vector<16x96xf32> -> vector<16x96xf32>
    %cst_121 = arith.constant dense<0xFF800000> : vector<16xf32>
    %418 = vector.multi_reduction <maximumf>, %417, %cst_121 [1] : vector<16x96xf32> to vector<16xf32>
    %419 = vector.shape_cast %418 : vector<16xf32> to vector<16x1xf32>
    %420 = vector.broadcast %419 : vector<16x1xf32> to vector<16x96xf32>
    %421 = arith.subf %417, %420 : vector<16x96xf32>
    %422 = math.exp %421 : vector<16x96xf32>
    %423 = arith.mulf %422, %292 : vector<16x96xf32>
    %cst_122 = arith.constant dense<0.000000e+00> : vector<16x32xf32>
    %424 = tpu.matmul %423, %314, %cst_122 {dimension_numbers = #tpu.dot_dimension_numbers<[1], [0], [0], [1], [0, 0, 1, 1], [], []>} : vector<16x96xf32>, vector<96x32xf32>, vector<16x32xf32> -> vector<16x32xf32>
    %cst_123 = arith.constant dense<0.000000e+00> : vector<16x32xf32>
    %425 = tpu.matmul %423, %181, %cst_123 {dimension_numbers = #tpu.dot_dimension_numbers<[1], [0], [0], [1], [0, 0, 1, 1], [], []>} : vector<16x96xf32>, vector<96x32xf32>, vector<16x32xf32> -> vector<16x32xf32>
    %426 = tpu.reciprocal %425 {approx = true} : vector<16x32xf32> -> vector<16x32xf32>
    %427 = arith.mulf %424, %426 : vector<16x32xf32>
    %cst_124 = arith.constant dense<0.000000e+00> : vector<16x32xf32>
    %428 = tpu.matmul %427, %415, %cst_124 {dimension_numbers = #tpu.dot_dimension_numbers<[1], [0], [0], [1], [0, 0, 1, 1], [], []>} : vector<16x32xf32>, vector<32x32xf32>, vector<16x32xf32> -> vector<16x32xf32>
    %429 = vector.broadcast %416 : vector<1x32xf32> to vector<16x32xf32>
    %430 = arith.addf %428, %429 : vector<16x32xf32>
    %431 = arith.addf %409, %430 : vector<16x32xf32>
    %432 = vector.extract_strided_slice %3 {offsets = [2, 0], sizes = [1, 32], strides = [1, 1]} : vector<4x32xf32> to vector<1x32xf32>
    %433 = vector.extract_strided_slice %4 {offsets = [2, 0], sizes = [1, 32], strides = [1, 1]} : vector<4x32xf32> to vector<1x32xf32>
    %cst_125 = arith.constant dense<0.000000e+00> : vector<16xf32>
    %434 = vector.multi_reduction <add>, %431, %cst_125 [1] : vector<16x32xf32> to vector<16xf32>
    %435 = vector.shape_cast %434 : vector<16xf32> to vector<16x1xf32>
    %cst_126 = arith.constant 3.200000e+01 : f32
    %436 = vector.broadcast %cst_126 : f32 to vector<16x1xf32>
    %437 = arith.divf %435, %436 : vector<16x1xf32>
    %438 = vector.broadcast %437 : vector<16x1xf32> to vector<16x32xf32>
    %439 = arith.subf %431, %438 : vector<16x32xf32>
    %440 = arith.mulf %439, %439 : vector<16x32xf32>
    %cst_127 = arith.constant dense<0.000000e+00> : vector<16xf32>
    %441 = vector.multi_reduction <add>, %440, %cst_127 [1] : vector<16x32xf32> to vector<16xf32>
    %442 = vector.shape_cast %441 : vector<16xf32> to vector<16x1xf32>
    %cst_128 = arith.constant 3.200000e+01 : f32
    %443 = vector.broadcast %cst_128 : f32 to vector<16x1xf32>
    %444 = arith.divf %442, %443 : vector<16x1xf32>
    %cst_129 = arith.constant 9.99999974E-6 : f32
    %445 = vector.broadcast %cst_129 : f32 to vector<16x1xf32>
    %446 = arith.addf %444, %445 : vector<16x1xf32>
    %447 = math.rsqrt %446 : vector<16x1xf32>
    %448 = vector.broadcast %447 : vector<16x1xf32> to vector<16x32xf32>
    %449 = arith.mulf %439, %448 : vector<16x32xf32>
    %450 = vector.broadcast %432 : vector<1x32xf32> to vector<16x32xf32>
    %451 = arith.mulf %449, %450 : vector<16x32xf32>
    %452 = vector.broadcast %433 : vector<1x32xf32> to vector<16x32xf32>
    %453 = arith.addf %451, %452 : vector<16x32xf32>
    %c320 = arith.constant 320 : index
    %c0_130 = arith.constant 0 : index
    %454 = vector.load %arg3[%c320, %c0_130] : memref<448x128xf32, #tpu.memory_space<vmem>>, vector<32x64xf32>
    %cst_131 = arith.constant dense<0.000000e+00> : vector<16x64xf32>
    %455 = tpu.matmul %453, %454, %cst_131 {dimension_numbers = #tpu.dot_dimension_numbers<[1], [0], [0], [1], [0, 0, 1, 1], [], []>} : vector<16x32xf32>, vector<32x64xf32>, vector<16x64xf32> -> vector<16x64xf32>
    %c352 = arith.constant 352 : index
    %c0_132 = arith.constant 0 : index
    %456 = vector.load %arg3[%c352, %c0_132] : memref<448x128xf32, #tpu.memory_space<vmem>>, vector<1x64xf32>
    %457 = vector.broadcast %456 : vector<1x64xf32> to vector<16x64xf32>
    %458 = arith.addf %455, %457 : vector<16x64xf32>
    %cst_133 = arith.constant 0.000000e+00 : f32
    %459 = vector.broadcast %cst_133 : f32 to vector<16x64xf32>
    %460 = arith.maximumf %458, %459 : vector<16x64xf32>
    %c360 = arith.constant 360 : index
    %c0_134 = arith.constant 0 : index
    %461 = vector.load %arg3[%c360, %c0_134] : memref<448x128xf32, #tpu.memory_space<vmem>>, vector<64x32xf32>
    %cst_135 = arith.constant dense<0.000000e+00> : vector<16x32xf32>
    %462 = tpu.matmul %460, %461, %cst_135 {dimension_numbers = #tpu.dot_dimension_numbers<[1], [0], [0], [1], [0, 0, 1, 1], [], []>} : vector<16x64xf32>, vector<64x32xf32>, vector<16x32xf32> -> vector<16x32xf32>
    %c424 = arith.constant 424 : index
    %c0_136 = arith.constant 0 : index
    %463 = vector.load %arg3[%c424, %c0_136] : memref<448x128xf32, #tpu.memory_space<vmem>>, vector<1x32xf32>
    %464 = vector.broadcast %463 : vector<1x32xf32> to vector<16x32xf32>
    %465 = arith.addf %462, %464 : vector<16x32xf32>
    %466 = arith.addf %453, %465 : vector<16x32xf32>
    %467 = vector.extract_strided_slice %3 {offsets = [3, 0], sizes = [1, 32], strides = [1, 1]} : vector<4x32xf32> to vector<1x32xf32>
    %468 = vector.extract_strided_slice %4 {offsets = [3, 0], sizes = [1, 32], strides = [1, 1]} : vector<4x32xf32> to vector<1x32xf32>
    %cst_137 = arith.constant dense<0.000000e+00> : vector<16xf32>
    %469 = vector.multi_reduction <add>, %466, %cst_137 [1] : vector<16x32xf32> to vector<16xf32>
    %470 = vector.shape_cast %469 : vector<16xf32> to vector<16x1xf32>
    %cst_138 = arith.constant 3.200000e+01 : f32
    %471 = vector.broadcast %cst_138 : f32 to vector<16x1xf32>
    %472 = arith.divf %470, %471 : vector<16x1xf32>
    %473 = vector.broadcast %472 : vector<16x1xf32> to vector<16x32xf32>
    %474 = arith.subf %466, %473 : vector<16x32xf32>
    %475 = arith.mulf %474, %474 : vector<16x32xf32>
    %cst_139 = arith.constant dense<0.000000e+00> : vector<16xf32>
    %476 = vector.multi_reduction <add>, %475, %cst_139 [1] : vector<16x32xf32> to vector<16xf32>
    %477 = vector.shape_cast %476 : vector<16xf32> to vector<16x1xf32>
    %cst_140 = arith.constant 3.200000e+01 : f32
    %478 = vector.broadcast %cst_140 : f32 to vector<16x1xf32>
    %479 = arith.divf %477, %478 : vector<16x1xf32>
    %cst_141 = arith.constant 9.99999974E-6 : f32
    %480 = vector.broadcast %cst_141 : f32 to vector<16x1xf32>
    %481 = arith.addf %479, %480 : vector<16x1xf32>
    %482 = math.rsqrt %481 : vector<16x1xf32>
    %483 = vector.broadcast %482 : vector<16x1xf32> to vector<16x32xf32>
    %484 = arith.mulf %474, %483 : vector<16x32xf32>
    %485 = vector.broadcast %467 : vector<1x32xf32> to vector<16x32xf32>
    %486 = arith.mulf %484, %485 : vector<16x32xf32>
    %487 = vector.broadcast %468 : vector<1x32xf32> to vector<16x32xf32>
    %488 = arith.addf %486, %487 : vector<16x32xf32>
    %c0_142 = arith.constant 0 : index
    %c0_143 = arith.constant 0 : index
    %489 = vector.load %arg4[%c0_142, %c0_143] : memref<16x32xf32, #tpu.memory_space<vmem>>, vector<16x32xf32>
    tpu.vector_store %arg4[%c0_142, %c0_143], %488 {strides = array<i32>} : memref<16x32xf32, #tpu.memory_space<vmem>>, vector<16x32xf32>,
    return
  }
}

</mosaic_0001>

<llo_original>
// kernel: transformer_decoder_layer.1
$region0: #{transformer_decoder_layer.1}
  #allocation0 [shape = 'u32[]', space=smem, size = 0x4, offset = 0x4, fixed_abs, tag = 'smem constant byte address 0x4 - core index']
  #allocation1 [shape = 'u32[144,128]{1,0:T(1,128)}', space=vmem, size = 0x12000, scoped, tag = 'internal scratch']
  %s0 = inlined_call_operand.vmem [shape: f32[16,32], index: 0, kind: input, shape index: {}]
  %s1 = inlined_call_operand.vmem [shape: f32[20,32], index: 1, kind: input, shape index: {}]
  %s2 = inlined_call_operand.vmem [shape: f32[24,32], index: 2, kind: input, shape index: {}]
  %s3 = inlined_call_operand.hbm [shape: f32[448,128], index: 3, kind: input, shape index: {}]
  %s4 = inlined_call_operand.hbm [shape: f32[16,32], index: 4, kind: output, shape index: {}]
  %s5 = sld [smem:[#allocation0]]
  $region30: #{transformer_decoder_layer.1} parent=0
    _
  %s7 = ssub.s32 1, %s5
  %s8 = scalar_select 0, %s7, %s5
  $region1: #{transformer_decoder_layer.1} parent=0
    #allocation2 [shape = 'u8[229376]{0}', space=vmem, size = 0x38000, scoped, tag = 'input window, operand 3, single buffered']
    #allocation3 [shape = 's32[1]{0}', space=sflag, size = 0x4, scoped, tag = 'scoped memory for transformer_decoder_layer.1']
    #allocation4 [shape = 's32[1]{0}', space=sflag, size = 0x4, scoped, tag = 'scoped memory for transformer_decoder_layer.1']
    #allocation5 [shape = 'u8[8192]{0}', space=vmem, size = 0x2000, scoped, tag = 'output window, operand 0, single buffered']
    %9 = vsyncpa [#allocation3], 0
    %10 = vsyncpa [#allocation4], 0
    // Predicated region
    $region2: #{transformer_decoder_layer.1} parent=1 // pred_check
      _
    $region3: #{transformer_decoder_layer.1} parent=1 // pred_check_branch
      %12 = sbr.rel (0) target = $region5
    $region4: #{transformer_decoder_layer.1} parent=1 // pred_region
      _
    $region5: #{transformer_decoder_layer.1} parent=1 // pred_fallthru
      _
    // Predicated region
    $region6: #{transformer_decoder_layer.1} parent=1 // pred_check
      _
    $region7: #{transformer_decoder_layer.1} parent=1 // pred_check_branch
      %14 = sbr.rel (0) target = $region9
    $region8: #{transformer_decoder_layer.1} parent=1 // pred_region
      _
    $region9: #{transformer_decoder_layer.1} parent=1 // pred_fallthru
      _
    // Predicated region
    $region10: #{transformer_decoder_layer.1} parent=1 // pred_check
      _
    $region11: #{transformer_decoder_layer.1} parent=1 // pred_check_branch
      %16 = sbr.rel (0) target = $region13
    $region12: #{transformer_decoder_layer.1} parent=1 // pred_region
      _
    $region13: #{transformer_decoder_layer.1} parent=1 // pred_fallthru
      _
    // Predicated region
    $region14: #{transformer_decoder_layer.1} parent=1 // pred_check
      _
    $region15: #{transformer_decoder_layer.1} parent=1 // pred_check_branch
      %18 = sbr.rel (0) target = $region17
    $region16: #{transformer_decoder_layer.1} parent=1 // pred_region
      %s20 = ssub.s32 7168, 7168
      %21 = vsyncadd [#allocation3], %s20
      %s22 = sshll.u32 [#allocation2], 4
      %s23 = int_to_ptr.vmem [resolvable:$true] %s22
      %28 = dma.hbm_to_vmem [thread:$0]  %s3, 7168, %s23, [#allocation3], 128, 128, 8
    $region17: #{transformer_decoder_layer.1} parent=1 // pred_fallthru
      _
    // Predicated region
    $region18: #{transformer_decoder_layer.1} parent=1 // pred_check
      _
    $region19: #{transformer_decoder_layer.1} parent=1 // pred_check_branch
      %30 = sbr.rel (0) target = $region21
    $region20: #{transformer_decoder_layer.1} parent=1 // pred_region
      %31 = dma.done [#allocation3], 7168
    $region21: #{transformer_decoder_layer.1} parent=1 // pred_fallthru
      _
    %v32 = vld [vmem:[%s0] sm:$0xff]
    %v33 = vld [vmem:[%s0 + $0x8] sm:$0xff]
    %v34 = vld [vmem:[%s1] sm:$0xff]
    %v35 = vld [vmem:[%s1 + $0x8] sm:$0xff]
    %v36 = vld [vmem:[%s1 + $0x10] sm:$0xf]
    %v37 = vld [vmem:[%s2] sm:$0xff]
    %v38 = vld [vmem:[%s2 + $0x8] sm:$0xff]
    %v39 = vld [vmem:[%s2 + $0x10] sm:$0xff]
    %v40 = vld [vmem:[#allocation2 + $0x1b0] sm:$0xf]
    %v41 = vld [vmem:[#allocation2 + $0x1b8] sm:$0xf]
    %v42 = vlaneseq
    %v43 = vshrl.u32 %v42, 7
    %v44 = vadd.s32 %v43, 8
    %v45 = vadd.s32 %v43, 16
    %v46 = vadd.s32 %v43, 24
    %v47 = vadd.s32 %v43, 32
    %v48 = vadd.s32 %v43, 40
    %v49 = vadd.s32 %v43, 48
    %v50 = vadd.s32 %v43, 56
    %v51 = vlaneseq
    %v52 = vand.u32 %v51, 127
    %vm53 = vcmp.ge.s32.totalorder %v43, 0
    %vm54 = vcmp.ge.s32.totalorder %v44, 0
    %vm55 = vcmp.ge.s32.totalorder %v45, 0
    %vm56 = vcmp.ge.s32.totalorder %v46, 0
    %vm57 = vcmp.ge.s32.totalorder %v47, 0
    %vm58 = vcmp.ge.s32.totalorder %v48, 0
    %vm59 = vcmp.ge.s32.totalorder %v49, 0
    %vm60 = vcmp.ge.s32.totalorder %v50, 0
    %vm61 = vcmp.lt.s32.totalorder %v43, 16
    %vm62 = vcmp.lt.s32.totalorder %v44, 16
    %vm63 = vcmp.lt.s32.totalorder %v45, 16
    %vm64 = vcmp.lt.s32.totalorder %v46, 16
    %vm65 = vcmp.lt.s32.totalorder %v47, 16
    %vm66 = vcmp.lt.s32.totalorder %v48, 16
    %vm67 = vcmp.lt.s32.totalorder %v49, 16
    %vm68 = vcmp.lt.s32.totalorder %v50, 16
    %vm69 = vmand %vm53, %vm61
    %vm70 = vmand %vm54, %vm62
    %vm71 = vmand %vm55, %vm63
    %vm72 = vmand %vm56, %vm64
    %vm73 = vmand %vm57, %vm65
    %vm74 = vmand %vm58, %vm66
    %vm75 = vmand %vm59, %vm67
    %vm76 = vmand %vm60, %vm68
    %vm77 = vcmp.ge.s32.totalorder %v52, 0
    %vm78 = vmand %vm69, %vm77
    %vm79 = vmand %vm70, %vm77
    %vm80 = vmand %vm71, %vm77
    %vm81 = vmand %vm72, %vm77
    %vm82 = vmand %vm73, %vm77
    %vm83 = vmand %vm74, %vm77
    %vm84 = vmand %vm75, %vm77
    %vm85 = vmand %vm76, %vm77
    %vm86 = vcmp.lt.s32.totalorder %v52, 8
    %vm87 = vmand %vm78, %vm86
    %vm88 = vmand %vm79, %vm86
    %vm89 = vmand %vm80, %vm86
    %vm90 = vmand %vm81, %vm86
    %vm91 = vmand %vm82, %vm86
    %vm92 = vmand %vm83, %vm86
    %vm93 = vmand %vm84, %vm86
    %vm94 = vmand %vm85, %vm86
    %v95 = vsel %vm87, 1, 0
    %v96 = vsel %vm88, 1, 0
    %v97 = vsel %vm89, 1, 0
    %v98 = vsel %vm90, 1, 0
    %v99 = vsel %vm91, 1, 0
    %v100 = vsel %vm92, 1, 0
    %v101 = vsel %vm93, 1, 0
    %v102 = vsel %vm94, 1, 0
    %v103 = vcvt.s32.f32 %v95
    %v104 = vcvt.s32.f32 %v96
    %v105 = vcvt.s32.f32 %v97
    %v106 = vcvt.s32.f32 %v98
    %v107 = vcvt.s32.f32 %v99
    %v108 = vcvt.s32.f32 %v100
    %v109 = vcvt.s32.f32 %v101
    %v110 = vcvt.s32.f32 %v102
    %v111 = vadd.f32 %v103, 0.0
    %v112 = vadd.f32 %v104, 0.0
    %v113 = vadd.f32 %v105, 0.0
    %v114 = vadd.f32 %v106, 0.0
    %v115 = vadd.f32 %v107, 0.0
    %v116 = vadd.f32 %v108, 0.0
    %v117 = vadd.f32 %v109, 0.0
    %v118 = vadd.f32 %v110, 0.0
    %vm119 = vcmp.ge.s32.totalorder %v43, 16
    %vm120 = vcmp.ge.s32.totalorder %v44, 16
    %vm121 = vcmp.ge.s32.totalorder %v45, 16
    %vm122 = vcmp.ge.s32.totalorder %v46, 16
    %vm123 = vcmp.ge.s32.totalorder %v47, 16
    %vm124 = vcmp.ge.s32.totalorder %v48, 16
    %vm125 = vcmp.ge.s32.totalorder %v49, 16
    %vm126 = vcmp.ge.s32.totalorder %v50, 16
    %vm127 = vcmp.lt.s32.totalorder %v43, 32
    %vm128 = vcmp.lt.s32.totalorder %v44, 32
    %vm129 = vcmp.lt.s32.totalorder %v45, 32
    %vm130 = vcmp.lt.s32.totalorder %v46, 32
    %vm131 = vcmp.lt.s32.totalorder %v47, 32
    %vm132 = vcmp.lt.s32.totalorder %v48, 32
    %vm133 = vcmp.lt.s32.totalorder %v49, 32
    %vm134 = vcmp.lt.s32.totalorder %v50, 32
    %vm135 = vmand %vm119, %vm127
    %vm136 = vmand %vm120, %vm128
    %vm137 = vmand %vm121, %vm129
    %vm138 = vmand %vm122, %vm130
    %vm139 = vmand %vm123, %vm131
    %vm140 = vmand %vm124, %vm132
    %vm141 = vmand %vm125, %vm133
    %vm142 = vmand %vm126, %vm134
    %vm143 = vcmp.ge.s32.totalorder %v52, 8
    %vm144 = vmand %vm135, %vm143
    %vm145 = vmand %vm136, %vm143
    %vm146 = vmand %vm137, %vm143
    %vm147 = vmand %vm138, %vm143
    %vm148 = vmand %vm139, %vm143
    %vm149 = vmand %vm140, %vm143
    %vm150 = vmand %vm141, %vm143
    %vm151 = vmand %vm142, %vm143
    %vm152 = vcmp.lt.s32.totalorder %v52, 16
    %vm153 = vmand %vm144, %vm152
    %vm154 = vmand %vm145, %vm152
    %vm155 = vmand %vm146, %vm152
    %vm156 = vmand %vm147, %vm152
    %vm157 = vmand %vm148, %vm152
    %vm158 = vmand %vm149, %vm152
    %vm159 = vmand %vm150, %vm152
    %vm160 = vmand %vm151, %vm152
    %v161 = vsel %vm153, 1, 0
    %v162 = vsel %vm154, 1, 0
    %v163 = vsel %vm155, 1, 0
    %v164 = vsel %vm156, 1, 0
    %v165 = vsel %vm157, 1, 0
    %v166 = vsel %vm158, 1, 0
    %v167 = vsel %vm159, 1, 0
    %v168 = vsel %vm160, 1, 0
    %v169 = vcvt.s32.f32 %v161
    %v170 = vcvt.s32.f32 %v162
    %v171 = vcvt.s32.f32 %v163
    %v172 = vcvt.s32.f32 %v164
    %v173 = vcvt.s32.f32 %v165
    %v174 = vcvt.s32.f32 %v166
    %v175 = vcvt.s32.f32 %v167
    %v176 = vcvt.s32.f32 %v168
    %v177 = vadd.f32 %v111, %v169
    %v178 = vadd.f32 %v112, %v170
    %v179 = vadd.f32 %v113, %v171
    %v180 = vadd.f32 %v114, %v172
    %v181 = vadd.f32 %v115, %v173
    %v182 = vadd.f32 %v116, %v174
    %v183 = vadd.f32 %v117, %v175
    %v184 = vadd.f32 %v118, %v176
    %vm185 = vcmp.ge.s32.totalorder %v43, 32
    %vm186 = vcmp.ge.s32.totalorder %v44, 32
    %vm187 = vcmp.ge.s32.totalorder %v45, 32
    %vm188 = vcmp.ge.s32.totalorder %v46, 32
    %vm189 = vcmp.ge.s32.totalorder %v47, 32
    %vm190 = vcmp.ge.s32.totalorder %v48, 32
    %vm191 = vcmp.ge.s32.totalorder %v49, 32
    %vm192 = vcmp.ge.s32.totalorder %v50, 32
    %vm193 = vcmp.lt.s32.totalorder %v43, 48
    %vm194 = vcmp.lt.s32.totalorder %v44, 48
    %vm195 = vcmp.lt.s32.totalorder %v45, 48
    %vm196 = vcmp.lt.s32.totalorder %v46, 48
    %vm197 = vcmp.lt.s32.totalorder %v47, 48
    %vm198 = vcmp.lt.s32.totalorder %v48, 48
    %vm199 = vcmp.lt.s32.totalorder %v49, 48
    %vm200 = vcmp.lt.s32.totalorder %v50, 48
    %vm201 = vmand %vm185, %vm193
    %vm202 = vmand %vm186, %vm194
    %vm203 = vmand %vm187, %vm195
    %vm204 = vmand %vm188, %vm196
    %vm205 = vmand %vm189, %vm197
    %vm206 = vmand %vm190, %vm198
    %vm207 = vmand %vm191, %vm199
    %vm208 = vmand %vm192, %vm200
    %vm209 = vcmp.ge.s32.totalorder %v52, 16
    %vm210 = vmand %vm201, %vm209
    %vm211 = vmand %vm202, %vm209
    %vm212 = vmand %vm203, %vm209
    %vm213 = vmand %vm204, %vm209
    %vm214 = vmand %vm205, %vm209
    %vm215 = vmand %vm206, %vm209
    %vm216 = vmand %vm207, %vm209
    %vm217 = vmand %vm208, %vm209
    %vm218 = vcmp.lt.s32.totalorder %v52, 24
    %vm219 = vmand %vm210, %vm218
    %vm220 = vmand %vm211, %vm218
    %vm221 = vmand %vm212, %vm218
    %vm222 = vmand %vm213, %vm218
    %vm223 = vmand %vm214, %vm218
    %vm224 = vmand %vm215, %vm218
    %vm225 = vmand %vm216, %vm218
    %vm226 = vmand %vm217, %vm218
    %v227 = vsel %vm219, 1, 0
    %v228 = vsel %vm220, 1, 0
    %v229 = vsel %vm221, 1, 0
    %v230 = vsel %vm222, 1, 0
    %v231 = vsel %vm223, 1, 0
    %v232 = vsel %vm224, 1, 0
    %v233 = vsel %vm225, 1, 0
    %v234 = vsel %vm226, 1, 0
    %v235 = vcvt.s32.f32 %v227
    %v236 = vcvt.s32.f32 %v228
    %v237 = vcvt.s32.f32 %v229
    %v238 = vcvt.s32.f32 %v230
    %v239 = vcvt.s32.f32 %v231
    %v240 = vcvt.s32.f32 %v232
    %v241 = vcvt.s32.f32 %v233
    %v242 = vcvt.s32.f32 %v234
    %v243 = vadd.f32 %v177, %v235
    %v244 = vadd.f32 %v178, %v236
    %v245 = vadd.f32 %v179, %v237
    %v246 = vadd.f32 %v180, %v238
    %v247 = vadd.f32 %v181, %v239
    %v248 = vadd.f32 %v182, %v240
    %v249 = vadd.f32 %v183, %v241
    %v250 = vadd.f32 %v184, %v242
    %vm251 = vcmp.ge.s32.totalorder %v43, 48
    %vm252 = vcmp.ge.s32.totalorder %v44, 48
    %vm253 = vcmp.ge.s32.totalorder %v45, 48
    %vm254 = vcmp.ge.s32.totalorder %v46, 48
    %vm255 = vcmp.ge.s32.totalorder %v47, 48
    %vm256 = vcmp.ge.s32.totalorder %v48, 48
    %vm257 = vcmp.ge.s32.totalorder %v49, 48
    %vm258 = vcmp.ge.s32.totalorder %v50, 48
    %vm259 = vcmp.lt.s32.totalorder %v43, 64
    %vm260 = vcmp.lt.s32.totalorder %v44, 64
    %vm261 = vcmp.lt.s32.totalorder %v45, 64
    %vm262 = vcmp.lt.s32.totalorder %v46, 64
    %vm263 = vcmp.lt.s32.totalorder %v47, 64
    %vm264 = vcmp.lt.s32.totalorder %v48, 64
    %vm265 = vcmp.lt.s32.totalorder %v49, 64
    %vm266 = vcmp.lt.s32.totalorder %v50, 64
    %vm267 = vmand %vm251, %vm259
    %vm268 = vmand %vm252, %vm260
    %vm269 = vmand %vm253, %vm261
    %vm270 = vmand %vm254, %vm262
    %vm271 = vmand %vm255, %vm263
    %vm272 = vmand %vm256, %vm264
    %vm273 = vmand %vm257, %vm265
    %vm274 = vmand %vm258, %vm266
    %vm275 = vcmp.ge.s32.totalorder %v52, 24
    %vm276 = vmand %vm267, %vm275
    %vm277 = vmand %vm268, %vm275
    %vm278 = vmand %vm269, %vm275
    %vm279 = vmand %vm270, %vm275
    %vm280 = vmand %vm271, %vm275
    %vm281 = vmand %vm272, %vm275
    %vm282 = vmand %vm273, %vm275
    %vm283 = vmand %vm274, %vm275
    %vm284 = vcmp.lt.s32.totalorder %v52, 32
    %vm285 = vmand %vm276, %vm284
    %vm286 = vmand %vm277, %vm284
    %vm287 = vmand %vm278, %vm284
    %vm288 = vmand %vm279, %vm284
    %vm289 = vmand %vm280, %vm284
    %vm290 = vmand %vm281, %vm284
    %vm291 = vmand %vm282, %vm284
    %vm292 = vmand %vm283, %vm284
    %v293 = vsel %vm285, 1, 0
    %v294 = vsel %vm286, 1, 0
    %v295 = vsel %vm287, 1, 0
    %v296 = vsel %vm288, 1, 0
    %v297 = vsel %vm289, 1, 0
    %v298 = vsel %vm290, 1, 0
    %v299 = vsel %vm291, 1, 0
    %v300 = vsel %vm292, 1, 0
    %v301 = vcvt.s32.f32 %v293
    %v302 = vcvt.s32.f32 %v294
    %v303 = vcvt.s32.f32 %v295
    %v304 = vcvt.s32.f32 %v296
    %v305 = vcvt.s32.f32 %v297
    %v306 = vcvt.s32.f32 %v298
    %v307 = vcvt.s32.f32 %v299
    %v308 = vcvt.s32.f32 %v300
    %v309 = vadd.f32 %v243, %v301
    %v310 = vadd.f32 %v244, %v302
    %v311 = vadd.f32 %v245, %v303
    %v312 = vadd.f32 %v246, %v304
    %v313 = vadd.f32 %v247, %v305
    %v314 = vadd.f32 %v248, %v306
    %v315 = vadd.f32 %v249, %v307
    %v316 = vadd.f32 %v250, %v308
    %v317 = vadd.s32 %v43, 64
    %v318 = vadd.s32 %v43, 72
    %vm319 = vcmp.ge.s32.totalorder %v317, 0
    %vm320 = vcmp.ge.s32.totalorder %v318, 0
    %vm321 = vcmp.lt.s32.totalorder %v43, 20
    %vm322 = vcmp.lt.s32.totalorder %v44, 20
    %vm323 = vcmp.lt.s32.totalorder %v45, 20
    %vm324 = vcmp.lt.s32.totalorder %v46, 20
    %vm325 = vcmp.lt.s32.totalorder %v47, 20
    %vm326 = vcmp.lt.s32.totalorder %v48, 20
    %vm327 = vcmp.lt.s32.totalorder %v49, 20
    %vm328 = vcmp.lt.s32.totalorder %v50, 20
    %vm329 = vcmp.lt.s32.totalorder %v317, 20
    %vm330 = vcmp.lt.s32.totalorder %v318, 20
    %vm331 = vmand %vm53, %vm321
    %vm332 = vmand %vm54, %vm322
    %vm333 = vmand %vm55, %vm323
    %vm334 = vmand %vm56, %vm324
    %vm335 = vmand %vm57, %vm325
    %vm336 = vmand %vm58, %vm326
    %vm337 = vmand %vm59, %vm327
    %vm338 = vmand %vm60, %vm328
    %vm339 = vmand %vm319, %vm329
    %vm340 = vmand %vm320, %vm330
    %vm341 = vmand %vm331, %vm77
    %vm342 = vmand %vm332, %vm77
    %vm343 = vmand %vm333, %vm77
    %vm344 = vmand %vm334, %vm77
    %vm345 = vmand %vm335, %vm77
    %vm346 = vmand %vm336, %vm77
    %vm347 = vmand %vm337, %vm77
    %vm348 = vmand %vm338, %vm77
    %vm349 = vmand %vm339, %vm77
    %vm350 = vmand %vm340, %vm77
    %vm351 = vmand %vm341, %vm86
    %vm352 = vmand %vm342, %vm86
    %vm353 = vmand %vm343, %vm86
    %vm354 = vmand %vm344, %vm86
    %vm355 = vmand %vm345, %vm86
    %vm356 = vmand %vm346, %vm86
    %vm357 = vmand %vm347, %vm86
    %vm358 = vmand %vm348, %vm86
    %vm359 = vmand %vm349, %vm86
    %vm360 = vmand %vm350, %vm86
    %v361 = vsel %vm351, 1, 0
    %v362 = vsel %vm352, 1, 0
    %v363 = vsel %vm353, 1, 0
    %v364 = vsel %vm354, 1, 0
    %v365 = vsel %vm355, 1, 0
    %v366 = vsel %vm356, 1, 0
    %v367 = vsel %vm357, 1, 0
    %v368 = vsel %vm358, 1, 0
    %v369 = vsel %vm359, 1, 0
    %v370 = vsel %vm360, 1, 0
    %v371 = vcvt.s32.f32 %v361
    %v372 = vcvt.s32.f32 %v362
    %v373 = vcvt.s32.f32 %v363
    %v374 = vcvt.s32.f32 %v364
    %v375 = vcvt.s32.f32 %v365
    %v376 = vcvt.s32.f32 %v366
    %v377 = vcvt.s32.f32 %v367
    %v378 = vcvt.s32.f32 %v368
    %v379 = vcvt.s32.f32 %v369
    %v380 = vcvt.s32.f32 %v370
    %v381 = vadd.f32 %v371, 0.0
    %v382 = vadd.f32 %v372, 0.0
    %v383 = vadd.f32 %v373, 0.0
    %v384 = vadd.f32 %v374, 0.0
    %v385 = vadd.f32 %v375, 0.0
    %v386 = vadd.f32 %v376, 0.0
    %v387 = vadd.f32 %v377, 0.0
    %v388 = vadd.f32 %v378, 0.0
    %v389 = vadd.f32 %v379, 0.0
    %v390 = vadd.f32 %v380, 0.0
    %vm391 = vcmp.ge.s32.totalorder %v43, 20
    %vm392 = vcmp.ge.s32.totalorder %v44, 20
    %vm393 = vcmp.ge.s32.totalorder %v45, 20
    %vm394 = vcmp.ge.s32.totalorder %v46, 20
    %vm395 = vcmp.ge.s32.totalorder %v47, 20
    %vm396 = vcmp.ge.s32.totalorder %v48, 20
    %vm397 = vcmp.ge.s32.totalorder %v49, 20
    %vm398 = vcmp.ge.s32.totalorder %v50, 20
    %vm399 = vcmp.ge.s32.totalorder %v317, 20
    %vm400 = vcmp.ge.s32.totalorder %v318, 20
    %vm401 = vcmp.lt.s32.totalorder %v43, 40
    %vm402 = vcmp.lt.s32.totalorder %v44, 40
    %vm403 = vcmp.lt.s32.totalorder %v45, 40
    %vm404 = vcmp.lt.s32.totalorder %v46, 40
    %vm405 = vcmp.lt.s32.totalorder %v47, 40
    %vm406 = vcmp.lt.s32.totalorder %v48, 40
    %vm407 = vcmp.lt.s32.totalorder %v49, 40
    %vm408 = vcmp.lt.s32.totalorder %v50, 40
    %vm409 = vcmp.lt.s32.totalorder %v317, 40
    %vm410 = vcmp.lt.s32.totalorder %v318, 40
    %vm411 = vmand %vm391, %vm401
    %vm412 = vmand %vm392, %vm402
    %vm413 = vmand %vm393, %vm403
    %vm414 = vmand %vm394, %vm404
    %vm415 = vmand %vm395, %vm405
    %vm416 = vmand %vm396, %vm406
    %vm417 = vmand %vm397, %vm407
    %vm418 = vmand %vm398, %vm408
    %vm419 = vmand %vm399, %vm409
    %vm420 = vmand %vm400, %vm410
    %vm421 = vmand %vm411, %vm143
    %vm422 = vmand %vm412, %vm143
    %vm423 = vmand %vm413, %vm143
    %vm424 = vmand %vm414, %vm143
    %vm425 = vmand %vm415, %vm143
    %vm426 = vmand %vm416, %vm143
    %vm427 = vmand %vm417, %vm143
    %vm428 = vmand %vm418, %vm143
    %vm429 = vmand %vm419, %vm143
    %vm430 = vmand %vm420, %vm143
    %vm431 = vmand %vm421, %vm152
    %vm432 = vmand %vm422, %vm152
    %vm433 = vmand %vm423, %vm152
    %vm434 = vmand %vm424, %vm152
    %vm435 = vmand %vm425, %vm152
    %vm436 = vmand %vm426, %vm152
    %vm437 = vmand %vm427, %vm152
    %vm438 = vmand %vm428, %vm152
    %vm439 = vmand %vm429, %vm152
    %vm440 = vmand %vm430, %vm152
    %v441 = vsel %vm431, 1, 0
    %v442 = vsel %vm432, 1, 0
    %v443 = vsel %vm433, 1, 0
    %v444 = vsel %vm434, 1, 0
    %v445 = vsel %vm435, 1, 0
    %v446 = vsel %vm436, 1, 0
    %v447 = vsel %vm437, 1, 0
    %v448 = vsel %vm438, 1, 0
    %v449 = vsel %vm439, 1, 0
    %v450 = vsel %vm440, 1, 0
    %v451 = vcvt.s32.f32 %v441
    %v452 = vcvt.s32.f32 %v442
    %v453 = vcvt.s32.f32 %v443
    %v454 = vcvt.s32.f32 %v444
    %v455 = vcvt.s32.f32 %v445
    %v456 = vcvt.s32.f32 %v446
    %v457 = vcvt.s32.f32 %v447
    %v458 = vcvt.s32.f32 %v448
    %v459 = vcvt.s32.f32 %v449
    %v460 = vcvt.s32.f32 %v450
    %v461 = vadd.f32 %v381, %v451
    %v462 = vadd.f32 %v382, %v452
    %v463 = vadd.f32 %v383, %v453
    %v464 = vadd.f32 %v384, %v454
    %v465 = vadd.f32 %v385, %v455
    %v466 = vadd.f32 %v386, %v456
    %v467 = vadd.f32 %v387, %v457
    %v468 = vadd.f32 %v388, %v458
    %v469 = vadd.f32 %v389, %v459
    %v470 = vadd.f32 %v390, %v460
    %vm471 = vcmp.ge.s32.totalorder %v43, 40
    %vm472 = vcmp.ge.s32.totalorder %v44, 40
    %vm473 = vcmp.ge.s32.totalorder %v45, 40
    %vm474 = vcmp.ge.s32.totalorder %v46, 40
    %vm475 = vcmp.ge.s32.totalorder %v47, 40
    %vm476 = vcmp.ge.s32.totalorder %v48, 40
    %vm477 = vcmp.ge.s32.totalorder %v49, 40
    %vm478 = vcmp.ge.s32.totalorder %v50, 40
    %vm479 = vcmp.ge.s32.totalorder %v317, 40
    %vm480 = vcmp.ge.s32.totalorder %v318, 40
    %vm481 = vcmp.lt.s32.totalorder %v43, 60
    %vm482 = vcmp.lt.s32.totalorder %v44, 60
    %vm483 = vcmp.lt.s32.totalorder %v45, 60
    %vm484 = vcmp.lt.s32.totalorder %v46, 60
    %vm485 = vcmp.lt.s32.totalorder %v47, 60
    %vm486 = vcmp.lt.s32.totalorder %v48, 60
    %vm487 = vcmp.lt.s32.totalorder %v49, 60
    %vm488 = vcmp.lt.s32.totalorder %v50, 60
    %vm489 = vcmp.lt.s32.totalorder %v317, 60
    %vm490 = vcmp.lt.s32.totalorder %v318, 60
    %vm491 = vmand %vm471, %vm481
    %vm492 = vmand %vm472, %vm482
    %vm493 = vmand %vm473, %vm483
    %vm494 = vmand %vm474, %vm484
    %vm495 = vmand %vm475, %vm485
    %vm496 = vmand %vm476, %vm486
    %vm497 = vmand %vm477, %vm487
    %vm498 = vmand %vm478, %vm488
    %vm499 = vmand %vm479, %vm489
    %vm500 = vmand %vm480, %vm490
    %vm501 = vmand %vm491, %vm209
    %vm502 = vmand %vm492, %vm209
    %vm503 = vmand %vm493, %vm209
    %vm504 = vmand %vm494, %vm209
    %vm505 = vmand %vm495, %vm209
    %vm506 = vmand %vm496, %vm209
    %vm507 = vmand %vm497, %vm209
    %vm508 = vmand %vm498, %vm209
    %vm509 = vmand %vm499, %vm209
    %vm510 = vmand %vm500, %vm209
    %vm511 = vmand %vm501, %vm218
    %vm512 = vmand %vm502, %vm218
    %vm513 = vmand %vm503, %vm218
    %vm514 = vmand %vm504, %vm218
    %vm515 = vmand %vm505, %vm218
    %vm516 = vmand %vm506, %vm218
    %vm517 = vmand %vm507, %vm218
    %vm518 = vmand %vm508, %vm218
    %vm519 = vmand %vm509, %vm218
    %vm520 = vmand %vm510, %vm218
    %v521 = vsel %vm511, 1, 0
    %v522 = vsel %vm512, 1, 0
    %v523 = vsel %vm513, 1, 0
    %v524 = vsel %vm514, 1, 0
    %v525 = vsel %vm515, 1, 0
    %v526 = vsel %vm516, 1, 0
    %v527 = vsel %vm517, 1, 0
    %v528 = vsel %vm518, 1, 0
    %v529 = vsel %vm519, 1, 0
    %v530 = vsel %vm520, 1, 0
    %v531 = vcvt.s32.f32 %v521
    %v532 = vcvt.s32.f32 %v522
    %v533 = vcvt.s32.f32 %v523
    %v534 = vcvt.s32.f32 %v524
    %v535 = vcvt.s32.f32 %v525
    %v536 = vcvt.s32.f32 %v526
    %v537 = vcvt.s32.f32 %v527
    %v538 = vcvt.s32.f32 %v528
    %v539 = vcvt.s32.f32 %v529
    %v540 = vcvt.s32.f32 %v530
    %v541 = vadd.f32 %v461, %v531
    %v542 = vadd.f32 %v462, %v532
    %v543 = vadd.f32 %v463, %v533
    %v544 = vadd.f32 %v464, %v534
    %v545 = vadd.f32 %v465, %v535
    %v546 = vadd.f32 %v466, %v536
    %v547 = vadd.f32 %v467, %v537
    %v548 = vadd.f32 %v468, %v538
    %v549 = vadd.f32 %v469, %v539
    %v550 = vadd.f32 %v470, %v540
    %vm551 = vcmp.ge.s32.totalorder %v43, 60
    %vm552 = vcmp.ge.s32.totalorder %v44, 60
    %vm553 = vcmp.ge.s32.totalorder %v45, 60
    %vm554 = vcmp.ge.s32.totalorder %v46, 60
    %vm555 = vcmp.ge.s32.totalorder %v47, 60
    %vm556 = vcmp.ge.s32.totalorder %v48, 60
    %vm557 = vcmp.ge.s32.totalorder %v49, 60
    %vm558 = vcmp.ge.s32.totalorder %v50, 60
    %vm559 = vcmp.ge.s32.totalorder %v317, 60
    %vm560 = vcmp.ge.s32.totalorder %v318, 60
    %vm561 = vcmp.lt.s32.totalorder %v43, 80
    %vm562 = vcmp.lt.s32.totalorder %v44, 80
    %vm563 = vcmp.lt.s32.totalorder %v45, 80
    %vm564 = vcmp.lt.s32.totalorder %v46, 80
    %vm565 = vcmp.lt.s32.totalorder %v47, 80
    %vm566 = vcmp.lt.s32.totalorder %v48, 80
    %vm567 = vcmp.lt.s32.totalorder %v49, 80
    %vm568 = vcmp.lt.s32.totalorder %v50, 80
    %vm569 = vcmp.lt.s32.totalorder %v317, 80
    %vm570 = vcmp.lt.s32.totalorder %v318, 80
    %vm571 = vmand %vm551, %vm561
    %vm572 = vmand %vm552, %vm562
    %vm573 = vmand %vm553, %vm563
    %vm574 = vmand %vm554, %vm564
    %vm575 = vmand %vm555, %vm565
    %vm576 = vmand %vm556, %vm566
    %vm577 = vmand %vm557, %vm567
    %vm578 = vmand %vm558, %vm568
    %vm579 = vmand %vm559, %vm569
    %vm580 = vmand %vm560, %vm570
    %vm581 = vmand %vm571, %vm275
    %vm582 = vmand %vm572, %vm275
    %vm583 = vmand %vm573, %vm275
    %vm584 = vmand %vm574, %vm275
    %vm585 = vmand %vm575, %vm275
    %vm586 = vmand %vm576, %vm275
    %vm587 = vmand %vm577, %vm275
    %vm588 = vmand %vm578, %vm275
    %vm589 = vmand %vm579, %vm275
    %vm590 = vmand %vm580, %vm275
    %vm591 = vmand %vm581, %vm284
    %vm592 = vmand %vm582, %vm284
    %vm593 = vmand %vm583, %vm284
    %vm594 = vmand %vm584, %vm284
    %vm595 = vmand %vm585, %vm284
    %vm596 = vmand %vm586, %vm284
    %vm597 = vmand %vm587, %vm284
    %vm598 = vmand %vm588, %vm284
    %vm599 = vmand %vm589, %vm284
    %vm600 = vmand %vm590, %vm284
    %v601 = vsel %vm591, 1, 0
    %v602 = vsel %vm592, 1, 0
    %v603 = vsel %vm593, 1, 0
    %v604 = vsel %vm594, 1, 0
    %v605 = vsel %vm595, 1, 0
    %v606 = vsel %vm596, 1, 0
    %v607 = vsel %vm597, 1, 0
    %v608 = vsel %vm598, 1, 0
    %v609 = vsel %vm599, 1, 0
    %v610 = vsel %vm600, 1, 0
    %v611 = vcvt.s32.f32 %v601
    %v612 = vcvt.s32.f32 %v602
    %v613 = vcvt.s32.f32 %v603
    %v614 = vcvt.s32.f32 %v604
    %v615 = vcvt.s32.f32 %v605
    %v616 = vcvt.s32.f32 %v606
    %v617 = vcvt.s32.f32 %v607
    %v618 = vcvt.s32.f32 %v608
    %v619 = vcvt.s32.f32 %v609
    %v620 = vcvt.s32.f32 %v610
    %v621 = vadd.f32 %v541, %v611
    %v622 = vadd.f32 %v542, %v612
    %v623 = vadd.f32 %v543, %v613
    %v624 = vadd.f32 %v544, %v614
    %v625 = vadd.f32 %v545, %v615
    %v626 = vadd.f32 %v546, %v616
    %v627 = vadd.f32 %v547, %v617
    %v628 = vadd.f32 %v548, %v618
    %v629 = vadd.f32 %v549, %v619
    %v630 = vadd.f32 %v550, %v620
    %v631 = vadd.s32 %v43, 80
    %v632 = vadd.s32 %v43, 88
    %vm633 = vcmp.ge.s32.totalorder %v631, 0
    %vm634 = vcmp.ge.s32.totalorder %v632, 0
    %vm635 = vcmp.lt.s32.totalorder %v43, 24
    %vm636 = vcmp.lt.s32.totalorder %v44, 24
    %vm637 = vcmp.lt.s32.totalorder %v45, 24
    %vm638 = vcmp.lt.s32.totalorder %v46, 24
    %vm639 = vcmp.lt.s32.totalorder %v47, 24
    %vm640 = vcmp.lt.s32.totalorder %v48, 24
    %vm641 = vcmp.lt.s32.totalorder %v49, 24
    %vm642 = vcmp.lt.s32.totalorder %v50, 24
    %vm643 = vcmp.lt.s32.totalorder %v317, 24
    %vm644 = vcmp.lt.s32.totalorder %v318, 24
    %vm645 = vcmp.lt.s32.totalorder %v631, 24
    %vm646 = vcmp.lt.s32.totalorder %v632, 24
    %vm647 = vmand %vm53, %vm635
    %vm648 = vmand %vm54, %vm636
    %vm649 = vmand %vm55, %vm637
    %vm650 = vmand %vm56, %vm638
    %vm651 = vmand %vm57, %vm639
    %vm652 = vmand %vm58, %vm640
    %vm653 = vmand %vm59, %vm641
    %vm654 = vmand %vm60, %vm642
    %vm655 = vmand %vm319, %vm643
    %vm656 = vmand %vm320, %vm644
    %vm657 = vmand %vm633, %vm645
    %vm658 = vmand %vm634, %vm646
    %vm659 = vmand %vm647, %vm77
    %vm660 = vmand %vm648, %vm77
    %vm661 = vmand %vm649, %vm77
    %vm662 = vmand %vm650, %vm77
    %vm663 = vmand %vm651, %vm77
    %vm664 = vmand %vm652, %vm77
    %vm665 = vmand %vm653, %vm77
    %vm666 = vmand %vm654, %vm77
    %vm667 = vmand %vm655, %vm77
    %vm668 = vmand %vm656, %vm77
    %vm669 = vmand %vm657, %vm77
    %vm670 = vmand %vm658, %vm77
    %vm671 = vmand %vm659, %vm86
    %vm672 = vmand %vm660, %vm86
    %vm673 = vmand %vm661, %vm86
    %vm674 = vmand %vm662, %vm86
    %vm675 = vmand %vm663, %vm86
    %vm676 = vmand %vm664, %vm86
    %vm677 = vmand %vm665, %vm86
    %vm678 = vmand %vm666, %vm86
    %vm679 = vmand %vm667, %vm86
    %vm680 = vmand %vm668, %vm86
    %vm681 = vmand %vm669, %vm86
    %vm682 = vmand %vm670, %vm86
    %v683 = vsel %vm671, 1, 0
    %v684 = vsel %vm672, 1, 0
    %v685 = vsel %vm673, 1, 0
    %v686 = vsel %vm674, 1, 0
    %v687 = vsel %vm675, 1, 0
    %v688 = vsel %vm676, 1, 0
    %v689 = vsel %vm677, 1, 0
    %v690 = vsel %vm678, 1, 0
    %v691 = vsel %vm679, 1, 0
    %v692 = vsel %vm680, 1, 0
    %v693 = vsel %vm681, 1, 0
    %v694 = vsel %vm682, 1, 0
    %v695 = vcvt.s32.f32 %v683
    %v696 = vcvt.s32.f32 %v684
    %v697 = vcvt.s32.f32 %v685
    %v698 = vcvt.s32.f32 %v686
    %v699 = vcvt.s32.f32 %v687
    %v700 = vcvt.s32.f32 %v688
    %v701 = vcvt.s32.f32 %v689
    %v702 = vcvt.s32.f32 %v690
    %v703 = vcvt.s32.f32 %v691
    %v704 = vcvt.s32.f32 %v692
    %v705 = vcvt.s32.f32 %v693
    %v706 = vcvt.s32.f32 %v694
    %v707 = vadd.f32 %v695, 0.0
    %v708 = vadd.f32 %v696, 0.0
    %v709 = vadd.f32 %v697, 0.0
    %v710 = vadd.f32 %v698, 0.0
    %v711 = vadd.f32 %v699, 0.0
    %v712 = vadd.f32 %v700, 0.0
    %v713 = vadd.f32 %v701, 0.0
    %v714 = vadd.f32 %v702, 0.0
    %v715 = vadd.f32 %v703, 0.0
    %v716 = vadd.f32 %v704, 0.0
    %v717 = vadd.f32 %v705, 0.0
    %v718 = vadd.f32 %v706, 0.0
    %vm719 = vcmp.ge.s32.totalorder %v43, 24
    %vm720 = vcmp.ge.s32.totalorder %v44, 24
    %vm721 = vcmp.ge.s32.totalorder %v45, 24
    %vm722 = vcmp.ge.s32.totalorder %v46, 24
    %vm723 = vcmp.ge.s32.totalorder %v47, 24
    %vm724 = vcmp.ge.s32.totalorder %v48, 24
    %vm725 = vcmp.ge.s32.totalorder %v49, 24
    %vm726 = vcmp.ge.s32.totalorder %v50, 24
    %vm727 = vcmp.ge.s32.totalorder %v317, 24
    %vm728 = vcmp.ge.s32.totalorder %v318, 24
    %vm729 = vcmp.ge.s32.totalorder %v631, 24
    %vm730 = vcmp.ge.s32.totalorder %v632, 24
    %vm731 = vcmp.lt.s32.totalorder %v317, 48
    %vm732 = vcmp.lt.s32.totalorder %v318, 48
    %vm733 = vcmp.lt.s32.totalorder %v631, 48
    %vm734 = vcmp.lt.s32.totalorder %v632, 48
    %vm735 = vmand %vm719, %vm193
    %vm736 = vmand %vm720, %vm194
    %vm737 = vmand %vm721, %vm195
    %vm738 = vmand %vm722, %vm196
    %vm739 = vmand %vm723, %vm197
    %vm740 = vmand %vm724, %vm198
    %vm741 = vmand %vm725, %vm199
    %vm742 = vmand %vm726, %vm200
    %vm743 = vmand %vm727, %vm731
    %vm744 = vmand %vm728, %vm732
    %vm745 = vmand %vm729, %vm733
    %vm746 = vmand %vm730, %vm734
    %vm747 = vmand %vm735, %vm143
    %vm748 = vmand %vm736, %vm143
    %vm749 = vmand %vm737, %vm143
    %vm750 = vmand %vm738, %vm143
    %vm751 = vmand %vm739, %vm143
    %vm752 = vmand %vm740, %vm143
    %vm753 = vmand %vm741, %vm143
    %vm754 = vmand %vm742, %vm143
    %vm755 = vmand %vm743, %vm143
    %vm756 = vmand %vm744, %vm143
    %vm757 = vmand %vm745, %vm143
    %vm758 = vmand %vm746, %vm143
    %vm759 = vmand %vm747, %vm152
    %vm760 = vmand %vm748, %vm152
    %vm761 = vmand %vm749, %vm152
    %vm762 = vmand %vm750, %vm152
    %vm763 = vmand %vm751, %vm152
    %vm764 = vmand %vm752, %vm152
    %vm765 = vmand %vm753, %vm152
    %vm766 = vmand %vm754, %vm152
    %vm767 = vmand %vm755, %vm152
    %vm768 = vmand %vm756, %vm152
    %vm769 = vmand %vm757, %vm152
    %vm770 = vmand %vm758, %vm152
    %v771 = vsel %vm759, 1, 0
    %v772 = vsel %vm760, 1, 0
    %v773 = vsel %vm761, 1, 0
    %v774 = vsel %vm762, 1, 0
    %v775 = vsel %vm763, 1, 0
    %v776 = vsel %vm764, 1, 0
    %v777 = vsel %vm765, 1, 0
    %v778 = vsel %vm766, 1, 0
    %v779 = vsel %vm767, 1, 0
    %v780 = vsel %vm768, 1, 0
    %v781 = vsel %vm769, 1, 0
    %v782 = vsel %vm770, 1, 0
    %v783 = vcvt.s32.f32 %v771
    %v784 = vcvt.s32.f32 %v772
    %v785 = vcvt.s32.f32 %v773
    %v786 = vcvt.s32.f32 %v774
    %v787 = vcvt.s32.f32 %v775
    %v788 = vcvt.s32.f32 %v776
    %v789 = vcvt.s32.f32 %v777
    %v790 = vcvt.s32.f32 %v778
    %v791 = vcvt.s32.f32 %v779
    %v792 = vcvt.s32.f32 %v780
    %v793 = vcvt.s32.f32 %v781
    %v794 = vcvt.s32.f32 %v782
    %v795 = vadd.f32 %v707, %v783
    %v796 = vadd.f32 %v708, %v784
    %v797 = vadd.f32 %v709, %v785
    %v798 = vadd.f32 %v710, %v786
    %v799 = vadd.f32 %v711, %v787
    %v800 = vadd.f32 %v712, %v788
    %v801 = vadd.f32 %v713, %v789
    %v802 = vadd.f32 %v714, %v790
    %v803 = vadd.f32 %v715, %v791
    %v804 = vadd.f32 %v716, %v792
    %v805 = vadd.f32 %v717, %v793
    %v806 = vadd.f32 %v718, %v794
    %vm807 = vcmp.ge.s32.totalorder %v317, 48
    %vm808 = vcmp.ge.s32.totalorder %v318, 48
    %vm809 = vcmp.ge.s32.totalorder %v631, 48
    %vm810 = vcmp.ge.s32.totalorder %v632, 48
    %vm811 = vcmp.lt.s32.totalorder %v43, 72
    %vm812 = vcmp.lt.s32.totalorder %v44, 72
    %vm813 = vcmp.lt.s32.totalorder %v45, 72
    %vm814 = vcmp.lt.s32.totalorder %v46, 72
    %vm815 = vcmp.lt.s32.totalorder %v47, 72
    %vm816 = vcmp.lt.s32.totalorder %v48, 72
    %vm817 = vcmp.lt.s32.totalorder %v49, 72
    %vm818 = vcmp.lt.s32.totalorder %v50, 72
    %vm819 = vcmp.lt.s32.totalorder %v317, 72
    %vm820 = vcmp.lt.s32.totalorder %v318, 72
    %vm821 = vcmp.lt.s32.totalorder %v631, 72
    %vm822 = vcmp.lt.s32.totalorder %v632, 72
    %vm823 = vmand %vm251, %vm811
    %vm824 = vmand %vm252, %vm812
    %vm825 = vmand %vm253, %vm813
    %vm826 = vmand %vm254, %vm814
    %vm827 = vmand %vm255, %vm815
    %vm828 = vmand %vm256, %vm816
    %vm829 = vmand %vm257, %vm817
    %vm830 = vmand %vm258, %vm818
    %vm831 = vmand %vm807, %vm819
    %vm832 = vmand %vm808, %vm820
    %vm833 = vmand %vm809, %vm821
    %vm834 = vmand %vm810, %vm822
    %vm835 = vmand %vm823, %vm209
    %vm836 = vmand %vm824, %vm209
    %vm837 = vmand %vm825, %vm209
    %vm838 = vmand %vm826, %vm209
    %vm839 = vmand %vm827, %vm209
    %vm840 = vmand %vm828, %vm209
    %vm841 = vmand %vm829, %vm209
    %vm842 = vmand %vm830, %vm209
    %vm843 = vmand %vm831, %vm209
    %vm844 = vmand %vm832, %vm209
    %vm845 = vmand %vm833, %vm209
    %vm846 = vmand %vm834, %vm209
    %vm847 = vmand %vm835, %vm218
    %vm848 = vmand %vm836, %vm218
    %vm849 = vmand %vm837, %vm218
    %vm850 = vmand %vm838, %vm218
    %vm851 = vmand %vm839, %vm218
    %vm852 = vmand %vm840, %vm218
    %vm853 = vmand %vm841, %vm218
    %vm854 = vmand %vm842, %vm218
    %vm855 = vmand %vm843, %vm218
    %vm856 = vmand %vm844, %vm218
    %vm857 = vmand %vm845, %vm218
    %vm858 = vmand %vm846, %vm218
    %v859 = vsel %vm847, 1, 0
    %v860 = vsel %vm848, 1, 0
    %v861 = vsel %vm849, 1, 0
    %v862 = vsel %vm850, 1, 0
    %v863 = vsel %vm851, 1, 0
    %v864 = vsel %vm852, 1, 0
    %v865 = vsel %vm853, 1, 0
    %v866 = vsel %vm854, 1, 0
    %v867 = vsel %vm855, 1, 0
    %v868 = vsel %vm856, 1, 0
    %v869 = vsel %vm857, 1, 0
    %v870 = vsel %vm858, 1, 0
    %v871 = vcvt.s32.f32 %v859
    %v872 = vcvt.s32.f32 %v860
    %v873 = vcvt.s32.f32 %v861
    %v874 = vcvt.s32.f32 %v862
    %v875 = vcvt.s32.f32 %v863
    %v876 = vcvt.s32.f32 %v864
    %v877 = vcvt.s32.f32 %v865
    %v878 = vcvt.s32.f32 %v866
    %v879 = vcvt.s32.f32 %v867
    %v880 = vcvt.s32.f32 %v868
    %v881 = vcvt.s32.f32 %v869
    %v882 = vcvt.s32.f32 %v870
    %v883 = vadd.f32 %v795, %v871
    %v884 = vadd.f32 %v796, %v872
    %v885 = vadd.f32 %v797, %v873
    %v886 = vadd.f32 %v798, %v874
    %v887 = vadd.f32 %v799, %v875
    %v888 = vadd.f32 %v800, %v876
    %v889 = vadd.f32 %v801, %v877
    %v890 = vadd.f32 %v802, %v878
    %v891 = vadd.f32 %v803, %v879
    %v892 = vadd.f32 %v804, %v880
    %v893 = vadd.f32 %v805, %v881
    %v894 = vadd.f32 %v806, %v882
    %vm895 = vcmp.ge.s32.totalorder %v43, 72
    %vm896 = vcmp.ge.s32.totalorder %v44, 72
    %vm897 = vcmp.ge.s32.totalorder %v45, 72
    %vm898 = vcmp.ge.s32.totalorder %v46, 72
    %vm899 = vcmp.ge.s32.totalorder %v47, 72
    %vm900 = vcmp.ge.s32.totalorder %v48, 72
    %vm901 = vcmp.ge.s32.totalorder %v49, 72
    %vm902 = vcmp.ge.s32.totalorder %v50, 72
    %vm903 = vcmp.ge.s32.totalorder %v317, 72
    %vm904 = vcmp.ge.s32.totalorder %v318, 72
    %vm905 = vcmp.ge.s32.totalorder %v631, 72
    %vm906 = vcmp.ge.s32.totalorder %v632, 72
    %vm907 = vcmp.lt.s32.totalorder %v43, 96
    %vm908 = vcmp.lt.s32.totalorder %v44, 96
    %vm909 = vcmp.lt.s32.totalorder %v45, 96
    %vm910 = vcmp.lt.s32.totalorder %v46, 96
    %vm911 = vcmp.lt.s32.totalorder %v47, 96
    %vm912 = vcmp.lt.s32.totalorder %v48, 96
    %vm913 = vcmp.lt.s32.totalorder %v49, 96
    %vm914 = vcmp.lt.s32.totalorder %v50, 96
    %vm915 = vcmp.lt.s32.totalorder %v317, 96
    %vm916 = vcmp.lt.s32.totalorder %v318, 96
    %vm917 = vcmp.lt.s32.totalorder %v631, 96
    %vm918 = vcmp.lt.s32.totalorder %v632, 96
    %vm919 = vmand %vm895, %vm907
    %vm920 = vmand %vm896, %vm908
    %vm921 = vmand %vm897, %vm909
    %vm922 = vmand %vm898, %vm910
    %vm923 = vmand %vm899, %vm911
    %vm924 = vmand %vm900, %vm912
    %vm925 = vmand %vm901, %vm913
    %vm926 = vmand %vm902, %vm914
    %vm927 = vmand %vm903, %vm915
    %vm928 = vmand %vm904, %vm916
    %vm929 = vmand %vm905, %vm917
    %vm930 = vmand %vm906, %vm918
    %vm931 = vmand %vm919, %vm275
    %vm932 = vmand %vm920, %vm275
    %vm933 = vmand %vm921, %vm275
    %vm934 = vmand %vm922, %vm275
    %vm935 = vmand %vm923, %vm275
    %vm936 = vmand %vm924, %vm275
    %vm937 = vmand %vm925, %vm275
    %vm938 = vmand %vm926, %vm275
    %vm939 = vmand %vm927, %vm275
    %vm940 = vmand %vm928, %vm275
    %vm941 = vmand %vm929, %vm275
    %vm942 = vmand %vm930, %vm275
    %vm943 = vmand %vm931, %vm284
    %vm944 = vmand %vm932, %vm284
    %vm945 = vmand %vm933, %vm284
    %vm946 = vmand %vm934, %vm284
    %vm947 = vmand %vm935, %vm284
    %vm948 = vmand %vm936, %vm284
    %vm949 = vmand %vm937, %vm284
    %vm950 = vmand %vm938, %vm284
    %vm951 = vmand %vm939, %vm284
    %vm952 = vmand %vm940, %vm284
    %vm953 = vmand %vm941, %vm284
    %vm954 = vmand %vm942, %vm284
    %v955 = vsel %vm943, 1, 0
    %v956 = vsel %vm944, 1, 0
    %v957 = vsel %vm945, 1, 0
    %v958 = vsel %vm946, 1, 0
    %v959 = vsel %vm947, 1, 0
    %v960 = vsel %vm948, 1, 0
    %v961 = vsel %vm949, 1, 0
    %v962 = vsel %vm950, 1, 0
    %v963 = vsel %vm951, 1, 0
    %v964 = vsel %vm952, 1, 0
    %v965 = vsel %vm953, 1, 0
    %v966 = vsel %vm954, 1, 0
    %v967 = vcvt.s32.f32 %v955
    %v968 = vcvt.s32.f32 %v956
    %v969 = vcvt.s32.f32 %v957
    %v970 = vcvt.s32.f32 %v958
    %v971 = vcvt.s32.f32 %v959
    %v972 = vcvt.s32.f32 %v960
    %v973 = vcvt.s32.f32 %v961
    %v974 = vcvt.s32.f32 %v962
    %v975 = vcvt.s32.f32 %v963
    %v976 = vcvt.s32.f32 %v964
    %v977 = vcvt.s32.f32 %v965
    %v978 = vcvt.s32.f32 %v966
    %v979 = vadd.f32 %v883, %v967
    %v980 = vadd.f32 %v884, %v968
    %v981 = vadd.f32 %v885, %v969
    %v982 = vadd.f32 %v886, %v970
    %v983 = vadd.f32 %v887, %v971
    %v984 = vadd.f32 %v888, %v972
    %v985 = vadd.f32 %v889, %v973
    %v986 = vadd.f32 %v890, %v974
    %v987 = vadd.f32 %v891, %v975
    %v988 = vadd.f32 %v892, %v976
    %v989 = vadd.f32 %v893, %v977
    %v990 = vadd.f32 %v894, %v978
    %vm991 = vcmp.lt.s32.totalorder %v43, 0
    %v992 = vsub.s32 0, %v43
    %v993 = vsel %vm991, %v992, %v43
    %v994 = vshrl.u32 %v993, 1
    %v995 = vand.u32 %v993, 1
    %v996 = vsub.s32 0, %v995
    %v997 = vsel %vm991, %v996, %v995
    %vm998 = vcmp.lt.s32.totalorder %v44, 0
    %v999 = vsub.s32 0, %v44
    %v1000 = vsel %vm998, %v999, %v44
    %v1001 = vshrl.u32 %v1000, 1
    %v1002 = vand.u32 %v1000, 1
    %v1003 = vsub.s32 0, %v1002
    %v1004 = vsel %vm998, %v1003, %v1002
    %vm1005 = vcmp.ne.s32.totalorder %v997, 0
    %vm1006 = vcmp.ne.s32.totalorder %v1004, 0
    %vm1007 = vcmp.lt.s32.totalorder %v997, 0
    %vm1008 = vcmp.lt.s32.totalorder %v1004, 0
    %vm1009 = vmand %vm1007, %vm1005
    %vm1010 = vmand %vm1008, %vm1006
    %v1011 = vadd.s32 %v997, 2
    %v1012 = vadd.s32 %v1004, 2
    %v1013 = vsel %vm1009, %v1011, %v997
    %v1014 = vsel %vm1010, %v1012, %v1004
    %vm1015 = vcmp.lt.s32.totalorder %v52, 0
    %v1016 = vsub.s32 0, %v52
    %v1017 = vsel %vm1015, %v1016, %v52
    %v1018 = vshrl.u32 %v1017, 1
    %v1019 = vand.u32 %v1017, 1
    %v1020 = vsub.s32 0, %v1019
    %v1021 = vsel %vm1015, %v1020, %v1019
    %vm1022 = vcmp.ne.s32.totalorder %v1021, 0
    %vm1023 = vcmp.lt.s32.totalorder %v1021, 0
    %vm1024 = vmand %vm1023, %vm1022
    %v1025 = vadd.s32 %v1021, 2
    %v1026 = vsel %vm1024, %v1025, %v1021
    %vm1027 = vcmp.eq.s32.totalorder %v1013, %v1026
    %vm1028 = vcmp.eq.s32.totalorder %v1014, %v1026
    %v1029 = vsel %vm1027, 1, 0
    %v1030 = vsel %vm1028, 1, 0
    %v1031 = vcvt.s32.f32 %v1029
    %v1032 = vcvt.s32.f32 %v1030
    %v1033 = vld [vmem:[#allocation2 + $0x78] sm:$0xff]
    %v1034 = vld [vmem:[#allocation2 + $0x80] sm:$0xff]
    %v1035 = vld [vmem:[#allocation2 + $0x88] sm:$0xff]
    %v1036 = vld [vmem:[#allocation2 + $0x90] sm:$0xff]
    %v1037 = vld [vmem:[#allocation2 + $0x98] sm:$0x1]
    %v1038 = vlaneseq
    %v1039 = vshrl.u32 %v1038, 7
    %v1040 = vsub.s32 0, %v1039
    %v1041 = vrot.slane %v1037, %v1040
    %vm1042 = vcmask 261120
    %v1044 = vsel %vm1042, %v34, 0
    %v1047 = vsel %vm1042, %v35, 0
    %v1050 = vsel %vm1042, %v36, 0
    %1052 = vmatprep.subr.mxu0 0.0
    %1053 = vmatpush1.msra.mxu0 %v1033
    %1054 = vmatprep.subr.mxu0 0.0
    %1055 = vmatpush1.msra.mxu0 %v1034
    %1056 = vmatprep.subr.mxu0 0.0
    %1057 = vmatpush1.msra.mxu0 %v1035
    %1058 = vmatprep.subr.mxu0 0.0
    %1059 = vmatpush1.msra.mxu0 %v1036
    %1060 = vmatprep.subr.mxu0 0.0
    %1061 = vmatpush1.msra.mxu0 0.0
    %1062 = vmatprep.subr.mxu0 0.0
    %1063 = vmatpush1.msra.mxu0 0.0
    %1064 = vmatprep.subr.mxu0 0.0
    %1065 = vmatpush1.msra.mxu0 0.0
    %1066 = vmatprep.subr.mxu0 0.0
    %1067 = vmatpush1.msra.mxu0 0.0
    %1068 = vmatprep.subr.mxu0 0.0
    %1069 = vmatpush1.msra.mxu0 0.0
    %1070 = vmatprep.subr.mxu0 0.0
    %1071 = vmatpush1.msra.mxu0 0.0
    %1072 = vmatprep.subr.mxu0 0.0
    %1073 = vmatpush1.msra.mxu0 0.0
    %1074 = vmatprep.subr.mxu0 0.0
    %1075 = vmatpush1.msra.mxu0 0.0
    %1076 = vmatprep.subr.mxu0 0.0
    %1077 = vmatpush1.msra.mxu0 0.0
    %1078 = vmatprep.subr.mxu0 0.0
    %1079 = vmatpush1.msra.mxu0 0.0
    %1080 = vmatprep.subr.mxu0 0.0
    %1081 = vmatpush1.msra.mxu0 0.0
    %1082 = vmatprep.subr.mxu0 0.0
    %1083 = vmatpush1.msra.mxu0 0.0
    %1084 = vmatprep.subr.mxu0 0.0
    %1085 = vmatpush1.msra.mxu0 0.0
    %1086 = vmatprep.subr.mxu0 0.0
    %1087 = vmatpush1.msra.mxu0 0.0
    %1088 = vmatprep.subr.mxu0 0.0
    %1089 = vmatpush1.msra.mxu0 0.0
    %1090 = vmatprep.subr.mxu0 0.0
    %1091 = vmatpush1.msra.mxu0 0.0
    %1092 = vmatprep.subr.mxu0 0.0
    %1093 = vmatpush1.msra.mxu0 0.0
    %1094 = vmatprep.subr.mxu0 0.0
    %1095 = vmatpush1.msra.mxu0 0.0
    %1096 = vmatprep.subr.mxu0 0.0
    %1097 = vmatpush1.msra.mxu0 0.0
    %1098 = vmatprep.subr.mxu0 0.0
    %1099 = vmatpush1.msra.mxu0 0.0
    %1100 = vmatprep.subr.mxu0 0.0
    %1101 = vmatpush1.msra.mxu0 0.0
    %1102 = vmatprep.subr.mxu0 0.0
    %1103 = vmatpush1.msra.mxu0 0.0
    %1104 = vmatprep.subr.mxu0 0.0
    %1105 = vmatpush1.msra.mxu0 0.0
    %1106 = vmatprep.subr.mxu0 0.0
    %1107 = vmatpush1.msra.mxu0 0.0
    %1108 = vmatprep.subr.mxu0 0.0
    %1109 = vmatpush1.msra.mxu0 0.0
    %1110 = vmatprep.subr.mxu0 0.0
    %1111 = vmatpush1.msra.mxu0 0.0
    %1112 = vmatprep.subr.mxu0 0.0
    %1113 = vmatpush1.msra.mxu0 0.0
    %1114 = vmatprep.subr.mxu0 0.0
    %1115 = vmatpush1.msra.mxu0 0.0
    %1116 = vmatprep.mubr.f32.mxu0 0.0
    %1117 = vmatmul.mubr.f32.gmra.mrb[0].mxu0 %v1044
    %v1118 = vpop.f32.mrb[0].mxu0
    %v1119 = vadd.f32 %v1041, %v1118
    %v1120 = vpop.f32.mrb[0].mxu0
    %1121 = vmatprep.mubr.f32.mxu0 0.0
    %1122 = vmatmul.mubr.f32.gmra.mrb[0].mxu0 %v1047
    %v1123 = vpop.f32.mrb[0].mxu0
    %v1124 = vadd.f32 %v1041, %v1123
    %v1125 = vpop.f32.mrb[0].mxu0
    %1126 = vmatprep.mubr.f32.mxu0 0.0
    %1127 = vmatmul.mubr.f32.gmra.mrb[0].mxu0 %v1050
    %v1128 = vpop.f32.mrb[0].mxu0
    %v1129 = vadd.f32 %v1041, %v1128
    %v1130 = vpop.f32.mrb[0].mxu0
    %1131 = vdwg.mxu0
    %vm1135 = vcmask 1043456
    %v1136 = vrot.slane %v1119, 4
    %v1137 = vrot.slane %v1124, 4
    %v1138 = vsel %vm1135, %v1136, %v1137
    %v1139 = vrot.slane %v1129, 4
    %v1140 = vsel %vm1135, %v1137, %v1139
    %v1144 = vsel %vm1135, %v1129, %v1136
    %v1145 = vmul.f32 %v1119, %v621
    %v1146 = vmul.f32 %v1124, %v622
    %v1147 = vmul.f32 %v1144, %v623
    %v1148 = vmul.f32 %v1138, %v624
    %v1149 = vmul.f32 %v1140, %v625
    %v1150 = vmul.f32 %v1119, %v626
    %v1151 = vmul.f32 %v1124, %v627
    %v1152 = vmul.f32 %v1144, %v628
    %v1153 = vmul.f32 %v1138, %v629
    %v1154 = vmul.f32 %v1140, %v630
    %1165 = vrot.lane.b32.xlu0 %v621, 32
    %v1166 = vpop.permute.xlu0 %1165
    %1167 = vrot.lane.b32.xlu0 %v622, 32
    %v1168 = vpop.permute.xlu0 %1167
    %1169 = vrot.lane.b32.xlu0 %v623, 32
    %v1170 = vpop.permute.xlu0 %1169
    %1171 = vrot.lane.b32.xlu0 %v624, 32
    %v1172 = vpop.permute.xlu0 %1171
    %1173 = vrot.lane.b32.xlu0 %v625, 32
    %v1174 = vpop.permute.xlu0 %1173
    %1175 = vrot.lane.b32.xlu0 %v626, 32
    %v1176 = vpop.permute.xlu0 %1175
    %1177 = vrot.lane.b32.xlu0 %v627, 32
    %v1178 = vpop.permute.xlu0 %1177
    %1179 = vrot.lane.b32.xlu0 %v628, 32
    %v1180 = vpop.permute.xlu0 %1179
    %1181 = vrot.lane.b32.xlu0 %v629, 32
    %v1182 = vpop.permute.xlu0 %1181
    %1183 = vrot.lane.b32.xlu0 %v630, 32
    %v1184 = vpop.permute.xlu0 %1183
    %v1195 = vmul.f32 %v1119, %v1166
    %v1196 = vmul.f32 %v1124, %v1168
    %v1197 = vmul.f32 %v1144, %v1170
    %v1198 = vmul.f32 %v1138, %v1172
    %v1199 = vmul.f32 %v1140, %v1174
    %v1200 = vmul.f32 %v1119, %v1176
    %v1201 = vmul.f32 %v1124, %v1178
    %v1202 = vmul.f32 %v1144, %v1180
    %v1203 = vmul.f32 %v1138, %v1182
    %v1204 = vmul.f32 %v1140, %v1184
    %v1205 = vld [vmem:[#allocation2 + $0xf0] sm:$0xff]
    %v1206 = vld [vmem:[#allocation2 + $0xf8] sm:$0xff]
    %v1207 = vld [vmem:[#allocation2 + $0x100] sm:$0xff]
    %v1208 = vld [vmem:[#allocation2 + $0x108] sm:$0xff]
    %v1209 = vld [vmem:[#allocation2 + $0x110] sm:$0x1]
    %v1210 = vlaneseq
    %v1211 = vshrl.u32 %v1210, 7
    %v1212 = vsub.s32 0, %v1211
    %v1213 = vrot.slane %v1209, %v1212
    %v1215 = vsel %vm1042, %v37, 0
    %v1218 = vsel %vm1042, %v38, 0
    %v1221 = vsel %vm1042, %v39, 0
    %1223 = vmatprep.subr.mxu0 0.0
    %1224 = vmatpush1.msra.mxu0 %v1205
    %1225 = vmatprep.subr.mxu0 0.0
    %1226 = vmatpush1.msra.mxu0 %v1206
    %1227 = vmatprep.subr.mxu0 0.0
    %1228 = vmatpush1.msra.mxu0 %v1207
    %1229 = vmatprep.subr.mxu0 0.0
    %1230 = vmatpush1.msra.mxu0 %v1208
    %1231 = vmatprep.subr.mxu0 0.0
    %1232 = vmatpush1.msra.mxu0 0.0
    %1233 = vmatprep.subr.mxu0 0.0
    %1234 = vmatpush1.msra.mxu0 0.0
    %1235 = vmatprep.subr.mxu0 0.0
    %1236 = vmatpush1.msra.mxu0 0.0
    %1237 = vmatprep.subr.mxu0 0.0
    %1238 = vmatpush1.msra.mxu0 0.0
    %1239 = vmatprep.subr.mxu0 0.0
    %1240 = vmatpush1.msra.mxu0 0.0
    %1241 = vmatprep.subr.mxu0 0.0
    %1242 = vmatpush1.msra.mxu0 0.0
    %1243 = vmatprep.subr.mxu0 0.0
    %1244 = vmatpush1.msra.mxu0 0.0
    %1245 = vmatprep.subr.mxu0 0.0
    %1246 = vmatpush1.msra.mxu0 0.0
    %1247 = vmatprep.subr.mxu0 0.0
    %1248 = vmatpush1.msra.mxu0 0.0
    %1249 = vmatprep.subr.mxu0 0.0
    %1250 = vmatpush1.msra.mxu0 0.0
    %1251 = vmatprep.subr.mxu0 0.0
    %1252 = vmatpush1.msra.mxu0 0.0
    %1253 = vmatprep.subr.mxu0 0.0
    %1254 = vmatpush1.msra.mxu0 0.0
    %1255 = vmatprep.subr.mxu0 0.0
    %1256 = vmatpush1.msra.mxu0 0.0
    %1257 = vmatprep.subr.mxu0 0.0
    %1258 = vmatpush1.msra.mxu0 0.0
    %1259 = vmatprep.subr.mxu0 0.0
    %1260 = vmatpush1.msra.mxu0 0.0
    %1261 = vmatprep.subr.mxu0 0.0
    %1262 = vmatpush1.msra.mxu0 0.0
    %1263 = vmatprep.subr.mxu0 0.0
    %1264 = vmatpush1.msra.mxu0 0.0
    %1265 = vmatprep.subr.mxu0 0.0
    %1266 = vmatpush1.msra.mxu0 0.0
    %1267 = vmatprep.subr.mxu0 0.0
    %1268 = vmatpush1.msra.mxu0 0.0
    %1269 = vmatprep.subr.mxu0 0.0
    %1270 = vmatpush1.msra.mxu0 0.0
    %1271 = vmatprep.subr.mxu0 0.0
    %1272 = vmatpush1.msra.mxu0 0.0
    %1273 = vmatprep.subr.mxu0 0.0
    %1274 = vmatpush1.msra.mxu0 0.0
    %1275 = vmatprep.subr.mxu0 0.0
    %1276 = vmatpush1.msra.mxu0 0.0
    %1277 = vmatprep.subr.mxu0 0.0
    %1278 = vmatpush1.msra.mxu0 0.0
    %1279 = vmatprep.subr.mxu0 0.0
    %1280 = vmatpush1.msra.mxu0 0.0
    %1281 = vmatprep.subr.mxu0 0.0
    %1282 = vmatpush1.msra.mxu0 0.0
    %1283 = vmatprep.subr.mxu0 0.0
    %1284 = vmatpush1.msra.mxu0 0.0
    %1285 = vmatprep.subr.mxu0 0.0
    %1286 = vmatpush1.msra.mxu0 0.0
    %1287 = vmatprep.mubr.f32.mxu0 0.0
    %1288 = vmatmul.mubr.f32.gmra.mrb[0].mxu0 %v1215
    %v1289 = vpop.f32.mrb[0].mxu0
    %v1290 = vadd.f32 %v1213, %v1289
    %v1291 = vpop.f32.mrb[0].mxu0
    %1292 = vmatprep.mubr.f32.mxu0 0.0
    %1293 = vmatmul.mubr.f32.gmra.mrb[0].mxu0 %v1218
    %v1294 = vpop.f32.mrb[0].mxu0
    %v1295 = vadd.f32 %v1213, %v1294
    %v1296 = vpop.f32.mrb[0].mxu0
    %1297 = vmatprep.mubr.f32.mxu0 0.0
    %1298 = vmatmul.mubr.f32.gmra.mrb[0].mxu0 %v1221
    %v1299 = vpop.f32.mrb[0].mxu0
    %v1300 = vadd.f32 %v1213, %v1299
    %v1301 = vpop.f32.mrb[0].mxu0
    %1302 = vdwg.mxu0
    %v1303 = vmul.f32 %v1290, %v979
    %v1304 = vmul.f32 %v1295, %v980
    %v1305 = vmul.f32 %v1300, %v981
    %v1306 = vmul.f32 %v1290, %v982
    %v1307 = vmul.f32 %v1295, %v983
    %v1308 = vmul.f32 %v1300, %v984
    %v1309 = vmul.f32 %v1290, %v985
    %v1310 = vmul.f32 %v1295, %v986
    %v1311 = vmul.f32 %v1300, %v987
    %v1312 = vmul.f32 %v1290, %v988
    %v1313 = vmul.f32 %v1295, %v989
    %v1314 = vmul.f32 %v1300, %v990
    %1327 = vrot.lane.b32.xlu0 %v979, 32
    %v1328 = vpop.permute.xlu0 %1327
    %1329 = vrot.lane.b32.xlu0 %v980, 32
    %v1330 = vpop.permute.xlu0 %1329
    %1331 = vrot.lane.b32.xlu0 %v981, 32
    %v1332 = vpop.permute.xlu0 %1331
    %1333 = vrot.lane.b32.xlu0 %v982, 32
    %v1334 = vpop.permute.xlu0 %1333
    %1335 = vrot.lane.b32.xlu0 %v983, 32
    %v1336 = vpop.permute.xlu0 %1335
    %1337 = vrot.lane.b32.xlu0 %v984, 32
    %v1338 = vpop.permute.xlu0 %1337
    %1339 = vrot.lane.b32.xlu0 %v985, 32
    %v1340 = vpop.permute.xlu0 %1339
    %1341 = vrot.lane.b32.xlu0 %v986, 32
    %v1342 = vpop.permute.xlu0 %1341
    %1343 = vrot.lane.b32.xlu0 %v987, 32
    %v1344 = vpop.permute.xlu0 %1343
    %1345 = vrot.lane.b32.xlu0 %v988, 32
    %v1346 = vpop.permute.xlu0 %1345
    %1347 = vrot.lane.b32.xlu0 %v989, 32
    %v1348 = vpop.permute.xlu0 %1347
    %1349 = vrot.lane.b32.xlu0 %v990, 32
    %v1350 = vpop.permute.xlu0 %1349
    %v1363 = vmul.f32 %v1290, %v1328
    %v1364 = vmul.f32 %v1295, %v1330
    %v1365 = vmul.f32 %v1300, %v1332
    %v1366 = vmul.f32 %v1290, %v1334
    %v1367 = vmul.f32 %v1295, %v1336
    %v1368 = vmul.f32 %v1300, %v1338
    %v1369 = vmul.f32 %v1290, %v1340
    %v1370 = vmul.f32 %v1295, %v1342
    %v1371 = vmul.f32 %v1300, %v1344
    %v1372 = vmul.f32 %v1290, %v1346
    %v1373 = vmul.f32 %v1295, %v1348
    %v1374 = vmul.f32 %v1300, %v1350
    %v1375 = vld [vmem:[#allocation2] sm:$0xff]
    %v1376 = vld [vmem:[#allocation2 + $0x8] sm:$0xff]
    %v1377 = vld [vmem:[#allocation2 + $0x10] sm:$0xff]
    %v1378 = vld [vmem:[#allocation2 + $0x18] sm:$0xff]
    %v1379 = vld [vmem:[#allocation2 + $0x20] sm:$0x1]
    %v1380 = vlaneseq
    %v1381 = vshrl.u32 %v1380, 7
    %v1382 = vsub.s32 0, %v1381
    %v1383 = vrot.slane %v1379, %v1382
    %v1385 = vsel %vm1042, %v32, 0
    %v1388 = vsel %vm1042, %v33, 0
    %1390 = vmatprep.subr.mxu0 0.0
    %1391 = vmatpush1.msra.mxu0 %v1375
    %1392 = vmatprep.subr.mxu0 0.0
    %1393 = vmatpush1.msra.mxu0 %v1376
    %1394 = vmatprep.subr.mxu0 0.0
    %1395 = vmatpush1.msra.mxu0 %v1377
    %1396 = vmatprep.subr.mxu0 0.0
    %1397 = vmatpush1.msra.mxu0 %v1378
    %1398 = vmatprep.subr.mxu0 0.0
    %1399 = vmatpush1.msra.mxu0 0.0
    %1400 = vmatprep.subr.mxu0 0.0
    %1401 = vmatpush1.msra.mxu0 0.0
    %1402 = vmatprep.subr.mxu0 0.0
    %1403 = vmatpush1.msra.mxu0 0.0
    %1404 = vmatprep.subr.mxu0 0.0
    %1405 = vmatpush1.msra.mxu0 0.0
    %1406 = vmatprep.subr.mxu0 0.0
    %1407 = vmatpush1.msra.mxu0 0.0
    %1408 = vmatprep.subr.mxu0 0.0
    %1409 = vmatpush1.msra.mxu0 0.0
    %1410 = vmatprep.subr.mxu0 0.0
    %1411 = vmatpush1.msra.mxu0 0.0
    %1412 = vmatprep.subr.mxu0 0.0
    %1413 = vmatpush1.msra.mxu0 0.0
    %1414 = vmatprep.subr.mxu0 0.0
    %1415 = vmatpush1.msra.mxu0 0.0
    %1416 = vmatprep.subr.mxu0 0.0
    %1417 = vmatpush1.msra.mxu0 0.0
    %1418 = vmatprep.subr.mxu0 0.0
    %1419 = vmatpush1.msra.mxu0 0.0
    %1420 = vmatprep.subr.mxu0 0.0
    %1421 = vmatpush1.msra.mxu0 0.0
    %1422 = vmatprep.subr.mxu0 0.0
    %1423 = vmatpush1.msra.mxu0 0.0
    %1424 = vmatprep.subr.mxu0 0.0
    %1425 = vmatpush1.msra.mxu0 0.0
    %1426 = vmatprep.subr.mxu0 0.0
    %1427 = vmatpush1.msra.mxu0 0.0
    %1428 = vmatprep.subr.mxu0 0.0
    %1429 = vmatpush1.msra.mxu0 0.0
    %1430 = vmatprep.subr.mxu0 0.0
    %1431 = vmatpush1.msra.mxu0 0.0
    %1432 = vmatprep.subr.mxu0 0.0
    %1433 = vmatpush1.msra.mxu0 0.0
    %1434 = vmatprep.subr.mxu0 0.0
    %1435 = vmatpush1.msra.mxu0 0.0
    %1436 = vmatprep.subr.mxu0 0.0
    %1437 = vmatpush1.msra.mxu0 0.0
    %1438 = vmatprep.subr.mxu0 0.0
    %1439 = vmatpush1.msra.mxu0 0.0
    %1440 = vmatprep.subr.mxu0 0.0
    %1441 = vmatpush1.msra.mxu0 0.0
    %1442 = vmatprep.subr.mxu0 0.0
    %1443 = vmatpush1.msra.mxu0 0.0
    %1444 = vmatprep.subr.mxu0 0.0
    %1445 = vmatpush1.msra.mxu0 0.0
    %1446 = vmatprep.subr.mxu0 0.0
    %1447 = vmatpush1.msra.mxu0 0.0
    %1448 = vmatprep.subr.mxu0 0.0
    %1449 = vmatpush1.msra.mxu0 0.0
    %1450 = vmatprep.subr.mxu0 0.0
    %1451 = vmatpush1.msra.mxu0 0.0
    %1452 = vmatprep.subr.mxu0 0.0
    %1453 = vmatpush1.msra.mxu0 0.0
    %1454 = vmatprep.mubr.f32.mxu0 0.0
    %1455 = vmatmul.mubr.f32.gmra.mrb[0].mxu0 %v1385
    %v1456 = vpop.f32.mrb[0].mxu0
    %v1457 = vadd.f32 %v1383, %v1456
    %v1458 = vpop.f32.mrb[0].mxu0
    %1459 = vmatprep.mubr.f32.mxu0 0.0
    %1460 = vmatmul.mubr.f32.gmra.mrb[0].mxu0 %v1388
    %v1461 = vpop.f32.mrb[0].mxu0
    %v1462 = vadd.f32 %v1383, %v1461
    %v1463 = vpop.f32.mrb[0].mxu0
    %1464 = vdwg.mxu0
    %1473 = vrot.lane.b32.xlu0 %v309, 32
    %v1474 = vpop.permute.xlu0 %1473
    %1475 = vrot.lane.b32.xlu0 %v310, 32
    %v1476 = vpop.permute.xlu0 %1475
    %1477 = vrot.lane.b32.xlu0 %v311, 32
    %v1478 = vpop.permute.xlu0 %1477
    %1479 = vrot.lane.b32.xlu0 %v312, 32
    %v1480 = vpop.permute.xlu0 %1479
    %1481 = vrot.lane.b32.xlu0 %v313, 32
    %v1482 = vpop.permute.xlu0 %1481
    %1483 = vrot.lane.b32.xlu0 %v314, 32
    %v1484 = vpop.permute.xlu0 %1483
    %1485 = vrot.lane.b32.xlu0 %v315, 32
    %v1486 = vpop.permute.xlu0 %1485
    %1487 = vrot.lane.b32.xlu0 %v316, 32
    %v1488 = vpop.permute.xlu0 %1487
    %v1497 = vmul.f32 %v1457, %v1474
    %v1498 = vmul.f32 %v1462, %v1476
    %v1499 = vmul.f32 %v1457, %v1478
    %v1500 = vmul.f32 %v1462, %v1480
    %v1501 = vmul.f32 %v1457, %v1482
    %v1502 = vmul.f32 %v1462, %v1484
    %v1503 = vmul.f32 %v1457, %v1486
    %v1504 = vmul.f32 %v1462, %v1488
    %1505 = vrot.lane.b32.xlu0 %v309, 64
    %v1506 = vpop.permute.xlu0 %1505
    %1507 = vrot.lane.b32.xlu0 %v310, 64
    %v1508 = vpop.permute.xlu0 %1507
    %1509 = vrot.lane.b32.xlu0 %v311, 64
    %v1510 = vpop.permute.xlu0 %1509
    %1511 = vrot.lane.b32.xlu0 %v312, 64
    %v1512 = vpop.permute.xlu0 %1511
    %1513 = vrot.lane.b32.xlu0 %v313, 64
    %v1514 = vpop.permute.xlu0 %1513
    %1515 = vrot.lane.b32.xlu0 %v314, 64
    %v1516 = vpop.permute.xlu0 %1515
    %1517 = vrot.lane.b32.xlu0 %v315, 64
    %v1518 = vpop.permute.xlu0 %1517
    %1519 = vrot.lane.b32.xlu0 %v316, 64
    %v1520 = vpop.permute.xlu0 %1519
    %v1529 = vmul.f32 %v1457, %v1506
    %v1530 = vmul.f32 %v1462, %v1508
    %v1531 = vmul.f32 %v1457, %v1510
    %v1532 = vmul.f32 %v1462, %v1512
    %v1533 = vmul.f32 %v1457, %v1514
    %v1534 = vmul.f32 %v1462, %v1516
    %v1535 = vmul.f32 %v1457, %v1518
    %v1536 = vmul.f32 %v1462, %v1520
    %v1537 = vld [vmem:[#allocation2 + $0x28] sm:$0xff]
    %v1538 = vld [vmem:[#allocation2 + $0x30] sm:$0xff]
    %v1539 = vld [vmem:[#allocation2 + $0x38] sm:$0xff]
    %v1540 = vld [vmem:[#allocation2 + $0x40] sm:$0xff]
    %v1541 = vld [vmem:[#allocation2 + $0x48] sm:$0x1]
    %1550 = vrot.lane.b32.xlu0 %v1497, 96
    %v1551 = vpop.permute.xlu0 %1550
    %1552 = vrot.lane.b32.xlu0 %v1498, 96
    %v1553 = vpop.permute.xlu0 %1552
    %1554 = vrot.lane.b32.xlu0 %v1499, 96
    %v1555 = vpop.permute.xlu0 %1554
    %1556 = vrot.lane.b32.xlu0 %v1500, 96
    %v1557 = vpop.permute.xlu0 %1556
    %1558 = vrot.lane.b32.xlu0 %v1501, 96
    %v1559 = vpop.permute.xlu0 %1558
    %1560 = vrot.lane.b32.xlu0 %v1502, 96
    %v1561 = vpop.permute.xlu0 %1560
    %1562 = vrot.lane.b32.xlu0 %v1503, 96
    %v1563 = vpop.permute.xlu0 %1562
    %1564 = vrot.lane.b32.xlu0 %v1504, 96
    %v1565 = vpop.permute.xlu0 %1564
    %v1567 = vsel %vm1042, %v1457, 0
    %v1570 = vsel %vm1042, %v1462, 0
    %v1572 = vsel %vm1042, %v1551, 0
    %v1574 = vsel %vm1042, %v1553, 0
    %v1576 = vsel %vm1042, %v1555, 0
    %v1578 = vsel %vm1042, %v1557, 0
    %v1580 = vsel %vm1042, %v1559, 0
    %v1582 = vsel %vm1042, %v1561, 0
    %v1584 = vsel %vm1042, %v1563, 0
    %v1586 = vsel %vm1042, %v1565, 0
    %1588 = vmatprep.subr.mxu0 0.0
    %1589 = vmatpush1.xpose.msra.mxu0 %v1572
    %1590 = vmatprep.subr.mxu0 0.0
    %1591 = vmatpush1.xpose.msra.mxu0 %v1574
    %1592 = vmatprep.subr.mxu0 0.0
    %1593 = vmatpush1.xpose.msra.mxu0 %v1576
    %1594 = vmatprep.subr.mxu0 0.0
    %1595 = vmatpush1.xpose.msra.mxu0 %v1578
    %1596 = vmatprep.subr.mxu0 0.0
    %1597 = vmatpush1.xpose.msra.mxu0 %v1580
    %1598 = vmatprep.subr.mxu0 0.0
    %1599 = vmatpush1.xpose.msra.mxu0 %v1582
    %1600 = vmatprep.subr.mxu0 0.0
    %1601 = vmatpush1.xpose.msra.mxu0 %v1584
    %1602 = vmatprep.subr.mxu0 0.0
    %1603 = vmatpush1.xpose.msra.mxu0 %v1586
    %1604 = vmatprep.subr.mxu0 0.0
    %1605 = vmatpush1.xpose.msra.mxu0 0.0
    %1606 = vmatprep.subr.mxu0 0.0
    %1607 = vmatpush1.xpose.msra.mxu0 0.0
    %1608 = vmatprep.subr.mxu0 0.0
    %1609 = vmatpush1.xpose.msra.mxu0 0.0
    %1610 = vmatprep.subr.mxu0 0.0
    %1611 = vmatpush1.xpose.msra.mxu0 0.0
    %1612 = vmatprep.subr.mxu0 0.0
    %1613 = vmatpush1.xpose.msra.mxu0 0.0
    %1614 = vmatprep.subr.mxu0 0.0
    %1615 = vmatpush1.xpose.msra.mxu0 0.0
    %1616 = vmatprep.subr.mxu0 0.0
    %1617 = vmatpush1.xpose.msra.mxu0 0.0
    %1618 = vmatprep.subr.mxu0 0.0
    %1619 = vmatpush1.xpose.msra.mxu0 0.0
    %1620 = vmatprep.subr.mxu0 0.0
    %1621 = vmatpush1.xpose.msra.mxu0 0.0
    %1622 = vmatprep.subr.mxu0 0.0
    %1623 = vmatpush1.xpose.msra.mxu0 0.0
    %1624 = vmatprep.subr.mxu0 0.0
    %1625 = vmatpush1.xpose.msra.mxu0 0.0
    %1626 = vmatprep.subr.mxu0 0.0
    %1627 = vmatpush1.xpose.msra.mxu0 0.0
    %1628 = vmatprep.subr.mxu0 0.0
    %1629 = vmatpush1.xpose.msra.mxu0 0.0
    %1630 = vmatprep.subr.mxu0 0.0
    %1631 = vmatpush1.xpose.msra.mxu0 0.0
    %1632 = vmatprep.subr.mxu0 0.0
    %1633 = vmatpush1.xpose.msra.mxu0 0.0
    %1634 = vmatprep.subr.mxu0 0.0
    %1635 = vmatpush1.xpose.msra.mxu0 0.0
    %1636 = vmatprep.subr.mxu0 0.0
    %1637 = vmatpush1.xpose.msra.mxu0 0.0
    %1638 = vmatprep.subr.mxu0 0.0
    %1639 = vmatpush1.xpose.msra.mxu0 0.0
    %1640 = vmatprep.subr.mxu0 0.0
    %1641 = vmatpush1.xpose.msra.mxu0 0.0
    %1642 = vmatprep.subr.mxu0 0.0
    %1643 = vmatpush1.xpose.msra.mxu0 0.0
    %1644 = vmatprep.subr.mxu0 0.0
    %1645 = vmatpush1.xpose.msra.mxu0 0.0
    %1646 = vmatprep.subr.mxu0 0.0
    %1647 = vmatpush1.xpose.msra.mxu0 0.0
    %1648 = vmatprep.subr.mxu0 0.0
    %1649 = vmatpush1.xpose.msra.mxu0 0.0
    %1650 = vmatprep.subr.mxu0 0.0
    %1651 = vmatpush1.xpose.msra.mxu0 0.0
    %1652 = vmatprep.mubr.f32.mxu0 0.0
    %1653 = vmatmul.mubr.f32.gmra.mrb[0].mxu0 %v1567
    %v1654 = vpop.f32.mrb[0].mxu0
    %v1655 = vadd.f32 0.0, %v1654
    %v1656 = vpop.f32.mrb[0].mxu0
    %1657 = vmatprep.mubr.f32.mxu0 0.0
    %1658 = vmatmul.mubr.f32.gmra.mrb[0].mxu0 %v1570
    %v1659 = vpop.f32.mrb[0].mxu0
    %v1660 = vadd.f32 0.0, %v1659
    %v1661 = vpop.f32.mrb[0].mxu0
    %1662 = vdwg.mxu0
    %vm1663 = vcmask 523264
    %v1664 = vsel %vm1663, %v1655, -inf
    %1665 = vmax.xlane.f32.xlu0 %v1664
    %v1666 = vpop.xlane.xlu0 %1665
    %v1667 = vsel %vm1663, %v1660, -inf
    %1668 = vmax.xlane.f32.xlu0 %v1667
    %v1669 = vpop.xlane.xlu0 %1668
    %v1670 = vsub.f32 %v1655, %v1666
    %v1671 = vsub.f32 %v1660, %v1669
    %v1672 = vmul.f32 %v1670, 1.442695
    %v1673 = vpow.pop %v1672
    %v1674 = vmul.f32 %v1671, 1.442695
    %v1675 = vpow.pop %v1674
    %v1676 = vmul.f32 %v1673, %v1031
    %v1677 = vmul.f32 %v1675, %v1032
    %1686 = vrot.lane.b32.xlu0 %v1529, 64
    %v1687 = vpop.permute.xlu0 %1686
    %1688 = vrot.lane.b32.xlu0 %v1530, 64
    %v1689 = vpop.permute.xlu0 %1688
    %1690 = vrot.lane.b32.xlu0 %v1531, 64
    %v1691 = vpop.permute.xlu0 %1690
    %1692 = vrot.lane.b32.xlu0 %v1532, 64
    %v1693 = vpop.permute.xlu0 %1692
    %1694 = vrot.lane.b32.xlu0 %v1533, 64
    %v1695 = vpop.permute.xlu0 %1694
    %1696 = vrot.lane.b32.xlu0 %v1534, 64
    %v1697 = vpop.permute.xlu0 %1696
    %1698 = vrot.lane.b32.xlu0 %v1535, 64
    %v1699 = vpop.permute.xlu0 %1698
    %1700 = vrot.lane.b32.xlu0 %v1536, 64
    %v1701 = vpop.permute.xlu0 %1700
    %v1711 = vsel %vm1663, %v1676, 0
    %v1714 = vsel %vm1663, %v1677, 0
    %1716 = vmatprep.subr.mxu0 0.0
    %1717 = vmatpush1.msra.mxu0 %v1687
    %1718 = vmatprep.subr.mxu0 0.0
    %1719 = vmatpush1.msra.mxu0 %v1689
    %1720 = vmatprep.subr.mxu0 0.0
    %1721 = vmatpush1.msra.mxu0 %v1691
    %1722 = vmatprep.subr.mxu0 0.0
    %1723 = vmatpush1.msra.mxu0 %v1693
    %1724 = vmatprep.subr.mxu0 0.0
    %1725 = vmatpush1.msra.mxu0 %v1695
    %1726 = vmatprep.subr.mxu0 0.0
    %1727 = vmatpush1.msra.mxu0 %v1697
    %1728 = vmatprep.subr.mxu0 0.0
    %1729 = vmatpush1.msra.mxu0 %v1699
    %1730 = vmatprep.subr.mxu0 0.0
    %1731 = vmatpush1.msra.mxu0 %v1701
    %1732 = vmatprep.subr.mxu0 0.0
    %1733 = vmatpush1.msra.mxu0 0.0
    %1734 = vmatprep.subr.mxu0 0.0
    %1735 = vmatpush1.msra.mxu0 0.0
    %1736 = vmatprep.subr.mxu0 0.0
    %1737 = vmatpush1.msra.mxu0 0.0
    %1738 = vmatprep.subr.mxu0 0.0
    %1739 = vmatpush1.msra.mxu0 0.0
    %1740 = vmatprep.subr.mxu0 0.0
    %1741 = vmatpush1.msra.mxu0 0.0
    %1742 = vmatprep.subr.mxu0 0.0
    %1743 = vmatpush1.msra.mxu0 0.0
    %1744 = vmatprep.subr.mxu0 0.0
    %1745 = vmatpush1.msra.mxu0 0.0
    %1746 = vmatprep.subr.mxu0 0.0
    %1747 = vmatpush1.msra.mxu0 0.0
    %1748 = vmatprep.subr.mxu0 0.0
    %1749 = vmatpush1.msra.mxu0 0.0
    %1750 = vmatprep.subr.mxu0 0.0
    %1751 = vmatpush1.msra.mxu0 0.0
    %1752 = vmatprep.subr.mxu0 0.0
    %1753 = vmatpush1.msra.mxu0 0.0
    %1754 = vmatprep.subr.mxu0 0.0
    %1755 = vmatpush1.msra.mxu0 0.0
    %1756 = vmatprep.subr.mxu0 0.0
    %1757 = vmatpush1.msra.mxu0 0.0
    %1758 = vmatprep.subr.mxu0 0.0
    %1759 = vmatpush1.msra.mxu0 0.0
    %1760 = vmatprep.subr.mxu0 0.0
    %1761 = vmatpush1.msra.mxu0 0.0
    %1762 = vmatprep.subr.mxu0 0.0
    %1763 = vmatpush1.msra.mxu0 0.0
    %1764 = vmatprep.subr.mxu0 0.0
    %1765 = vmatpush1.msra.mxu0 0.0
    %1766 = vmatprep.subr.mxu0 0.0
    %1767 = vmatpush1.msra.mxu0 0.0
    %1768 = vmatprep.subr.mxu0 0.0
    %1769 = vmatpush1.msra.mxu0 0.0
    %1770 = vmatprep.subr.mxu0 0.0
    %1771 = vmatpush1.msra.mxu0 0.0
    %1772 = vmatprep.subr.mxu0 0.0
    %1773 = vmatpush1.msra.mxu0 0.0
    %1774 = vmatprep.subr.mxu0 0.0
    %1775 = vmatpush1.msra.mxu0 0.0
    %1776 = vmatprep.subr.mxu0 0.0
    %1777 = vmatpush1.msra.mxu0 0.0
    %1778 = vmatprep.subr.mxu0 0.0
    %1779 = vmatpush1.msra.mxu0 0.0
    %1780 = vmatprep.mubr.f32.mxu0 0.0
    %1781 = vmatmul.mubr.f32.gmra.mrb[0].mxu0 %v1711
    %v1782 = vpop.f32.mrb[0].mxu0
    %v1783 = vadd.f32 0.0, %v1782
    %v1784 = vpop.f32.mrb[0].mxu0
    %1785 = vmatprep.mubr.f32.mxu0 0.0
    %1786 = vmatmul.mubr.f32.gmra.mrb[0].mxu0 %v1714
    %v1787 = vpop.f32.mrb[0].mxu0
    %v1788 = vadd.f32 0.0, %v1787
    %v1789 = vpop.f32.mrb[0].mxu0
    %1790 = vdwg.mxu0
    %1791 = vmatprep.subr.mxu0 0.0
    %1792 = vmatpush1.msra.mxu0 %v309
    %1793 = vmatprep.subr.mxu0 0.0
    %1794 = vmatpush1.msra.mxu0 %v310
    %1795 = vmatprep.subr.mxu0 0.0
    %1796 = vmatpush1.msra.mxu0 %v311
    %1797 = vmatprep.subr.mxu0 0.0
    %1798 = vmatpush1.msra.mxu0 %v312
    %1799 = vmatprep.subr.mxu0 0.0
    %1800 = vmatpush1.msra.mxu0 %v313
    %1801 = vmatprep.subr.mxu0 0.0
    %1802 = vmatpush1.msra.mxu0 %v314
    %1803 = vmatprep.subr.mxu0 0.0
    %1804 = vmatpush1.msra.mxu0 %v315
    %1805 = vmatprep.subr.mxu0 0.0
    %1806 = vmatpush1.msra.mxu0 %v316
    %1807 = vmatprep.subr.mxu0 0.0
    %1808 = vmatpush1.msra.mxu0 0.0
    %1809 = vmatprep.subr.mxu0 0.0
    %1810 = vmatpush1.msra.mxu0 0.0
    %1811 = vmatprep.subr.mxu0 0.0
    %1812 = vmatpush1.msra.mxu0 0.0
    %1813 = vmatprep.subr.mxu0 0.0
    %1814 = vmatpush1.msra.mxu0 0.0
    %1815 = vmatprep.subr.mxu0 0.0
    %1816 = vmatpush1.msra.mxu0 0.0
    %1817 = vmatprep.subr.mxu0 0.0
    %1818 = vmatpush1.msra.mxu0 0.0
    %1819 = vmatprep.subr.mxu0 0.0
    %1820 = vmatpush1.msra.mxu0 0.0
    %1821 = vmatprep.subr.mxu0 0.0
    %1822 = vmatpush1.msra.mxu0 0.0
    %1823 = vmatprep.subr.mxu0 0.0
    %1824 = vmatpush1.msra.mxu0 0.0
    %1825 = vmatprep.subr.mxu0 0.0
    %1826 = vmatpush1.msra.mxu0 0.0
    %1827 = vmatprep.subr.mxu0 0.0
    %1828 = vmatpush1.msra.mxu0 0.0
    %1829 = vmatprep.subr.mxu0 0.0
    %1830 = vmatpush1.msra.mxu0 0.0
    %1831 = vmatprep.subr.mxu0 0.0
    %1832 = vmatpush1.msra.mxu0 0.0
    %1833 = vmatprep.subr.mxu0 0.0
    %1834 = vmatpush1.msra.mxu0 0.0
    %1835 = vmatprep.subr.mxu0 0.0
    %1836 = vmatpush1.msra.mxu0 0.0
    %1837 = vmatprep.subr.mxu0 0.0
    %1838 = vmatpush1.msra.mxu0 0.0
    %1839 = vmatprep.subr.mxu0 0.0
    %1840 = vmatpush1.msra.mxu0 0.0
    %1841 = vmatprep.subr.mxu0 0.0
    %1842 = vmatpush1.msra.mxu0 0.0
    %1843 = vmatprep.subr.mxu0 0.0
    %1844 = vmatpush1.msra.mxu0 0.0
    %1845 = vmatprep.subr.mxu0 0.0
    %1846 = vmatpush1.msra.mxu0 0.0
    %1847 = vmatprep.subr.mxu0 0.0
    %1848 = vmatpush1.msra.mxu0 0.0
    %1849 = vmatprep.subr.mxu0 0.0
    %1850 = vmatpush1.msra.mxu0 0.0
    %1851 = vmatprep.subr.mxu0 0.0
    %1852 = vmatpush1.msra.mxu0 0.0
    %1853 = vmatprep.subr.mxu0 0.0
    %1854 = vmatpush1.msra.mxu0 0.0
    %1855 = vmatprep.mubr.f32.mxu0 0.0
    %1856 = vmatmul.mubr.f32.gmra.mrb[0].mxu0 %v1711
    %v1857 = vpop.f32.mrb[0].mxu0
    %v1858 = vadd.f32 0.0, %v1857
    %v1859 = vpop.f32.mrb[0].mxu0
    %1860 = vmatprep.mubr.f32.mxu0 0.0
    %1861 = vmatmul.mubr.f32.gmra.mrb[0].mxu0 %v1714
    %v1862 = vpop.f32.mrb[0].mxu0
    %v1863 = vadd.f32 0.0, %v1862
    %v1864 = vpop.f32.mrb[0].mxu0
    %1865 = vdwg.mxu0
    %v1866 = vrcp.pop %v1858
    %v1867 = vrcp.pop %v1863
    %v1868 = vmul.f32 %v1783, %v1866
    %v1869 = vmul.f32 %v1788, %v1867
    %v1870 = vlaneseq
    %v1871 = vshrl.u32 %v1870, 7
    %v1872 = vsub.s32 0, %v1871
    %v1873 = vrot.slane %v1541, %v1872
    %v1875 = vsel %vm1042, %v1868, 0
    %v1878 = vsel %vm1042, %v1869, 0
    %1880 = vmatprep.subr.mxu0 0.0
    %1881 = vmatpush1.msra.mxu0 %v1537
    %1882 = vmatprep.subr.mxu0 0.0
    %1883 = vmatpush1.msra.mxu0 %v1538
    %1884 = vmatprep.subr.mxu0 0.0
    %1885 = vmatpush1.msra.mxu0 %v1539
    %1886 = vmatprep.subr.mxu0 0.0
    %1887 = vmatpush1.msra.mxu0 %v1540
    %1888 = vmatprep.subr.mxu0 0.0
    %1889 = vmatpush1.msra.mxu0 0.0
    %1890 = vmatprep.subr.mxu0 0.0
    %1891 = vmatpush1.msra.mxu0 0.0
    %1892 = vmatprep.subr.mxu0 0.0
    %1893 = vmatpush1.msra.mxu0 0.0
    %1894 = vmatprep.subr.mxu0 0.0
    %1895 = vmatpush1.msra.mxu0 0.0
    %1896 = vmatprep.subr.mxu0 0.0
    %1897 = vmatpush1.msra.mxu0 0.0
    %1898 = vmatprep.subr.mxu0 0.0
    %1899 = vmatpush1.msra.mxu0 0.0
    %1900 = vmatprep.subr.mxu0 0.0
    %1901 = vmatpush1.msra.mxu0 0.0
    %1902 = vmatprep.subr.mxu0 0.0
    %1903 = vmatpush1.msra.mxu0 0.0
    %1904 = vmatprep.subr.mxu0 0.0
    %1905 = vmatpush1.msra.mxu0 0.0
    %1906 = vmatprep.subr.mxu0 0.0
    %1907 = vmatpush1.msra.mxu0 0.0
    %1908 = vmatprep.subr.mxu0 0.0
    %1909 = vmatpush1.msra.mxu0 0.0
    %1910 = vmatprep.subr.mxu0 0.0
    %1911 = vmatpush1.msra.mxu0 0.0
    %1912 = vmatprep.subr.mxu0 0.0
    %1913 = vmatpush1.msra.mxu0 0.0
    %1914 = vmatprep.subr.mxu0 0.0
    %1915 = vmatpush1.msra.mxu0 0.0
    %1916 = vmatprep.subr.mxu0 0.0
    %1917 = vmatpush1.msra.mxu0 0.0
    %1918 = vmatprep.subr.mxu0 0.0
    %1919 = vmatpush1.msra.mxu0 0.0
    %1920 = vmatprep.subr.mxu0 0.0
    %1921 = vmatpush1.msra.mxu0 0.0
    %1922 = vmatprep.subr.mxu0 0.0
    %1923 = vmatpush1.msra.mxu0 0.0
    %1924 = vmatprep.subr.mxu0 0.0
    %1925 = vmatpush1.msra.mxu0 0.0
    %1926 = vmatprep.subr.mxu0 0.0
    %1927 = vmatpush1.msra.mxu0 0.0
    %1928 = vmatprep.subr.mxu0 0.0
    %1929 = vmatpush1.msra.mxu0 0.0
    %1930 = vmatprep.subr.mxu0 0.0
    %1931 = vmatpush1.msra.mxu0 0.0
    %1932 = vmatprep.subr.mxu0 0.0
    %1933 = vmatpush1.msra.mxu0 0.0
    %1934 = vmatprep.subr.mxu0 0.0
    %1935 = vmatpush1.msra.mxu0 0.0
    %1936 = vmatprep.subr.mxu0 0.0
    %1937 = vmatpush1.msra.mxu0 0.0
    %1938 = vmatprep.subr.mxu0 0.0
    %1939 = vmatpush1.msra.mxu0 0.0
    %1940 = vmatprep.subr.mxu0 0.0
    %1941 = vmatpush1.msra.mxu0 0.0
    %1942 = vmatprep.subr.mxu0 0.0
    %1943 = vmatpush1.msra.mxu0 0.0
    %1944 = vmatprep.mubr.f32.mxu0 0.0
    %1945 = vmatmul.mubr.f32.gmra.mrb[0].mxu0 %v1875
    %v1946 = vpop.f32.mrb[0].mxu0
    %v1947 = vadd.f32 %v1873, %v1946
    %v1948 = vpop.f32.mrb[0].mxu0
    %1949 = vmatprep.mubr.f32.mxu0 0.0
    %1950 = vmatmul.mubr.f32.gmra.mrb[0].mxu0 %v1878
    %v1951 = vpop.f32.mrb[0].mxu0
    %v1952 = vadd.f32 %v1873, %v1951
    %v1953 = vpop.f32.mrb[0].mxu0
    %1954 = vdwg.mxu0
    %v1955 = vadd.f32 %v32, %v1947
    %v1956 = vadd.f32 %v33, %v1952
    %v1957 = vsel %vm1042, %v1955, 0.0
    %1958 = vadd.xlane.f32.xlu0 %v1957
    %v1959 = vpop.xlane.xlu0 %1958
    %v1960 = vsel %vm1042, %v1956, 0.0
    %1961 = vadd.xlane.f32.xlu0 %v1960
    %v1962 = vpop.xlane.xlu0 %1961
    %v1963 = vrcp.pop 32.0
    %v1964 = vmul.f32 %v1959, %v1963
    %v1965 = vmul.f32 %v1962, %v1963
    %v1966 = vsub.f32 %v1955, %v1964
    %v1967 = vsub.f32 %v1956, %v1965
    %v1968 = vmul.f32 %v1966, %v1966
    %v1969 = vmul.f32 %v1967, %v1967
    %v1970 = vsel %vm1042, %v1968, 0.0
    %1971 = vadd.xlane.f32.xlu0 %v1970
    %v1972 = vpop.xlane.xlu0 %1971
    %v1973 = vsel %vm1042, %v1969, 0.0
    %1974 = vadd.xlane.f32.xlu0 %v1973
    %v1975 = vpop.xlane.xlu0 %1974
    %v1976 = vmul.f32 %v1972, %v1963
    %v1977 = vmul.f32 %v1975, %v1963
    %v1978 = vadd.f32 %v1976, 1e-05
    %v1979 = vadd.f32 %v1977, 1e-05
    %v1980 = vrsqrt.pop %v1978
    %v1981 = vrsqrt.pop %v1979
    %v1982 = vmul.f32 %v1966, %v1980
    %v1983 = vmul.f32 %v1967, %v1981
    %v1984 = vlaneseq
    %v1985 = vshrl.u32 %v1984, 7
    %v1986 = vsub.s32 0, %v1985
    %v1987 = vrot.slane %v40, %v1986
    %v1988 = vmul.f32 %v1982, %v1987
    %v1989 = vmul.f32 %v1983, %v1987
    %v1990 = vlaneseq
    %v1991 = vshrl.u32 %v1990, 7
    %v1992 = vsub.s32 0, %v1991
    %v1993 = vrot.slane %v41, %v1992
    %v1994 = vadd.f32 %v1988, %v1993
    %v1995 = vadd.f32 %v1989, %v1993
    %v1996 = vld [vmem:[#allocation2 + $0x50] sm:$0xff]
    %v1997 = vld [vmem:[#allocation2 + $0x58] sm:$0xff]
    %v1998 = vld [vmem:[#allocation2 + $0x60] sm:$0xff]
    %v1999 = vld [vmem:[#allocation2 + $0x68] sm:$0xff]
    %v2000 = vld [vmem:[#allocation2 + $0x70] sm:$0x1]
    %v2001 = vlaneseq
    %v2002 = vshrl.u32 %v2001, 7
    %v2003 = vsub.s32 0, %v2002
    %v2004 = vrot.slane %v2000, %v2003
    %v2006 = vsel %vm1042, %v1994, 0
    %v2009 = vsel %vm1042, %v1995, 0
    %2011 = vmatprep.subr.mxu0 0.0
    %2012 = vmatpush1.msra.mxu0 %v1996
    %2013 = vmatprep.subr.mxu0 0.0
    %2014 = vmatpush1.msra.mxu0 %v1997
    %2015 = vmatprep.subr.mxu0 0.0
    %2016 = vmatpush1.msra.mxu0 %v1998
    %2017 = vmatprep.subr.mxu0 0.0
    %2018 = vmatpush1.msra.mxu0 %v1999
    %2019 = vmatprep.subr.mxu0 0.0
    %2020 = vmatpush1.msra.mxu0 0.0
    %2021 = vmatprep.subr.mxu0 0.0
    %2022 = vmatpush1.msra.mxu0 0.0
    %2023 = vmatprep.subr.mxu0 0.0
    %2024 = vmatpush1.msra.mxu0 0.0
    %2025 = vmatprep.subr.mxu0 0.0
    %2026 = vmatpush1.msra.mxu0 0.0
    %2027 = vmatprep.subr.mxu0 0.0
    %2028 = vmatpush1.msra.mxu0 0.0
    %2029 = vmatprep.subr.mxu0 0.0
    %2030 = vmatpush1.msra.mxu0 0.0
    %2031 = vmatprep.subr.mxu0 0.0
    %2032 = vmatpush1.msra.mxu0 0.0
    %2033 = vmatprep.subr.mxu0 0.0
    %2034 = vmatpush1.msra.mxu0 0.0
    %2035 = vmatprep.subr.mxu0 0.0
    %2036 = vmatpush1.msra.mxu0 0.0
    %2037 = vmatprep.subr.mxu0 0.0
    %2038 = vmatpush1.msra.mxu0 0.0
    %2039 = vmatprep.subr.mxu0 0.0
    %2040 = vmatpush1.msra.mxu0 0.0
    %2041 = vmatprep.subr.mxu0 0.0
    %2042 = vmatpush1.msra.mxu0 0.0
    %2043 = vmatprep.subr.mxu0 0.0
    %2044 = vmatpush1.msra.mxu0 0.0
    %2045 = vmatprep.subr.mxu0 0.0
    %2046 = vmatpush1.msra.mxu0 0.0
    %2047 = vmatprep.subr.mxu0 0.0
    %2048 = vmatpush1.msra.mxu0 0.0
    %2049 = vmatprep.subr.mxu0 0.0
    %2050 = vmatpush1.msra.mxu0 0.0
    %2051 = vmatprep.subr.mxu0 0.0
    %2052 = vmatpush1.msra.mxu0 0.0
    %2053 = vmatprep.subr.mxu0 0.0
    %2054 = vmatpush1.msra.mxu0 0.0
    %2055 = vmatprep.subr.mxu0 0.0
    %2056 = vmatpush1.msra.mxu0 0.0
    %2057 = vmatprep.subr.mxu0 0.0
    %2058 = vmatpush1.msra.mxu0 0.0
    %2059 = vmatprep.subr.mxu0 0.0
    %2060 = vmatpush1.msra.mxu0 0.0
    %2061 = vmatprep.subr.mxu0 0.0
    %2062 = vmatpush1.msra.mxu0 0.0
    %2063 = vmatprep.subr.mxu0 0.0
    %2064 = vmatpush1.msra.mxu0 0.0
    %2065 = vmatprep.subr.mxu0 0.0
    %2066 = vmatpush1.msra.mxu0 0.0
    %2067 = vmatprep.subr.mxu0 0.0
    %2068 = vmatpush1.msra.mxu0 0.0
    %2069 = vmatprep.subr.mxu0 0.0
    %2070 = vmatpush1.msra.mxu0 0.0
    %2071 = vmatprep.subr.mxu0 0.0
    %2072 = vmatpush1.msra.mxu0 0.0
    %2073 = vmatprep.subr.mxu0 0.0
    %2074 = vmatpush1.msra.mxu0 0.0
    %2075 = vmatprep.mubr.f32.mxu0 0.0
    %2076 = vmatmul.mubr.f32.gmra.mrb[0].mxu0 %v2006
    %v2077 = vpop.f32.mrb[0].mxu0
    %v2078 = vadd.f32 %v2004, %v2077
    %v2079 = vpop.f32.mrb[0].mxu0
    %2080 = vmatprep.mubr.f32.mxu0 0.0
    %2081 = vmatmul.mubr.f32.gmra.mrb[0].mxu0 %v2009
    %v2082 = vpop.f32.mrb[0].mxu0
    %v2083 = vadd.f32 %v2004, %v2082
    %v2084 = vpop.f32.mrb[0].mxu0
    %2085 = vdwg.mxu0
    %v2086 = vld [vmem:[#allocation2 + $0xa0] sm:$0xff]
    %v2087 = vld [vmem:[#allocation2 + $0xa8] sm:$0xff]
    %v2088 = vld [vmem:[#allocation2 + $0xb0] sm:$0xff]
    %v2089 = vld [vmem:[#allocation2 + $0xb8] sm:$0xff]
    %v2090 = vld [vmem:[#allocation2 + $0xc0] sm:$0x1]
    %v2092 = vsel %vm1042, %v2078, 0
    %v2095 = vsel %vm1042, %v2083, 0
    %v2098 = vsel %vm1042, %v1145, 0
    %v2101 = vsel %vm1042, %v1146, 0
    %v2104 = vsel %vm1042, %v1147, 0
    %v2107 = vsel %vm1042, %v1148, 0
    %v2110 = vsel %vm1042, %v1149, 0
    %v2113 = vsel %vm1042, %v1150, 0
    %v2116 = vsel %vm1042, %v1151, 0
    %v2119 = vsel %vm1042, %v1152, 0
    %v2122 = vsel %vm1042, %v1153, 0
    %v2125 = vsel %vm1042, %v1154, 0
    %2127 = vmatprep.subr.mxu0 0.0
    %2128 = vmatpush1.xpose.msra.mxu0 %v2098
    %2129 = vmatprep.subr.mxu0 0.0
    %2130 = vmatpush1.xpose.msra.mxu0 %v2101
    %2131 = vmatprep.subr.mxu0 0.0
    %2132 = vmatpush1.xpose.msra.mxu0 %v2104
    %2133 = vmatprep.subr.mxu0 0.0
    %2134 = vmatpush1.xpose.msra.mxu0 %v2107
    %2135 = vmatprep.subr.mxu0 0.0
    %2136 = vmatpush1.xpose.msra.mxu0 %v2110
    %2137 = vmatprep.subr.mxu0 0.0
    %2138 = vmatpush1.xpose.msra.mxu0 %v2113
    %2139 = vmatprep.subr.mxu0 0.0
    %2140 = vmatpush1.xpose.msra.mxu0 %v2116
    %2141 = vmatprep.subr.mxu0 0.0
    %2142 = vmatpush1.xpose.msra.mxu0 %v2119
    %2143 = vmatprep.subr.mxu0 0.0
    %2144 = vmatpush1.xpose.msra.mxu0 %v2122
    %2145 = vmatprep.subr.mxu0 0.0
    %2146 = vmatpush1.xpose.msra.mxu0 %v2125
    %2147 = vmatprep.subr.mxu0 0.0
    %2148 = vmatpush1.xpose.msra.mxu0 0.0
    %2149 = vmatprep.subr.mxu0 0.0
    %2150 = vmatpush1.xpose.msra.mxu0 0.0
    %2151 = vmatprep.subr.mxu0 0.0
    %2152 = vmatpush1.xpose.msra.mxu0 0.0
    %2153 = vmatprep.subr.mxu0 0.0
    %2154 = vmatpush1.xpose.msra.mxu0 0.0
    %2155 = vmatprep.subr.mxu0 0.0
    %2156 = vmatpush1.xpose.msra.mxu0 0.0
    %2157 = vmatprep.subr.mxu0 0.0
    %2158 = vmatpush1.xpose.msra.mxu0 0.0
    %2159 = vmatprep.subr.mxu0 0.0
    %2160 = vmatpush1.xpose.msra.mxu0 0.0
    %2161 = vmatprep.subr.mxu0 0.0
    %2162 = vmatpush1.xpose.msra.mxu0 0.0
    %2163 = vmatprep.subr.mxu0 0.0
    %2164 = vmatpush1.xpose.msra.mxu0 0.0
    %2165 = vmatprep.subr.mxu0 0.0
    %2166 = vmatpush1.xpose.msra.mxu0 0.0
    %2167 = vmatprep.subr.mxu0 0.0
    %2168 = vmatpush1.xpose.msra.mxu0 0.0
    %2169 = vmatprep.subr.mxu0 0.0
    %2170 = vmatpush1.xpose.msra.mxu0 0.0
    %2171 = vmatprep.subr.mxu0 0.0
    %2172 = vmatpush1.xpose.msra.mxu0 0.0
    %2173 = vmatprep.subr.mxu0 0.0
    %2174 = vmatpush1.xpose.msra.mxu0 0.0
    %2175 = vmatprep.subr.mxu0 0.0
    %2176 = vmatpush1.xpose.msra.mxu0 0.0
    %2177 = vmatprep.subr.mxu0 0.0
    %2178 = vmatpush1.xpose.msra.mxu0 0.0
    %2179 = vmatprep.subr.mxu0 0.0
    %2180 = vmatpush1.xpose.msra.mxu0 0.0
    %2181 = vmatprep.subr.mxu0 0.0
    %2182 = vmatpush1.xpose.msra.mxu0 0.0
    %2183 = vmatprep.subr.mxu0 0.0
    %2184 = vmatpush1.xpose.msra.mxu0 0.0
    %2185 = vmatprep.subr.mxu0 0.0
    %2186 = vmatpush1.xpose.msra.mxu0 0.0
    %2187 = vmatprep.subr.mxu0 0.0
    %2188 = vmatpush1.xpose.msra.mxu0 0.0
    %2189 = vmatprep.subr.mxu0 0.0
    %2190 = vmatpush1.xpose.msra.mxu0 0.0
    %2191 = vmatprep.mubr.f32.mxu0 0.0
    %2192 = vmatmul.mubr.f32.gmra.mrb[0].mxu0 %v2092
    %v2193 = vpop.f32.mrb[0].mxu0
    %v2194 = vadd.f32 0.0, %v2193
    %v2195 = vpop.f32.mrb[0].mxu0
    %2196 = vmatprep.mubr.f32.mxu0 0.0
    %2197 = vmatmul.mubr.f32.gmra.mrb[0].mxu0 %v2095
    %v2198 = vpop.f32.mrb[0].mxu0
    %v2199 = vadd.f32 0.0, %v2198
    %v2200 = vpop.f32.mrb[0].mxu0
    %2201 = vdwg.mxu0
    %vm2202 = vcmask 654336
    %v2203 = vsel %vm2202, %v2194, -inf
    %2204 = vmax.xlane.f32.xlu0 %v2203
    %v2205 = vpop.xlane.xlu0 %2204
    %v2206 = vsel %vm2202, %v2199, -inf
    %2207 = vmax.xlane.f32.xlu0 %v2206
    %v2208 = vpop.xlane.xlu0 %2207
    %v2209 = vsub.f32 %v2194, %v2205
    %v2210 = vsub.f32 %v2199, %v2208
    %v2211 = vmul.f32 %v2209, 1.442695
    %v2212 = vpow.pop %v2211
    %v2213 = vmul.f32 %v2210, 1.442695
    %v2214 = vpow.pop %v2213
    %v2215 = vmul.f32 %v2212, %v1031
    %v2216 = vmul.f32 %v2214, %v1032
    %2227 = vrot.lane.b32.xlu0 %v1195, 96
    %v2228 = vpop.permute.xlu0 %2227
    %2229 = vrot.lane.b32.xlu0 %v1196, 96
    %v2230 = vpop.permute.xlu0 %2229
    %2231 = vrot.lane.b32.xlu0 %v1197, 96
    %v2232 = vpop.permute.xlu0 %2231
    %2233 = vrot.lane.b32.xlu0 %v1198, 96
    %v2234 = vpop.permute.xlu0 %2233
    %2235 = vrot.lane.b32.xlu0 %v1199, 96
    %v2236 = vpop.permute.xlu0 %2235
    %2237 = vrot.lane.b32.xlu0 %v1200, 96
    %v2238 = vpop.permute.xlu0 %2237
    %2239 = vrot.lane.b32.xlu0 %v1201, 96
    %v2240 = vpop.permute.xlu0 %2239
    %2241 = vrot.lane.b32.xlu0 %v1202, 96
    %v2242 = vpop.permute.xlu0 %2241
    %2243 = vrot.lane.b32.xlu0 %v1203, 96
    %v2244 = vpop.permute.xlu0 %2243
    %2245 = vrot.lane.b32.xlu0 %v1204, 96
    %v2246 = vpop.permute.xlu0 %2245
    %v2258 = vsel %vm2202, %v2215, 0
    %v2261 = vsel %vm2202, %v2216, 0
    %2263 = vmatprep.subr.mxu0 0.0
    %2264 = vmatpush1.msra.mxu0 %v2228
    %2265 = vmatprep.subr.mxu0 0.0
    %2266 = vmatpush1.msra.mxu0 %v2230
    %2267 = vmatprep.subr.mxu0 0.0
    %2268 = vmatpush1.msra.mxu0 %v2232
    %2269 = vmatprep.subr.mxu0 0.0
    %2270 = vmatpush1.msra.mxu0 %v2234
    %2271 = vmatprep.subr.mxu0 0.0
    %2272 = vmatpush1.msra.mxu0 %v2236
    %2273 = vmatprep.subr.mxu0 0.0
    %2274 = vmatpush1.msra.mxu0 %v2238
    %2275 = vmatprep.subr.mxu0 0.0
    %2276 = vmatpush1.msra.mxu0 %v2240
    %2277 = vmatprep.subr.mxu0 0.0
    %2278 = vmatpush1.msra.mxu0 %v2242
    %2279 = vmatprep.subr.mxu0 0.0
    %2280 = vmatpush1.msra.mxu0 %v2244
    %2281 = vmatprep.subr.mxu0 0.0
    %2282 = vmatpush1.msra.mxu0 %v2246
    %2283 = vmatprep.subr.mxu0 0.0
    %2284 = vmatpush1.msra.mxu0 0.0
    %2285 = vmatprep.subr.mxu0 0.0
    %2286 = vmatpush1.msra.mxu0 0.0
    %2287 = vmatprep.subr.mxu0 0.0
    %2288 = vmatpush1.msra.mxu0 0.0
    %2289 = vmatprep.subr.mxu0 0.0
    %2290 = vmatpush1.msra.mxu0 0.0
    %2291 = vmatprep.subr.mxu0 0.0
    %2292 = vmatpush1.msra.mxu0 0.0
    %2293 = vmatprep.subr.mxu0 0.0
    %2294 = vmatpush1.msra.mxu0 0.0
    %2295 = vmatprep.subr.mxu0 0.0
    %2296 = vmatpush1.msra.mxu0 0.0
    %2297 = vmatprep.subr.mxu0 0.0
    %2298 = vmatpush1.msra.mxu0 0.0
    %2299 = vmatprep.subr.mxu0 0.0
    %2300 = vmatpush1.msra.mxu0 0.0
    %2301 = vmatprep.subr.mxu0 0.0
    %2302 = vmatpush1.msra.mxu0 0.0
    %2303 = vmatprep.subr.mxu0 0.0
    %2304 = vmatpush1.msra.mxu0 0.0
    %2305 = vmatprep.subr.mxu0 0.0
    %2306 = vmatpush1.msra.mxu0 0.0
    %2307 = vmatprep.subr.mxu0 0.0
    %2308 = vmatpush1.msra.mxu0 0.0
    %2309 = vmatprep.subr.mxu0 0.0
    %2310 = vmatpush1.msra.mxu0 0.0
    %2311 = vmatprep.subr.mxu0 0.0
    %2312 = vmatpush1.msra.mxu0 0.0
    %2313 = vmatprep.subr.mxu0 0.0
    %2314 = vmatpush1.msra.mxu0 0.0
    %2315 = vmatprep.subr.mxu0 0.0
    %2316 = vmatpush1.msra.mxu0 0.0
    %2317 = vmatprep.subr.mxu0 0.0
    %2318 = vmatpush1.msra.mxu0 0.0
    %2319 = vmatprep.subr.mxu0 0.0
    %2320 = vmatpush1.msra.mxu0 0.0
    %2321 = vmatprep.subr.mxu0 0.0
    %2322 = vmatpush1.msra.mxu0 0.0
    %2323 = vmatprep.subr.mxu0 0.0
    %2324 = vmatpush1.msra.mxu0 0.0
    %2325 = vmatprep.subr.mxu0 0.0
    %2326 = vmatpush1.msra.mxu0 0.0
    %2327 = vmatprep.mubr.f32.mxu0 0.0
    %2328 = vmatmul.mubr.f32.gmra.mrb[0].mxu0 %v2258
    %v2329 = vpop.f32.mrb[0].mxu0
    %v2330 = vadd.f32 0.0, %v2329
    %v2331 = vpop.f32.mrb[0].mxu0
    %2332 = vmatprep.mubr.f32.mxu0 0.0
    %2333 = vmatmul.mubr.f32.gmra.mrb[0].mxu0 %v2261
    %v2334 = vpop.f32.mrb[0].mxu0
    %v2335 = vadd.f32 0.0, %v2334
    %v2336 = vpop.f32.mrb[0].mxu0
    %2337 = vdwg.mxu0
    %2338 = vmatprep.subr.mxu0 0.0
    %2339 = vmatpush1.msra.mxu0 %v621
    %2340 = vmatprep.subr.mxu0 0.0
    %2341 = vmatpush1.msra.mxu0 %v622
    %2342 = vmatprep.subr.mxu0 0.0
    %2343 = vmatpush1.msra.mxu0 %v623
    %2344 = vmatprep.subr.mxu0 0.0
    %2345 = vmatpush1.msra.mxu0 %v624
    %2346 = vmatprep.subr.mxu0 0.0
    %2347 = vmatpush1.msra.mxu0 %v625
    %2348 = vmatprep.subr.mxu0 0.0
    %2349 = vmatpush1.msra.mxu0 %v626
    %2350 = vmatprep.subr.mxu0 0.0
    %2351 = vmatpush1.msra.mxu0 %v627
    %2352 = vmatprep.subr.mxu0 0.0
    %2353 = vmatpush1.msra.mxu0 %v628
    %2354 = vmatprep.subr.mxu0 0.0
    %2355 = vmatpush1.msra.mxu0 %v629
    %2356 = vmatprep.subr.mxu0 0.0
    %2357 = vmatpush1.msra.mxu0 %v630
    %2358 = vmatprep.subr.mxu0 0.0
    %2359 = vmatpush1.msra.mxu0 0.0
    %2360 = vmatprep.subr.mxu0 0.0
    %2361 = vmatpush1.msra.mxu0 0.0
    %2362 = vmatprep.subr.mxu0 0.0
    %2363 = vmatpush1.msra.mxu0 0.0
    %2364 = vmatprep.subr.mxu0 0.0
    %2365 = vmatpush1.msra.mxu0 0.0
    %2366 = vmatprep.subr.mxu0 0.0
    %2367 = vmatpush1.msra.mxu0 0.0
    %2368 = vmatprep.subr.mxu0 0.0
    %2369 = vmatpush1.msra.mxu0 0.0
    %2370 = vmatprep.subr.mxu0 0.0
    %2371 = vmatpush1.msra.mxu0 0.0
    %2372 = vmatprep.subr.mxu0 0.0
    %2373 = vmatpush1.msra.mxu0 0.0
    %2374 = vmatprep.subr.mxu0 0.0
    %2375 = vmatpush1.msra.mxu0 0.0
    %2376 = vmatprep.subr.mxu0 0.0
    %2377 = vmatpush1.msra.mxu0 0.0
    %2378 = vmatprep.subr.mxu0 0.0
    %2379 = vmatpush1.msra.mxu0 0.0
    %2380 = vmatprep.subr.mxu0 0.0
    %2381 = vmatpush1.msra.mxu0 0.0
    %2382 = vmatprep.subr.mxu0 0.0
    %2383 = vmatpush1.msra.mxu0 0.0
    %2384 = vmatprep.subr.mxu0 0.0
    %2385 = vmatpush1.msra.mxu0 0.0
    %2386 = vmatprep.subr.mxu0 0.0
    %2387 = vmatpush1.msra.mxu0 0.0
    %2388 = vmatprep.subr.mxu0 0.0
    %2389 = vmatpush1.msra.mxu0 0.0
    %2390 = vmatprep.subr.mxu0 0.0
    %2391 = vmatpush1.msra.mxu0 0.0
    %2392 = vmatprep.subr.mxu0 0.0
    %2393 = vmatpush1.msra.mxu0 0.0
    %2394 = vmatprep.subr.mxu0 0.0
    %2395 = vmatpush1.msra.mxu0 0.0
    %2396 = vmatprep.subr.mxu0 0.0
    %2397 = vmatpush1.msra.mxu0 0.0
    %2398 = vmatprep.subr.mxu0 0.0
    %2399 = vmatpush1.msra.mxu0 0.0
    %2400 = vmatprep.subr.mxu0 0.0
    %2401 = vmatpush1.msra.mxu0 0.0
    %2402 = vmatprep.mubr.f32.mxu0 0.0
    %2403 = vmatmul.mubr.f32.gmra.mrb[0].mxu0 %v2258
    %v2404 = vpop.f32.mrb[0].mxu0
    %v2405 = vadd.f32 0.0, %v2404
    %v2406 = vpop.f32.mrb[0].mxu0
    %2407 = vmatprep.mubr.f32.mxu0 0.0
    %2408 = vmatmul.mubr.f32.gmra.mrb[0].mxu0 %v2261
    %v2409 = vpop.f32.mrb[0].mxu0
    %v2410 = vadd.f32 0.0, %v2409
    %v2411 = vpop.f32.mrb[0].mxu0
    %2412 = vdwg.mxu0
    %v2413 = vrcp.pop %v2405
    %v2414 = vrcp.pop %v2410
    %v2415 = vmul.f32 %v2330, %v2413
    %v2416 = vmul.f32 %v2335, %v2414
    %v2417 = vlaneseq
    %v2418 = vshrl.u32 %v2417, 7
    %v2419 = vsub.s32 0, %v2418
    %v2420 = vrot.slane %v2090, %v2419
    %v2422 = vsel %vm1042, %v2415, 0
    %v2425 = vsel %vm1042, %v2416, 0
    %2427 = vmatprep.subr.mxu0 0.0
    %2428 = vmatpush1.msra.mxu0 %v2086
    %2429 = vmatprep.subr.mxu0 0.0
    %2430 = vmatpush1.msra.mxu0 %v2087
    %2431 = vmatprep.subr.mxu0 0.0
    %2432 = vmatpush1.msra.mxu0 %v2088
    %2433 = vmatprep.subr.mxu0 0.0
    %2434 = vmatpush1.msra.mxu0 %v2089
    %2435 = vmatprep.subr.mxu0 0.0
    %2436 = vmatpush1.msra.mxu0 0.0
    %2437 = vmatprep.subr.mxu0 0.0
    %2438 = vmatpush1.msra.mxu0 0.0
    %2439 = vmatprep.subr.mxu0 0.0
    %2440 = vmatpush1.msra.mxu0 0.0
    %2441 = vmatprep.subr.mxu0 0.0
    %2442 = vmatpush1.msra.mxu0 0.0
    %2443 = vmatprep.subr.mxu0 0.0
    %2444 = vmatpush1.msra.mxu0 0.0
    %2445 = vmatprep.subr.mxu0 0.0
    %2446 = vmatpush1.msra.mxu0 0.0
    %2447 = vmatprep.subr.mxu0 0.0
    %2448 = vmatpush1.msra.mxu0 0.0
    %2449 = vmatprep.subr.mxu0 0.0
    %2450 = vmatpush1.msra.mxu0 0.0
    %2451 = vmatprep.subr.mxu0 0.0
    %2452 = vmatpush1.msra.mxu0 0.0
    %2453 = vmatprep.subr.mxu0 0.0
    %2454 = vmatpush1.msra.mxu0 0.0
    %2455 = vmatprep.subr.mxu0 0.0
    %2456 = vmatpush1.msra.mxu0 0.0
    %2457 = vmatprep.subr.mxu0 0.0
    %2458 = vmatpush1.msra.mxu0 0.0
    %2459 = vmatprep.subr.mxu0 0.0
    %2460 = vmatpush1.msra.mxu0 0.0
    %2461 = vmatprep.subr.mxu0 0.0
    %2462 = vmatpush1.msra.mxu0 0.0
    %2463 = vmatprep.subr.mxu0 0.0
    %2464 = vmatpush1.msra.mxu0 0.0
    %2465 = vmatprep.subr.mxu0 0.0
    %2466 = vmatpush1.msra.mxu0 0.0
    %2467 = vmatprep.subr.mxu0 0.0
    %2468 = vmatpush1.msra.mxu0 0.0
    %2469 = vmatprep.subr.mxu0 0.0
    %2470 = vmatpush1.msra.mxu0 0.0
    %2471 = vmatprep.subr.mxu0 0.0
    %2472 = vmatpush1.msra.mxu0 0.0
    %2473 = vmatprep.subr.mxu0 0.0
    %2474 = vmatpush1.msra.mxu0 0.0
    %2475 = vmatprep.subr.mxu0 0.0
    %2476 = vmatpush1.msra.mxu0 0.0
    %2477 = vmatprep.subr.mxu0 0.0
    %2478 = vmatpush1.msra.mxu0 0.0
    %2479 = vmatprep.subr.mxu0 0.0
    %2480 = vmatpush1.msra.mxu0 0.0
    %2481 = vmatprep.subr.mxu0 0.0
    %2482 = vmatpush1.msra.mxu0 0.0
    %2483 = vmatprep.subr.mxu0 0.0
    %2484 = vmatpush1.msra.mxu0 0.0
    %2485 = vmatprep.subr.mxu0 0.0
    %2486 = vmatpush1.msra.mxu0 0.0
    %2487 = vmatprep.subr.mxu0 0.0
    %2488 = vmatpush1.msra.mxu0 0.0
    %2489 = vmatprep.subr.mxu0 0.0
    %2490 = vmatpush1.msra.mxu0 0.0
    %2491 = vmatprep.mubr.f32.mxu0 0.0
    %2492 = vmatmul.mubr.f32.gmra.mrb[0].mxu0 %v2422
    %v2493 = vpop.f32.mrb[0].mxu0
    %v2494 = vadd.f32 %v2420, %v2493
    %v2495 = vpop.f32.mrb[0].mxu0
    %2496 = vmatprep.mubr.f32.mxu0 0.0
    %2497 = vmatmul.mubr.f32.gmra.mrb[0].mxu0 %v2425
    %v2498 = vpop.f32.mrb[0].mxu0
    %v2499 = vadd.f32 %v2420, %v2498
    %v2500 = vpop.f32.mrb[0].mxu0
    %2501 = vdwg.mxu0
    %v2502 = vadd.f32 %v1994, %v2494
    %v2503 = vadd.f32 %v1995, %v2499
    %v2504 = vsel %vm1042, %v2502, 0.0
    %2505 = vadd.xlane.f32.xlu0 %v2504
    %v2506 = vpop.xlane.xlu0 %2505
    %v2507 = vsel %vm1042, %v2503, 0.0
    %2508 = vadd.xlane.f32.xlu0 %v2507
    %v2509 = vpop.xlane.xlu0 %2508
    %v2510 = vmul.f32 %v2506, %v1963
    %v2511 = vmul.f32 %v2509, %v1963
    %v2512 = vsub.f32 %v2502, %v2510
    %v2513 = vsub.f32 %v2503, %v2511
    %v2514 = vmul.f32 %v2512, %v2512
    %v2515 = vmul.f32 %v2513, %v2513
    %v2516 = vsel %vm1042, %v2514, 0.0
    %2517 = vadd.xlane.f32.xlu0 %v2516
    %v2518 = vpop.xlane.xlu0 %2517
    %v2519 = vsel %vm1042, %v2515, 0.0
    %2520 = vadd.xlane.f32.xlu0 %v2519
    %v2521 = vpop.xlane.xlu0 %2520
    %v2522 = vmul.f32 %v2518, %v1963
    %v2523 = vmul.f32 %v2521, %v1963
    %v2524 = vadd.f32 %v2522, 1e-05
    %v2525 = vadd.f32 %v2523, 1e-05
    %v2526 = vrsqrt.pop %v2524
    %v2527 = vrsqrt.pop %v2525
    %v2528 = vmul.f32 %v2512, %v2526
    %v2529 = vmul.f32 %v2513, %v2527
    %v2530 = vlaneseq
    %v2531 = vshrl.u32 %v2530, 7
    %v2532 = vsub.s32 1, %v2531
    %v2533 = vrot.slane %v40, %v2532
    %v2534 = vmul.f32 %v2528, %v2533
    %v2535 = vmul.f32 %v2529, %v2533
    %v2536 = vlaneseq
    %v2537 = vshrl.u32 %v2536, 7
    %v2538 = vsub.s32 1, %v2537
    %v2539 = vrot.slane %v41, %v2538
    %v2540 = vadd.f32 %v2534, %v2539
    %v2541 = vadd.f32 %v2535, %v2539
    %v2542 = vld [vmem:[#allocation2 + $0xc8] sm:$0xff]
    %v2543 = vld [vmem:[#allocation2 + $0xd0] sm:$0xff]
    %v2544 = vld [vmem:[#allocation2 + $0xd8] sm:$0xff]
    %v2545 = vld [vmem:[#allocation2 + $0xe0] sm:$0xff]
    %v2546 = vld [vmem:[#allocation2 + $0xe8] sm:$0x1]
    %v2547 = vlaneseq
    %v2548 = vshrl.u32 %v2547, 7
    %v2549 = vsub.s32 0, %v2548
    %v2550 = vrot.slane %v2546, %v2549
    %v2552 = vsel %vm1042, %v2540, 0
    %v2555 = vsel %vm1042, %v2541, 0
    %2557 = vmatprep.subr.mxu0 0.0
    %2558 = vmatpush1.msra.mxu0 %v2542
    %2559 = vmatprep.subr.mxu0 0.0
    %2560 = vmatpush1.msra.mxu0 %v2543
    %2561 = vmatprep.subr.mxu0 0.0
    %2562 = vmatpush1.msra.mxu0 %v2544
    %2563 = vmatprep.subr.mxu0 0.0
    %2564 = vmatpush1.msra.mxu0 %v2545
    %2565 = vmatprep.subr.mxu0 0.0
    %2566 = vmatpush1.msra.mxu0 0.0
    %2567 = vmatprep.subr.mxu0 0.0
    %2568 = vmatpush1.msra.mxu0 0.0
    %2569 = vmatprep.subr.mxu0 0.0
    %2570 = vmatpush1.msra.mxu0 0.0
    %2571 = vmatprep.subr.mxu0 0.0
    %2572 = vmatpush1.msra.mxu0 0.0
    %2573 = vmatprep.subr.mxu0 0.0
    %2574 = vmatpush1.msra.mxu0 0.0
    %2575 = vmatprep.subr.mxu0 0.0
    %2576 = vmatpush1.msra.mxu0 0.0
    %2577 = vmatprep.subr.mxu0 0.0
    %2578 = vmatpush1.msra.mxu0 0.0
    %2579 = vmatprep.subr.mxu0 0.0
    %2580 = vmatpush1.msra.mxu0 0.0
    %2581 = vmatprep.subr.mxu0 0.0
    %2582 = vmatpush1.msra.mxu0 0.0
    %2583 = vmatprep.subr.mxu0 0.0
    %2584 = vmatpush1.msra.mxu0 0.0
    %2585 = vmatprep.subr.mxu0 0.0
    %2586 = vmatpush1.msra.mxu0 0.0
    %2587 = vmatprep.subr.mxu0 0.0
    %2588 = vmatpush1.msra.mxu0 0.0
    %2589 = vmatprep.subr.mxu0 0.0
    %2590 = vmatpush1.msra.mxu0 0.0
    %2591 = vmatprep.subr.mxu0 0.0
    %2592 = vmatpush1.msra.mxu0 0.0
    %2593 = vmatprep.subr.mxu0 0.0
    %2594 = vmatpush1.msra.mxu0 0.0
    %2595 = vmatprep.subr.mxu0 0.0
    %2596 = vmatpush1.msra.mxu0 0.0
    %2597 = vmatprep.subr.mxu0 0.0
    %2598 = vmatpush1.msra.mxu0 0.0
    %2599 = vmatprep.subr.mxu0 0.0
    %2600 = vmatpush1.msra.mxu0 0.0
    %2601 = vmatprep.subr.mxu0 0.0
    %2602 = vmatpush1.msra.mxu0 0.0
    %2603 = vmatprep.subr.mxu0 0.0
    %2604 = vmatpush1.msra.mxu0 0.0
    %2605 = vmatprep.subr.mxu0 0.0
    %2606 = vmatpush1.msra.mxu0 0.0
    %2607 = vmatprep.subr.mxu0 0.0
    %2608 = vmatpush1.msra.mxu0 0.0
    %2609 = vmatprep.subr.mxu0 0.0
    %2610 = vmatpush1.msra.mxu0 0.0
    %2611 = vmatprep.subr.mxu0 0.0
    %2612 = vmatpush1.msra.mxu0 0.0
    %2613 = vmatprep.subr.mxu0 0.0
    %2614 = vmatpush1.msra.mxu0 0.0
    %2615 = vmatprep.subr.mxu0 0.0
    %2616 = vmatpush1.msra.mxu0 0.0
    %2617 = vmatprep.subr.mxu0 0.0
    %2618 = vmatpush1.msra.mxu0 0.0
    %2619 = vmatprep.subr.mxu0 0.0
    %2620 = vmatpush1.msra.mxu0 0.0
    %2621 = vmatprep.mubr.f32.mxu0 0.0
    %2622 = vmatmul.mubr.f32.gmra.mrb[0].mxu0 %v2552
    %v2623 = vpop.f32.mrb[0].mxu0
    %v2624 = vadd.f32 %v2550, %v2623
    %v2625 = vpop.f32.mrb[0].mxu0
    %2626 = vmatprep.mubr.f32.mxu0 0.0
    %2627 = vmatmul.mubr.f32.gmra.mrb[0].mxu0 %v2555
    %v2628 = vpop.f32.mrb[0].mxu0
    %v2629 = vadd.f32 %v2550, %v2628
    %v2630 = vpop.f32.mrb[0].mxu0
    %2631 = vdwg.mxu0
    %v2632 = vld [vmem:[#allocation2 + $0x118] sm:$0xff]
    %v2633 = vld [vmem:[#allocation2 + $0x120] sm:$0xff]
    %v2634 = vld [vmem:[#allocation2 + $0x128] sm:$0xff]
    %v2635 = vld [vmem:[#allocation2 + $0x130] sm:$0xff]
    %v2636 = vld [vmem:[#allocation2 + $0x138] sm:$0x1]
    %v2638 = vsel %vm1042, %v2624, 0
    %v2641 = vsel %vm1042, %v2629, 0
    %v2644 = vsel %vm1042, %v1303, 0
    %v2647 = vsel %vm1042, %v1304, 0
    %v2650 = vsel %vm1042, %v1305, 0
    %v2653 = vsel %vm1042, %v1306, 0
    %v2656 = vsel %vm1042, %v1307, 0
    %v2659 = vsel %vm1042, %v1308, 0
    %v2662 = vsel %vm1042, %v1309, 0
    %v2665 = vsel %vm1042, %v1310, 0
    %v2668 = vsel %vm1042, %v1311, 0
    %v2671 = vsel %vm1042, %v1312, 0
    %v2674 = vsel %vm1042, %v1313, 0
    %v2677 = vsel %vm1042, %v1314, 0
    %2679 = vmatprep.subr.mxu0 0.0
    %2680 = vmatpush1.xpose.msra.mxu0 %v2644
    %2681 = vmatprep.subr.mxu0 0.0
    %2682 = vmatpush1.xpose.msra.mxu0 %v2647
    %2683 = vmatprep.subr.mxu0 0.0
    %2684 = vmatpush1.xpose.msra.mxu0 %v2650
    %2685 = vmatprep.subr.mxu0 0.0
    %2686 = vmatpush1.xpose.msra.mxu0 %v2653
    %2687 = vmatprep.subr.mxu0 0.0
    %2688 = vmatpush1.xpose.msra.mxu0 %v2656
    %2689 = vmatprep.subr.mxu0 0.0
    %2690 = vmatpush1.xpose.msra.mxu0 %v2659
    %2691 = vmatprep.subr.mxu0 0.0
    %2692 = vmatpush1.xpose.msra.mxu0 %v2662
    %2693 = vmatprep.subr.mxu0 0.0
    %2694 = vmatpush1.xpose.msra.mxu0 %v2665
    %2695 = vmatprep.subr.mxu0 0.0
    %2696 = vmatpush1.xpose.msra.mxu0 %v2668
    %2697 = vmatprep.subr.mxu0 0.0
    %2698 = vmatpush1.xpose.msra.mxu0 %v2671
    %2699 = vmatprep.subr.mxu0 0.0
    %2700 = vmatpush1.xpose.msra.mxu0 %v2674
    %2701 = vmatprep.subr.mxu0 0.0
    %2702 = vmatpush1.xpose.msra.mxu0 %v2677
    %2703 = vmatprep.subr.mxu0 0.0
    %2704 = vmatpush1.xpose.msra.mxu0 0.0
    %2705 = vmatprep.subr.mxu0 0.0
    %2706 = vmatpush1.xpose.msra.mxu0 0.0
    %2707 = vmatprep.subr.mxu0 0.0
    %2708 = vmatpush1.xpose.msra.mxu0 0.0
    %2709 = vmatprep.subr.mxu0 0.0
    %2710 = vmatpush1.xpose.msra.mxu0 0.0
    %2711 = vmatprep.subr.mxu0 0.0
    %2712 = vmatpush1.xpose.msra.mxu0 0.0
    %2713 = vmatprep.subr.mxu0 0.0
    %2714 = vmatpush1.xpose.msra.mxu0 0.0
    %2715 = vmatprep.subr.mxu0 0.0
    %2716 = vmatpush1.xpose.msra.mxu0 0.0
    %2717 = vmatprep.subr.mxu0 0.0
    %2718 = vmatpush1.xpose.msra.mxu0 0.0
    %2719 = vmatprep.subr.mxu0 0.0
    %2720 = vmatpush1.xpose.msra.mxu0 0.0
    %2721 = vmatprep.subr.mxu0 0.0
    %2722 = vmatpush1.xpose.msra.mxu0 0.0
    %2723 = vmatprep.subr.mxu0 0.0
    %2724 = vmatpush1.xpose.msra.mxu0 0.0
    %2725 = vmatprep.subr.mxu0 0.0
    %2726 = vmatpush1.xpose.msra.mxu0 0.0
    %2727 = vmatprep.subr.mxu0 0.0
    %2728 = vmatpush1.xpose.msra.mxu0 0.0
    %2729 = vmatprep.subr.mxu0 0.0
    %2730 = vmatpush1.xpose.msra.mxu0 0.0
    %2731 = vmatprep.subr.mxu0 0.0
    %2732 = vmatpush1.xpose.msra.mxu0 0.0
    %2733 = vmatprep.subr.mxu0 0.0
    %2734 = vmatpush1.xpose.msra.mxu0 0.0
    %2735 = vmatprep.subr.mxu0 0.0
    %2736 = vmatpush1.xpose.msra.mxu0 0.0
    %2737 = vmatprep.subr.mxu0 0.0
    %2738 = vmatpush1.xpose.msra.mxu0 0.0
    %2739 = vmatprep.subr.mxu0 0.0
    %2740 = vmatpush1.xpose.msra.mxu0 0.0
    %2741 = vmatprep.subr.mxu0 0.0
    %2742 = vmatpush1.xpose.msra.mxu0 0.0
    %2743 = vmatprep.mubr.f32.mxu0 0.0
    %2744 = vmatmul.mubr.f32.gmra.mrb[0].mxu0 %v2638
    %v2745 = vpop.f32.mrb[0].mxu0
    %v2746 = vadd.f32 0.0, %v2745
    %v2747 = vpop.f32.mrb[0].mxu0
    %2748 = vmatprep.mubr.f32.mxu0 0.0
    %2749 = vmatmul.mubr.f32.gmra.mrb[0].mxu0 %v2641
    %v2750 = vpop.f32.mrb[0].mxu0
    %v2751 = vadd.f32 0.0, %v2750
    %v2752 = vpop.f32.mrb[0].mxu0
    %2753 = vdwg.mxu0
    %vm2754 = vcmask 785408
    %v2755 = vsel %vm2754, %v2746, -inf
    %2756 = vmax.xlane.f32.xlu0 %v2755
    %v2757 = vpop.xlane.xlu0 %2756
    %v2758 = vsel %vm2754, %v2751, -inf
    %2759 = vmax.xlane.f32.xlu0 %v2758
    %v2760 = vpop.xlane.xlu0 %2759
    %v2761 = vsub.f32 %v2746, %v2757
    %v2762 = vsub.f32 %v2751, %v2760
    %v2763 = vmul.f32 %v2761, 1.442695
    %v2764 = vpow.pop %v2763
    %v2765 = vmul.f32 %v2762, 1.442695
    %v2766 = vpow.pop %v2765
    %v2767 = vmul.f32 %v2764, %v1031
    %v2768 = vmul.f32 %v2766, %v1032
    %2781 = vrot.lane.b32.xlu0 %v1363, 96
    %v2782 = vpop.permute.xlu0 %2781
    %2783 = vrot.lane.b32.xlu0 %v1364, 96
    %v2784 = vpop.permute.xlu0 %2783
    %2785 = vrot.lane.b32.xlu0 %v1365, 96
    %v2786 = vpop.permute.xlu0 %2785
    %2787 = vrot.lane.b32.xlu0 %v1366, 96
    %v2788 = vpop.permute.xlu0 %2787
    %2789 = vrot.lane.b32.xlu0 %v1367, 96
    %v2790 = vpop.permute.xlu0 %2789
    %2791 = vrot.lane.b32.xlu0 %v1368, 96
    %v2792 = vpop.permute.xlu0 %2791
    %2793 = vrot.lane.b32.xlu0 %v1369, 96
    %v2794 = vpop.permute.xlu0 %2793
    %2795 = vrot.lane.b32.xlu0 %v1370, 96
    %v2796 = vpop.permute.xlu0 %2795
    %2797 = vrot.lane.b32.xlu0 %v1371, 96
    %v2798 = vpop.permute.xlu0 %2797
    %2799 = vrot.lane.b32.xlu0 %v1372, 96
    %v2800 = vpop.permute.xlu0 %2799
    %2801 = vrot.lane.b32.xlu0 %v1373, 96
    %v2802 = vpop.permute.xlu0 %2801
    %2803 = vrot.lane.b32.xlu0 %v1374, 96
    %v2804 = vpop.permute.xlu0 %2803
    %v2818 = vsel %vm2754, %v2767, 0
    %v2821 = vsel %vm2754, %v2768, 0
    %2823 = vmatprep.subr.mxu0 0.0
    %2824 = vmatpush1.msra.mxu0 %v2782
    %2825 = vmatprep.subr.mxu0 0.0
    %2826 = vmatpush1.msra.mxu0 %v2784
    %2827 = vmatprep.subr.mxu0 0.0
    %2828 = vmatpush1.msra.mxu0 %v2786
    %2829 = vmatprep.subr.mxu0 0.0
    %2830 = vmatpush1.msra.mxu0 %v2788
    %2831 = vmatprep.subr.mxu0 0.0
    %2832 = vmatpush1.msra.mxu0 %v2790
    %2833 = vmatprep.subr.mxu0 0.0
    %2834 = vmatpush1.msra.mxu0 %v2792
    %2835 = vmatprep.subr.mxu0 0.0
    %2836 = vmatpush1.msra.mxu0 %v2794
    %2837 = vmatprep.subr.mxu0 0.0
    %2838 = vmatpush1.msra.mxu0 %v2796
    %2839 = vmatprep.subr.mxu0 0.0
    %2840 = vmatpush1.msra.mxu0 %v2798
    %2841 = vmatprep.subr.mxu0 0.0
    %2842 = vmatpush1.msra.mxu0 %v2800
    %2843 = vmatprep.subr.mxu0 0.0
    %2844 = vmatpush1.msra.mxu0 %v2802
    %2845 = vmatprep.subr.mxu0 0.0
    %2846 = vmatpush1.msra.mxu0 %v2804
    %2847 = vmatprep.subr.mxu0 0.0
    %2848 = vmatpush1.msra.mxu0 0.0
    %2849 = vmatprep.subr.mxu0 0.0
    %2850 = vmatpush1.msra.mxu0 0.0
    %2851 = vmatprep.subr.mxu0 0.0
    %2852 = vmatpush1.msra.mxu0 0.0
    %2853 = vmatprep.subr.mxu0 0.0
    %2854 = vmatpush1.msra.mxu0 0.0
    %2855 = vmatprep.subr.mxu0 0.0
    %2856 = vmatpush1.msra.mxu0 0.0
    %2857 = vmatprep.subr.mxu0 0.0
    %2858 = vmatpush1.msra.mxu0 0.0
    %2859 = vmatprep.subr.mxu0 0.0
    %2860 = vmatpush1.msra.mxu0 0.0
    %2861 = vmatprep.subr.mxu0 0.0
    %2862 = vmatpush1.msra.mxu0 0.0
    %2863 = vmatprep.subr.mxu0 0.0
    %2864 = vmatpush1.msra.mxu0 0.0
    %2865 = vmatprep.subr.mxu0 0.0
    %2866 = vmatpush1.msra.mxu0 0.0
    %2867 = vmatprep.subr.mxu0 0.0
    %2868 = vmatpush1.msra.mxu0 0.0
    %2869 = vmatprep.subr.mxu0 0.0
    %2870 = vmatpush1.msra.mxu0 0.0
    %2871 = vmatprep.subr.mxu0 0.0
    %2872 = vmatpush1.msra.mxu0 0.0
    %2873 = vmatprep.subr.mxu0 0.0
    %2874 = vmatpush1.msra.mxu0 0.0
    %2875 = vmatprep.subr.mxu0 0.0
    %2876 = vmatpush1.msra.mxu0 0.0
    %2877 = vmatprep.subr.mxu0 0.0
    %2878 = vmatpush1.msra.mxu0 0.0
    %2879 = vmatprep.subr.mxu0 0.0
    %2880 = vmatpush1.msra.mxu0 0.0
    %2881 = vmatprep.subr.mxu0 0.0
    %2882 = vmatpush1.msra.mxu0 0.0
    %2883 = vmatprep.subr.mxu0 0.0
    %2884 = vmatpush1.msra.mxu0 0.0
    %2885 = vmatprep.subr.mxu0 0.0
    %2886 = vmatpush1.msra.mxu0 0.0
    %2887 = vmatprep.mubr.f32.mxu0 0.0
    %2888 = vmatmul.mubr.f32.gmra.mrb[0].mxu0 %v2818
    %v2889 = vpop.f32.mrb[0].mxu0
    %v2890 = vadd.f32 0.0, %v2889
    %v2891 = vpop.f32.mrb[0].mxu0
    %2892 = vmatprep.mubr.f32.mxu0 0.0
    %2893 = vmatmul.mubr.f32.gmra.mrb[0].mxu0 %v2821
    %v2894 = vpop.f32.mrb[0].mxu0
    %v2895 = vadd.f32 0.0, %v2894
    %v2896 = vpop.f32.mrb[0].mxu0
    %2897 = vdwg.mxu0
    %2898 = vmatprep.subr.mxu0 0.0
    %2899 = vmatpush1.msra.mxu0 %v979
    %2900 = vmatprep.subr.mxu0 0.0
    %2901 = vmatpush1.msra.mxu0 %v980
    %2902 = vmatprep.subr.mxu0 0.0
    %2903 = vmatpush1.msra.mxu0 %v981
    %2904 = vmatprep.subr.mxu0 0.0
    %2905 = vmatpush1.msra.mxu0 %v982
    %2906 = vmatprep.subr.mxu0 0.0
    %2907 = vmatpush1.msra.mxu0 %v983
    %2908 = vmatprep.subr.mxu0 0.0
    %2909 = vmatpush1.msra.mxu0 %v984
    %2910 = vmatprep.subr.mxu0 0.0
    %2911 = vmatpush1.msra.mxu0 %v985
    %2912 = vmatprep.subr.mxu0 0.0
    %2913 = vmatpush1.msra.mxu0 %v986
    %2914 = vmatprep.subr.mxu0 0.0
    %2915 = vmatpush1.msra.mxu0 %v987
    %2916 = vmatprep.subr.mxu0 0.0
    %2917 = vmatpush1.msra.mxu0 %v988
    %2918 = vmatprep.subr.mxu0 0.0
    %2919 = vmatpush1.msra.mxu0 %v989
    %2920 = vmatprep.subr.mxu0 0.0
    %2921 = vmatpush1.msra.mxu0 %v990
    %2922 = vmatprep.subr.mxu0 0.0
    %2923 = vmatpush1.msra.mxu0 0.0
    %2924 = vmatprep.subr.mxu0 0.0
    %2925 = vmatpush1.msra.mxu0 0.0
    %2926 = vmatprep.subr.mxu0 0.0
    %2927 = vmatpush1.msra.mxu0 0.0
    %2928 = vmatprep.subr.mxu0 0.0
    %2929 = vmatpush1.msra.mxu0 0.0
    %2930 = vmatprep.subr.mxu0 0.0
    %2931 = vmatpush1.msra.mxu0 0.0
    %2932 = vmatprep.subr.mxu0 0.0
    %2933 = vmatpush1.msra.mxu0 0.0
    %2934 = vmatprep.subr.mxu0 0.0
    %2935 = vmatpush1.msra.mxu0 0.0
    %2936 = vmatprep.subr.mxu0 0.0
    %2937 = vmatpush1.msra.mxu0 0.0
    %2938 = vmatprep.subr.mxu0 0.0
    %2939 = vmatpush1.msra.mxu0 0.0
    %2940 = vmatprep.subr.mxu0 0.0
    %2941 = vmatpush1.msra.mxu0 0.0
    %2942 = vmatprep.subr.mxu0 0.0
    %2943 = vmatpush1.msra.mxu0 0.0
    %2944 = vmatprep.subr.mxu0 0.0
    %2945 = vmatpush1.msra.mxu0 0.0
    %2946 = vmatprep.subr.mxu0 0.0
    %2947 = vmatpush1.msra.mxu0 0.0
    %2948 = vmatprep.subr.mxu0 0.0
    %2949 = vmatpush1.msra.mxu0 0.0
    %2950 = vmatprep.subr.mxu0 0.0
    %2951 = vmatpush1.msra.mxu0 0.0
    %2952 = vmatprep.subr.mxu0 0.0
    %2953 = vmatpush1.msra.mxu0 0.0
    %2954 = vmatprep.subr.mxu0 0.0
    %2955 = vmatpush1.msra.mxu0 0.0
    %2956 = vmatprep.subr.mxu0 0.0
    %2957 = vmatpush1.msra.mxu0 0.0
    %2958 = vmatprep.subr.mxu0 0.0
    %2959 = vmatpush1.msra.mxu0 0.0
    %2960 = vmatprep.subr.mxu0 0.0
    %2961 = vmatpush1.msra.mxu0 0.0
    %2962 = vmatprep.mubr.f32.mxu0 0.0
    %2963 = vmatmul.mubr.f32.gmra.mrb[0].mxu0 %v2818
    %v2964 = vpop.f32.mrb[0].mxu0
    %v2965 = vadd.f32 0.0, %v2964
    %v2966 = vpop.f32.mrb[0].mxu0
    %2967 = vmatprep.mubr.f32.mxu0 0.0
    %2968 = vmatmul.mubr.f32.gmra.mrb[0].mxu0 %v2821
    %v2969 = vpop.f32.mrb[0].mxu0
    %v2970 = vadd.f32 0.0, %v2969
    %v2971 = vpop.f32.mrb[0].mxu0
    %2972 = vdwg.mxu0
    %v2973 = vrcp.pop %v2965
    %v2974 = vrcp.pop %v2970
    %v2975 = vmul.f32 %v2890, %v2973
    %v2976 = vmul.f32 %v2895, %v2974
    %v2977 = vlaneseq
    %v2978 = vshrl.u32 %v2977, 7
    %v2979 = vsub.s32 0, %v2978
    %v2980 = vrot.slane %v2636, %v2979
    %v2982 = vsel %vm1042, %v2975, 0
    %v2985 = vsel %vm1042, %v2976, 0
    %2987 = vmatprep.subr.mxu0 0.0
    %2988 = vmatpush1.msra.mxu0 %v2632
    %2989 = vmatprep.subr.mxu0 0.0
    %2990 = vmatpush1.msra.mxu0 %v2633
    %2991 = vmatprep.subr.mxu0 0.0
    %2992 = vmatpush1.msra.mxu0 %v2634
    %2993 = vmatprep.subr.mxu0 0.0
    %2994 = vmatpush1.msra.mxu0 %v2635
    %2995 = vmatprep.subr.mxu0 0.0
    %2996 = vmatpush1.msra.mxu0 0.0
    %2997 = vmatprep.subr.mxu0 0.0
    %2998 = vmatpush1.msra.mxu0 0.0
    %2999 = vmatprep.subr.mxu0 0.0
    %3000 = vmatpush1.msra.mxu0 0.0
    %3001 = vmatprep.subr.mxu0 0.0
    %3002 = vmatpush1.msra.mxu0 0.0
    %3003 = vmatprep.subr.mxu0 0.0
    %3004 = vmatpush1.msra.mxu0 0.0
    %3005 = vmatprep.subr.mxu0 0.0
    %3006 = vmatpush1.msra.mxu0 0.0
    %3007 = vmatprep.subr.mxu0 0.0
    %3008 = vmatpush1.msra.mxu0 0.0
    %3009 = vmatprep.subr.mxu0 0.0
    %3010 = vmatpush1.msra.mxu0 0.0
    %3011 = vmatprep.subr.mxu0 0.0
    %3012 = vmatpush1.msra.mxu0 0.0
    %3013 = vmatprep.subr.mxu0 0.0
    %3014 = vmatpush1.msra.mxu0 0.0
    %3015 = vmatprep.subr.mxu0 0.0
    %3016 = vmatpush1.msra.mxu0 0.0
    %3017 = vmatprep.subr.mxu0 0.0
    %3018 = vmatpush1.msra.mxu0 0.0
    %3019 = vmatprep.subr.mxu0 0.0
    %3020 = vmatpush1.msra.mxu0 0.0
    %3021 = vmatprep.subr.mxu0 0.0
    %3022 = vmatpush1.msra.mxu0 0.0
    %3023 = vmatprep.subr.mxu0 0.0
    %3024 = vmatpush1.msra.mxu0 0.0
    %3025 = vmatprep.subr.mxu0 0.0
    %3026 = vmatpush1.msra.mxu0 0.0
    %3027 = vmatprep.subr.mxu0 0.0
    %3028 = vmatpush1.msra.mxu0 0.0
    %3029 = vmatprep.subr.mxu0 0.0
    %3030 = vmatpush1.msra.mxu0 0.0
    %3031 = vmatprep.subr.mxu0 0.0
    %3032 = vmatpush1.msra.mxu0 0.0
    %3033 = vmatprep.subr.mxu0 0.0
    %3034 = vmatpush1.msra.mxu0 0.0
    %3035 = vmatprep.subr.mxu0 0.0
    %3036 = vmatpush1.msra.mxu0 0.0
    %3037 = vmatprep.subr.mxu0 0.0
    %3038 = vmatpush1.msra.mxu0 0.0
    %3039 = vmatprep.subr.mxu0 0.0
    %3040 = vmatpush1.msra.mxu0 0.0
    %3041 = vmatprep.subr.mxu0 0.0
    %3042 = vmatpush1.msra.mxu0 0.0
    %3043 = vmatprep.subr.mxu0 0.0
    %3044 = vmatpush1.msra.mxu0 0.0
    %3045 = vmatprep.subr.mxu0 0.0
    %3046 = vmatpush1.msra.mxu0 0.0
    %3047 = vmatprep.subr.mxu0 0.0
    %3048 = vmatpush1.msra.mxu0 0.0
    %3049 = vmatprep.subr.mxu0 0.0
    %3050 = vmatpush1.msra.mxu0 0.0
    %3051 = vmatprep.mubr.f32.mxu0 0.0
    %3052 = vmatmul.mubr.f32.gmra.mrb[0].mxu0 %v2982
    %v3053 = vpop.f32.mrb[0].mxu0
    %v3054 = vadd.f32 %v2980, %v3053
    %v3055 = vpop.f32.mrb[0].mxu0
    %3056 = vmatprep.mubr.f32.mxu0 0.0
    %3057 = vmatmul.mubr.f32.gmra.mrb[0].mxu0 %v2985
    %v3058 = vpop.f32.mrb[0].mxu0
    %v3059 = vadd.f32 %v2980, %v3058
    %v3060 = vpop.f32.mrb[0].mxu0
    %3061 = vdwg.mxu0
    %v3062 = vadd.f32 %v2540, %v3054
    %v3063 = vadd.f32 %v2541, %v3059
    %v3064 = vsel %vm1042, %v3062, 0.0
    %3065 = vadd.xlane.f32.xlu0 %v3064
    %v3066 = vpop.xlane.xlu0 %3065
    %v3067 = vsel %vm1042, %v3063, 0.0
    %3068 = vadd.xlane.f32.xlu0 %v3067
    %v3069 = vpop.xlane.xlu0 %3068
    %v3070 = vmul.f32 %v3066, %v1963
    %v3071 = vmul.f32 %v3069, %v1963
    %v3072 = vsub.f32 %v3062, %v3070
    %v3073 = vsub.f32 %v3063, %v3071
    %v3074 = vmul.f32 %v3072, %v3072
    %v3075 = vmul.f32 %v3073, %v3073
    %v3076 = vsel %vm1042, %v3074, 0.0
    %3077 = vadd.xlane.f32.xlu0 %v3076
    %v3078 = vpop.xlane.xlu0 %3077
    %v3079 = vsel %vm1042, %v3075, 0.0
    %3080 = vadd.xlane.f32.xlu0 %v3079
    %v3081 = vpop.xlane.xlu0 %3080
    %v3082 = vmul.f32 %v3078, %v1963
    %v3083 = vmul.f32 %v3081, %v1963
    %v3084 = vadd.f32 %v3082, 1e-05
    %v3085 = vadd.f32 %v3083, 1e-05
    %v3086 = vrsqrt.pop %v3084
    %v3087 = vrsqrt.pop %v3085
    %v3088 = vmul.f32 %v3072, %v3086
    %v3089 = vmul.f32 %v3073, %v3087
    %v3090 = vlaneseq
    %v3091 = vshrl.u32 %v3090, 7
    %v3092 = vsub.s32 2, %v3091
    %v3093 = vrot.slane %v40, %v3092
    %v3094 = vmul.f32 %v3088, %v3093
    %v3095 = vmul.f32 %v3089, %v3093
    %v3096 = vlaneseq
    %v3097 = vshrl.u32 %v3096, 7
    %v3098 = vsub.s32 2, %v3097
    %v3099 = vrot.slane %v41, %v3098
    %v3100 = vadd.f32 %v3094, %v3099
    %v3101 = vadd.f32 %v3095, %v3099
    %v3102 = vld [vmem:[#allocation2 + $0x140] sm:$0xff]
    %v3103 = vld [vmem:[#allocation2 + $0x148] sm:$0xff]
    %v3104 = vld [vmem:[#allocation2 + $0x150] sm:$0xff]
    %v3105 = vld [vmem:[#allocation2 + $0x158] sm:$0xff]
    %v3106 = vld [vmem:[#allocation2 + $0x160] sm:$0x1]
    %v3107 = vlaneseq
    %v3108 = vshrl.u32 %v3107, 7
    %v3109 = vsub.s32 0, %v3108
    %v3110 = vrot.slane %v3106, %v3109
    %v3112 = vsel %vm1042, %v3100, 0
    %v3115 = vsel %vm1042, %v3101, 0
    %3117 = vmatprep.subr.mxu0 0.0
    %3118 = vmatpush1.msra.mxu0 %v3102
    %3119 = vmatprep.subr.mxu0 0.0
    %3120 = vmatpush1.msra.mxu0 %v3103
    %3121 = vmatprep.subr.mxu0 0.0
    %3122 = vmatpush1.msra.mxu0 %v3104
    %3123 = vmatprep.subr.mxu0 0.0
    %3124 = vmatpush1.msra.mxu0 %v3105
    %3125 = vmatprep.subr.mxu0 0.0
    %3126 = vmatpush1.msra.mxu0 0.0
    %3127 = vmatprep.subr.mxu0 0.0
    %3128 = vmatpush1.msra.mxu0 0.0
    %3129 = vmatprep.subr.mxu0 0.0
    %3130 = vmatpush1.msra.mxu0 0.0
    %3131 = vmatprep.subr.mxu0 0.0
    %3132 = vmatpush1.msra.mxu0 0.0
    %3133 = vmatprep.subr.mxu0 0.0
    %3134 = vmatpush1.msra.mxu0 0.0
    %3135 = vmatprep.subr.mxu0 0.0
    %3136 = vmatpush1.msra.mxu0 0.0
    %3137 = vmatprep.subr.mxu0 0.0
    %3138 = vmatpush1.msra.mxu0 0.0
    %3139 = vmatprep.subr.mxu0 0.0
    %3140 = vmatpush1.msra.mxu0 0.0
    %3141 = vmatprep.subr.mxu0 0.0
    %3142 = vmatpush1.msra.mxu0 0.0
    %3143 = vmatprep.subr.mxu0 0.0
    %3144 = vmatpush1.msra.mxu0 0.0
    %3145 = vmatprep.subr.mxu0 0.0
    %3146 = vmatpush1.msra.mxu0 0.0
    %3147 = vmatprep.subr.mxu0 0.0
    %3148 = vmatpush1.msra.mxu0 0.0
    %3149 = vmatprep.subr.mxu0 0.0
    %3150 = vmatpush1.msra.mxu0 0.0
    %3151 = vmatprep.subr.mxu0 0.0
    %3152 = vmatpush1.msra.mxu0 0.0
    %3153 = vmatprep.subr.mxu0 0.0
    %3154 = vmatpush1.msra.mxu0 0.0
    %3155 = vmatprep.subr.mxu0 0.0
    %3156 = vmatpush1.msra.mxu0 0.0
    %3157 = vmatprep.subr.mxu0 0.0
    %3158 = vmatpush1.msra.mxu0 0.0
    %3159 = vmatprep.subr.mxu0 0.0
    %3160 = vmatpush1.msra.mxu0 0.0
    %3161 = vmatprep.subr.mxu0 0.0
    %3162 = vmatpush1.msra.mxu0 0.0
    %3163 = vmatprep.subr.mxu0 0.0
    %3164 = vmatpush1.msra.mxu0 0.0
    %3165 = vmatprep.subr.mxu0 0.0
    %3166 = vmatpush1.msra.mxu0 0.0
    %3167 = vmatprep.subr.mxu0 0.0
    %3168 = vmatpush1.msra.mxu0 0.0
    %3169 = vmatprep.subr.mxu0 0.0
    %3170 = vmatpush1.msra.mxu0 0.0
    %3171 = vmatprep.subr.mxu0 0.0
    %3172 = vmatpush1.msra.mxu0 0.0
    %3173 = vmatprep.subr.mxu0 0.0
    %3174 = vmatpush1.msra.mxu0 0.0
    %3175 = vmatprep.subr.mxu0 0.0
    %3176 = vmatpush1.msra.mxu0 0.0
    %3177 = vmatprep.subr.mxu0 0.0
    %3178 = vmatpush1.msra.mxu0 0.0
    %3179 = vmatprep.subr.mxu0 0.0
    %3180 = vmatpush1.msra.mxu0 0.0
    %3181 = vmatprep.mubr.f32.mxu0 0.0
    %3182 = vmatmul.mubr.f32.gmra.mrb[0].mxu0 %v3112
    %v3183 = vpop.f32.mrb[0].mxu0
    %v3184 = vadd.f32 %v3110, %v3183
    %v3185 = vpop.f32.mrb[0].mxu0
    %3186 = vmatprep.mubr.f32.mxu0 0.0
    %3187 = vmatmul.mubr.f32.gmra.mrb[0].mxu0 %v3115
    %v3188 = vpop.f32.mrb[0].mxu0
    %v3189 = vadd.f32 %v3110, %v3188
    %v3190 = vpop.f32.mrb[0].mxu0
    %3191 = vdwg.mxu0
    %v3192 = vmax.f32 %v3184, 0.0
    %v3193 = vmax.f32 %v3189, 0.0
    %v3194 = vld [vmem:[#allocation2 + $0x168] sm:$0xff]
    %v3195 = vld [vmem:[#allocation2 + $0x170] sm:$0xff]
    %v3196 = vld [vmem:[#allocation2 + $0x178] sm:$0xff]
    %v3197 = vld [vmem:[#allocation2 + $0x180] sm:$0xff]
    %v3198 = vld [vmem:[#allocation2 + $0x188] sm:$0xff]
    %v3199 = vld [vmem:[#allocation2 + $0x190] sm:$0xff]
    %v3200 = vld [vmem:[#allocation2 + $0x198] sm:$0xff]
    %v3201 = vld [vmem:[#allocation2 + $0x1a0] sm:$0xff]
    %v3202 = vld [vmem:[#allocation2 + $0x1a8] sm:$0x1]
    %v3203 = vlaneseq
    %v3204 = vshrl.u32 %v3203, 7
    %v3205 = vsub.s32 0, %v3204
    %v3206 = vrot.slane %v3202, %v3205
    %v3208 = vsel %vm1663, %v3192, 0
    %v3211 = vsel %vm1663, %v3193, 0
    %3213 = vmatprep.subr.mxu0 0.0
    %3214 = vmatpush1.msra.mxu0 %v3194
    %3215 = vmatprep.subr.mxu0 0.0
    %3216 = vmatpush1.msra.mxu0 %v3195
    %3217 = vmatprep.subr.mxu0 0.0
    %3218 = vmatpush1.msra.mxu0 %v3196
    %3219 = vmatprep.subr.mxu0 0.0
    %3220 = vmatpush1.msra.mxu0 %v3197
    %3221 = vmatprep.subr.mxu0 0.0
    %3222 = vmatpush1.msra.mxu0 %v3198
    %3223 = vmatprep.subr.mxu0 0.0
    %3224 = vmatpush1.msra.mxu0 %v3199
    %3225 = vmatprep.subr.mxu0 0.0
    %3226 = vmatpush1.msra.mxu0 %v3200
    %3227 = vmatprep.subr.mxu0 0.0
    %3228 = vmatpush1.msra.mxu0 %v3201
    %3229 = vmatprep.subr.mxu0 0.0
    %3230 = vmatpush1.msra.mxu0 0.0
    %3231 = vmatprep.subr.mxu0 0.0
    %3232 = vmatpush1.msra.mxu0 0.0
    %3233 = vmatprep.subr.mxu0 0.0
    %3234 = vmatpush1.msra.mxu0 0.0
    %3235 = vmatprep.subr.mxu0 0.0
    %3236 = vmatpush1.msra.mxu0 0.0
    %3237 = vmatprep.subr.mxu0 0.0
    %3238 = vmatpush1.msra.mxu0 0.0
    %3239 = vmatprep.subr.mxu0 0.0
    %3240 = vmatpush1.msra.mxu0 0.0
    %3241 = vmatprep.subr.mxu0 0.0
    %3242 = vmatpush1.msra.mxu0 0.0
    %3243 = vmatprep.subr.mxu0 0.0
    %3244 = vmatpush1.msra.mxu0 0.0
    %3245 = vmatprep.subr.mxu0 0.0
    %3246 = vmatpush1.msra.mxu0 0.0
    %3247 = vmatprep.subr.mxu0 0.0
    %3248 = vmatpush1.msra.mxu0 0.0
    %3249 = vmatprep.subr.mxu0 0.0
    %3250 = vmatpush1.msra.mxu0 0.0
    %3251 = vmatprep.subr.mxu0 0.0
    %3252 = vmatpush1.msra.mxu0 0.0
    %3253 = vmatprep.subr.mxu0 0.0
    %3254 = vmatpush1.msra.mxu0 0.0
    %3255 = vmatprep.subr.mxu0 0.0
    %3256 = vmatpush1.msra.mxu0 0.0
    %3257 = vmatprep.subr.mxu0 0.0
    %3258 = vmatpush1.msra.mxu0 0.0
    %3259 = vmatprep.subr.mxu0 0.0
    %3260 = vmatpush1.msra.mxu0 0.0
    %3261 = vmatprep.subr.mxu0 0.0
    %3262 = vmatpush1.msra.mxu0 0.0
    %3263 = vmatprep.subr.mxu0 0.0
    %3264 = vmatpush1.msra.mxu0 0.0
    %3265 = vmatprep.subr.mxu0 0.0
    %3266 = vmatpush1.msra.mxu0 0.0
    %3267 = vmatprep.subr.mxu0 0.0
    %3268 = vmatpush1.msra.mxu0 0.0
    %3269 = vmatprep.subr.mxu0 0.0
    %3270 = vmatpush1.msra.mxu0 0.0
    %3271 = vmatprep.subr.mxu0 0.0
    %3272 = vmatpush1.msra.mxu0 0.0
    %3273 = vmatprep.subr.mxu0 0.0
    %3274 = vmatpush1.msra.mxu0 0.0
    %3275 = vmatprep.subr.mxu0 0.0
    %3276 = vmatpush1.msra.mxu0 0.0
    %3277 = vmatprep.mubr.f32.mxu0 0.0
    %3278 = vmatmul.mubr.f32.gmra.mrb[0].mxu0 %v3208
    %v3279 = vpop.f32.mrb[0].mxu0
    %v3280 = vadd.f32 %v3206, %v3279
    %v3281 = vpop.f32.mrb[0].mxu0
    %3282 = vmatprep.mubr.f32.mxu0 0.0
    %3283 = vmatmul.mubr.f32.gmra.mrb[0].mxu0 %v3211
    %v3284 = vpop.f32.mrb[0].mxu0
    %v3285 = vadd.f32 %v3206, %v3284
    %v3286 = vpop.f32.mrb[0].mxu0
    %3287 = vdwg.mxu0
    %v3288 = vadd.f32 %v3100, %v3280
    %v3289 = vadd.f32 %v3101, %v3285
    %v3290 = vsel %vm1042, %v3288, 0.0
    %3291 = vadd.xlane.f32.xlu0 %v3290
    %v3292 = vpop.xlane.xlu0 %3291
    %v3293 = vsel %vm1042, %v3289, 0.0
    %3294 = vadd.xlane.f32.xlu0 %v3293
    %v3295 = vpop.xlane.xlu0 %3294
    %v3296 = vmul.f32 %v3292, %v1963
    %v3297 = vmul.f32 %v3295, %v1963
    %v3298 = vsub.f32 %v3288, %v3296
    %v3299 = vsub.f32 %v3289, %v3297
    %v3300 = vmul.f32 %v3298, %v3298
    %v3301 = vmul.f32 %v3299, %v3299
    %v3302 = vsel %vm1042, %v3300, 0.0
    %3303 = vadd.xlane.f32.xlu0 %v3302
    %v3304 = vpop.xlane.xlu0 %3303
    %v3305 = vsel %vm1042, %v3301, 0.0
    %3306 = vadd.xlane.f32.xlu0 %v3305
    %v3307 = vpop.xlane.xlu0 %3306
    %v3308 = vmul.f32 %v3304, %v1963
    %v3309 = vmul.f32 %v3307, %v1963
    %v3310 = vadd.f32 %v3308, 1e-05
    %v3311 = vadd.f32 %v3309, 1e-05
    %v3312 = vrsqrt.pop %v3310
    %v3313 = vrsqrt.pop %v3311
    %v3314 = vmul.f32 %v3298, %v3312
    %v3315 = vmul.f32 %v3299, %v3313
    %v3316 = vlaneseq
    %v3317 = vshrl.u32 %v3316, 7
    %v3318 = vsub.s32 3, %v3317
    %v3319 = vrot.slane %v40, %v3318
    %v3320 = vmul.f32 %v3314, %v3319
    %v3321 = vmul.f32 %v3315, %v3319
    %v3322 = vlaneseq
    %v3323 = vshrl.u32 %v3322, 7
    %v3324 = vsub.s32 3, %v3323
    %v3325 = vrot.slane %v41, %v3324
    %v3326 = vadd.f32 %v3320, %v3325
    %v3327 = vadd.f32 %v3321, %v3325
    %3328 = vst.msk [vmem:[#allocation5] sm:$0xff] %vm1042, %v3326
    %3329 = vst.msk [vmem:[#allocation5 + $0x8] sm:$0xff] %vm1042, %v3327
    // Predicated region
    $region22: #{transformer_decoder_layer.1} parent=1 // pred_check
      _
    $region23: #{transformer_decoder_layer.1} parent=1 // pred_check_branch
      %3331 = sbr.rel (0) target = $region25
    $region24: #{transformer_decoder_layer.1} parent=1 // pred_region
      %s3333 = ssub.s32 256, 256
      %3334 = vsyncadd [#allocation4], %s3333
      %s3335 = sshll.u32 [#allocation5], 4
      %s3336 = int_to_ptr.vmem [resolvable:$true] %s3335
      %3341 = dma.vmem_to_hbm [thread:$0]  %s3336, 256, %s4, [#allocation4], 128, 128, 8
    $region25: #{transformer_decoder_layer.1} parent=1 // pred_fallthru
      _
    // Predicated region
    $region26: #{transformer_decoder_layer.1} parent=1 // pred_check
      _
    $region27: #{transformer_decoder_layer.1} parent=1 // pred_check_branch
      %3343 = sbr.rel (0) target = $region29
    $region28: #{transformer_decoder_layer.1} parent=1 // pred_region
      %3344 = dma.done [#allocation4], 256
    $region29: #{transformer_decoder_layer.1} parent=1 // pred_fallthru
      _
    %3345 = vsyncpa [#allocation3], 1
    %3346 = vsyncpa [#allocation4], 1

</llo_original>
